<compile_context>
chip_gen: v5e
topology: v5e:2x2
jax: 0.10.0
libtpu: 0.0.40
codegen_flags: <defaults>
</compile_context>

<pallas_src>
import jax
import jax.numpy as jnp
from jax.experimental import pallas as pl
from jax.experimental.pallas import tpu as pltpu


def _round_up(x, m):
    return (x + m - 1) // m * m


def _pick_tm(m, unit=8, cap=512):
    # Row-tile: biggest tile (<= cap) that keeps the grid exact after zero-padding M.
    return min(cap, _round_up(m, unit))


# --------------------------------------------------------------------------- kernels

def _gemm_stats_kernel(p_ref, w_ref, pre_ref, stats_ref):
    """pre = patches @ wk (bf16 inputs, f32 accumulate) + per-column sum / sumsq."""
    acc = jnp.dot(p_ref[...], w_ref[...], preferred_element_type=jnp.float32)
    pre_ref[...] = acc
    stats_ref[0:1, :] = jnp.sum(acc, axis=0, keepdims=True)
    stats_ref[1:2, :] = jnp.sum(acc * acc, axis=0, keepdims=True)


def _scale_shift_relu_kernel(pre_ref, scale_ref, shift_ref, out_ref):
    """BatchNorm (pre-folded per-column affine) + ReLU."""
    out_ref[...] = jnp.maximum(pre_ref[...] * scale_ref[...] + shift_ref[...], 0.0)


def _gemm_tanh_t_kernel(w_ref, p_ref, out_ref):
    """Transposed GEMM (Co_eff, K) @ (K, TN) + tanh; lane axis = flattened pixels."""
    acc = jnp.dot(w_ref[...], p_ref[...], preferred_element_type=jnp.float32)
    out_ref[...] = jnp.tanh(acc)


# ----------------------------------------------------------------- pallas_call wrappers

def _gemm_stats(patches, wk, tm):
    m_pad, k = patches.shape
    ceff = wk.shape[1]
    grid = m_pad // tm
    return pl.pallas_call(
        _gemm_stats_kernel,
        out_shape=(jax.ShapeDtypeStruct((m_pad, ceff), jnp.float32),
                   jax.ShapeDtypeStruct((grid * 8, ceff), jnp.float32)),
        grid=(grid,),
        in_specs=[pl.BlockSpec((tm, k), lambda i: (i, 0)),
                  pl.BlockSpec((k, ceff), lambda i: (0, 0))],
        out_specs=(pl.BlockSpec((tm, ceff), lambda i: (i, 0)),
                   pl.BlockSpec((8, ceff), lambda i: (i, 0))),
        compiler_params=pltpu.CompilerParams(dimension_semantics=("parallel",)),
    )(patches, wk)


def _scale_shift_relu(pre, scale, shift, tm):
    m_pad, ceff = pre.shape
    grid = m_pad // tm
    return pl.pallas_call(
        _scale_shift_relu_kernel,
        out_shape=jax.ShapeDtypeStruct((m_pad, ceff), jnp.float32),
        grid=(grid,),
        in_specs=[pl.BlockSpec((tm, ceff), lambda i: (i, 0)),
                  pl.BlockSpec((1, ceff), lambda i: (0, 0)),
                  pl.BlockSpec((1, ceff), lambda i: (0, 0))],
        out_specs=pl.BlockSpec((tm, ceff), lambda i: (i, 0)),
        compiler_params=pltpu.CompilerParams(dimension_semantics=("parallel",)),
    )(pre, scale, shift)


def _gemm_tanh_t(wk_t, patches_t, tn):
    co_eff, k = wk_t.shape
    m_pad = patches_t.shape[1]
    grid = m_pad // tn
    return pl.pallas_call(
        _gemm_tanh_t_kernel,
        out_shape=jax.ShapeDtypeStruct((co_eff, m_pad), jnp.float32),
        grid=(grid,),
        in_specs=[pl.BlockSpec((co_eff, k), lambda i: (0, 0)),
                  pl.BlockSpec((k, tn), lambda i: (0, i))],
        out_specs=pl.BlockSpec((co_eff, tn), lambda i: (0, i)),
        compiler_params=pltpu.CompilerParams(dimension_semantics=("parallel",)),
    )(wk_t, patches_t)


# ----------------------------------------------------------------------------- glue

def _bn_scale_shift(stats, gamma, beta, count, p, eps=1e-5):
    """Fold per-tile (sum, sumsq) partials into per-channel BN scale/shift, tiled to
    the grouped (p * Co) column layout.  Training-mode batch stats, biased variance
    (matches nn.BatchNorm2d normalization in train())."""
    co = gamma.shape[0]
    st = stats.reshape(-1, 8, p * co)
    s1 = jnp.sum(st[:, 0, :], axis=0).reshape(p, co).sum(axis=0)
    s2 = jnp.sum(st[:, 1, :], axis=0).reshape(p, co).sum(axis=0)
    mean = s1 / count
    var = jnp.maximum(s2 / count - mean * mean, 0.0)
    scale_c = gamma * jax.lax.rsqrt(var + eps)
    shift_c = beta - mean * scale_c
    return (jnp.tile(scale_c, p).reshape(1, p * co),
            jnp.tile(shift_c, p).reshape(1, p * co))


# ky/kx used by output phase p and input offset d for stride=2, pad=1, k=4
# (ConvTranspose relation: k = p - 2*d + 1, kept only if 0 <= k <= 3).
_KMAP = {(0, -1): 3, (0, 0): 1, (0, 1): None,
         (1, -1): None, (1, 0): 2, (1, 1): 0}


def _phase_weights(w):
    """ConvTranspose2d weight (Ci, Co, 4, 4) [stride=2, pad=1] -> (9*Ci, 4*Co) GEMM
    weight acting on the 3x3 neighbourhood of the un-dilated input.  Rows are
    (tap, ci); columns are (phase p = py*2+px, co)."""
    ci, co = w.shape[0], w.shape[1]
    zero = jnp.zeros((ci, co), w.dtype)
    phases = []
    for py in range(2):
        for px in range(2):
            taps = []
            for dy in (-1, 0, 1):
                for dx in (-1, 0, 1):
                    ky, kx = _KMAP[(py, dy)], _KMAP[(px, dx)]
                    taps.append(zero if (ky is None or kx is None) else w[:, :, ky, kx])
            phases.append(jnp.stack(taps, axis=0))                   # (9, Ci, Co)
    wk = jnp.stack(phases, axis=0)                                   # (4, 9, Ci, Co)
    return jnp.transpose(wk, (1, 2, 0, 3)).reshape(9 * ci, 4 * co)


# ----------------------------------------------------------------------------- layers

def project_bn_relu(z2, w, gamma, beta):
    """Layer 1: ConvTranspose2d(nz, Co, 4, stride=1, pad=0) on a 1x1 input
    == single (N, nz) @ (nz, 16*Co) GEMM, + BatchNorm(train) + ReLU.  NHWC out."""
    n = z2.shape[0]
    ci, co = w.shape[0], w.shape[1]
    wk = jnp.transpose(w, (0, 2, 3, 1)).reshape(ci, 16 * co)         # cols = (ky, kx, co)
    tm = _pick_tm(n)
    m_pad = _round_up(n, tm)
    patches = z2 if m_pad == n else jnp.pad(z2, ((0, m_pad - n), (0, 0)))
    pre, stats = _gemm_stats(patches.astype(jnp.bfloat16), wk.astype(jnp.bfloat16), tm)
    scale, shift = _bn_scale_shift(stats, gamma, beta, count=n * 16, p=16)
    post = _scale_shift_relu(pre, scale, shift, tm)
    return post[:n].reshape(n, 4, 4, co)                             # NHWC


def upconv_bn_relu(x_nhwc, w, gamma, beta):
    """ConvTranspose2d(Ci, Co, 4, stride=2, pad=1) + BatchNorm(train) + ReLU, NHWC."""
    n, h, wd, ci = x_nhwc.shape
    co = w.shape[1]
    wk = _phase_weights(w)                                           # (9*Ci, 4*Co)
    xp = jnp.pad(x_nhwc, ((0, 0), (1, 1), (1, 1), (0, 0)))
    taps = [xp[:, 1 + dy:1 + dy + h, 1 + dx:1 + dx + wd, :]
            for dy in (-1, 0, 1) for dx in (-1, 0, 1)]
    # TODO(synk): stream the 9 taps straight from the padded activation with offset
    # index_maps instead of materializing the 9x patch matrix in HBM.
    patches = jnp.concatenate(taps, axis=-1).reshape(n * h * wd, 9 * ci)
    m = n * h * wd
    tm = _pick_tm(m)
    m_pad = _round_up(m, tm)
    if m_pad != m:
        patches = jnp.pad(patches, ((0, m_pad - m), (0, 0)))
    pre, stats = _gemm_stats(patches.astype(jnp.bfloat16), wk.astype(jnp.bfloat16), tm)
    scale, shift = _bn_scale_shift(stats, gamma, beta, count=m * 4, p=4)
    post = _scale_shift_relu(pre, scale, shift, tm)
    post = post[:m].reshape(n, h, wd, 2, 2, co)                      # (n, i, j, py, px, c)
    return jnp.transpose(post, (0, 1, 3, 2, 4, 5)).reshape(n, 2 * h, 2 * wd, co)


def upconv_tanh_nchw(x_nhwc, w):
    """Final layer: ConvTranspose2d(Ci, nc, 4, stride=2, pad=1) + Tanh, computed
    transposed ((4*nc, M) with M on the lane axis -> lane-dense stores); lands
    directly in NCHW."""
    n, h, wd, ci = x_nhwc.shape
    co = w.shape[1]
    wk_t = jnp.transpose(_phase_weights(w))                          # (4*co, 9*ci)
    xt = jnp.transpose(x_nhwc, (3, 0, 1, 2))                         # (Ci, N, H, W)
    xtp = jnp.pad(xt, ((0, 0), (0, 0), (1, 1), (1, 1)))
    m = n * h * wd
    taps = [xtp[:, :, 1 + dy:1 + dy + h, 1 + dx:1 + dx + wd].reshape(ci, m)
            for dy in (-1, 0, 1) for dx in (-1, 0, 1)]
    patches_t = jnp.concatenate(taps, axis=0)                        # (9*Ci, M)
    tn = min(512, _round_up(m, 128))
    m_pad = _round_up(m, tn)
    if m_pad != m:
        patches_t = jnp.pad(patches_t, ((0, 0), (0, m_pad - m)))
    out_t = _gemm_tanh_t(wk_t.astype(jnp.bfloat16), patches_t.astype(jnp.bfloat16), tn)
    out_t = out_t[:, :m].reshape(2, 2, co, n, h, wd)                 # (py, px, c, n, i, j)
    return jnp.transpose(out_t, (3, 2, 4, 0, 5, 1)).reshape(n, co, 2 * h, 2 * wd)


# ------------------------------------------------------------------------ full model

def init_generator_params(key, nz, nc, ngf):
    """Deterministic synthetic init (DCGAN-style N(0, 0.02) conv weights)."""
    chans = [nz, ngf * 8, ngf * 4, ngf * 2, ngf, nc]
    keys = jax.random.split(key, 5)
    params = []
    for i in range(5):
        ci, co = chans[i], chans[i + 1]
        w = 0.02 * jax.random.normal(keys[i], (ci, co, 4, 4), jnp.float32)
        gamma = jnp.ones((co,), jnp.float32)     # BatchNorm2d default weight
        beta = jnp.zeros((co,), jnp.float32)     # BatchNorm2d default bias
        params.append((w, gamma, beta))
    return params


def generator_forward(z_nchw, params):
    """Matches Generator.forward: ConvT(s1,p0)+BN+ReLU, 3x[ConvT(s2,p1)+BN+ReLU],
    ConvT(s2,p1)+Tanh.  In: (N, nz, 1, 1) NCHW, out: (N, nc, 64, 64) NCHW."""
    n = z_nchw.shape[0]
    z2 = z_nchw.reshape(n, -1)
    (w1, g1, b1), (w2, g2, b2), (w3, g3, b3), (w4, g4, b4), (w5, _, _) = params
    x = project_bn_relu(z2, w1, g1, b1)          # (N, 4, 4, 8*ngf)
    x = upconv_bn_relu(x, w2, g2, b2)            # (N, 8, 8, 4*ngf)
    x = upconv_bn_relu(x, w3, g3, b3)            # (N, 16, 16, 2*ngf)
    x = upconv_bn_relu(x, w4, g4, b4)            # (N, 32, 32, ngf)
    return upconv_tanh_nchw(x, w5)               # (N, nc, 64, 64)


# ------------------------------------------------------------------- pure-JAX reference

def _conv_transpose_ref(x_nchw, w, stride, padding):
    k = w.shape[2]
    kern = jnp.transpose(jnp.flip(w, (2, 3)), (2, 3, 0, 1))          # (k, k, Ci, Co)
    x = jnp.transpose(x_nchw, (0, 2, 3, 1))
    pad = k - 1 - padding
    y = jax.lax.conv_general_dilated(
        x, kern, window_strides=(1, 1), padding=((pad, pad), (pad, pad)),
        lhs_dilation=(stride, stride), dimension_numbers=("NHWC", "HWIO", "NHWC"))
    return jnp.transpose(y, (0, 3, 1, 2))


def generator_forward_ref(z_nchw, params, eps=1e-5):
    x = z_nchw
    strides = [1, 2, 2, 2, 2]
    pads = [0, 1, 1, 1, 1]
    for i, (w, g, b) in enumerate(params):
        x = _conv_transpose_ref(x, w, strides[i], pads[i])
        if i < 4:
            mean = jnp.mean(x, axis=(0, 2, 3), keepdims=True)
            var = jnp.mean(jnp.square(x - mean), axis=(0, 2, 3), keepdims=True)
            x = (x - mean) * jax.lax.rsqrt(var + eps)
            x = x * g.reshape(1, -1, 1, 1) + b.reshape(1, -1, 1, 1)
            x = jnp.maximum(x, 0.0)
        else:
            x = jnp.tanh(x)
    return x


if __name__ == "__main__":
    # Architecture-consistent small shapes: img_size=64, nz=16, nc=3, ngf=8, batch=2.
    nz, nc, ngf = 16, 3, 8
    batch = 2
    key = jax.random.PRNGKey(0)
    k_z, k_p = jax.random.split(key)

    z = jax.random.normal(k_z, (batch, nz, 1, 1), jnp.float32)       # (N, nz, 1, 1)
    params = init_generator_params(k_p, nz, nc, ngf)

    out = jax.block_until_ready(jax.jit(generator_forward)(z, params))

    assert out.shape == (batch, nc, 64, 64), out.shape
    assert bool(jnp.all(jnp.isfinite(out)))
    assert bool(jnp.all(jnp.abs(out) <= 1.0 + 1e-6))                 # tanh range

    # Cross-check against a pure-JAX reference (bf16 MXU vs f32 reference tolerance).
    ref = jax.block_until_ready(jax.jit(generator_forward_ref)(z, params))
    max_err = float(jnp.max(jnp.abs(out - ref)))
    assert max_err < 5e-2, f"max |pallas - ref| = {max_err}"

    print("KERNEL_OK")
</pallas_src>

<mosaic_0001>
module attributes {stable_mosaic.version = 11 : i64} {
  func.func @_gemm_stats_kernel(%arg0: i32, %arg1: memref<8x16xbf16, #tpu.memory_space<vmem>>, %arg2: memref<16x1024xbf16, #tpu.memory_space<vmem>>, %arg3: memref<8x1024xf32, #tpu.memory_space<vmem>>, %arg4: memref<8x1024xf32, #tpu.memory_space<vmem>>) attributes {dimension_semantics = [#tpu.dimension_semantics<parallel>], iteration_bounds = array<i64: 1>, scalar_prefetch = 0 : i64, scratch_operands = 0 : i64, tpu.core_type = #tpu.core_type<tc>, window_params = [{transform_indices = @transform_0, window_bounds = array<i64: 8, 16>}, {pipeline_mode = #tpu.pipeline_mode<synchronous>, transform_indices = @transform_1, window_bounds = array<i64: 16, 1024>}, {transform_indices = @transform_2, window_bounds = array<i64: 8, 1024>}, {transform_indices = @transform_3, window_bounds = array<i64: 8, 1024>}]} {
    %c0 = arith.constant 0 : index
    %c0_0 = arith.constant 0 : index
    %0 = vector.load %arg1[%c0, %c0_0] : memref<8x16xbf16, #tpu.memory_space<vmem>>, vector<8x16xbf16>
    %c0_1 = arith.constant 0 : index
    %c0_2 = arith.constant 0 : index
    %1 = vector.load %arg2[%c0_1, %c0_2] : memref<16x1024xbf16, #tpu.memory_space<vmem>>, vector<16x1024xbf16>
    %cst = arith.constant dense<0.000000e+00> : vector<8x1024xf32>
    %2 = tpu.matmul %0, %1, %cst {dimension_numbers = #tpu.dot_dimension_numbers<[1], [0], [0], [1], [0, 0, 1, 1], [], []>} : vector<8x16xbf16>, vector<16x1024xbf16>, vector<8x1024xf32> -> vector<8x1024xf32>
    %c0_3 = arith.constant 0 : index
    %c0_4 = arith.constant 0 : index
    %3 = vector.load %arg3[%c0_3, %c0_4] : memref<8x1024xf32, #tpu.memory_space<vmem>>, vector<8x1024xf32>
    tpu.vector_store %arg3[%c0_3, %c0_4], %2 {strides = array<i32>} : memref<8x1024xf32, #tpu.memory_space<vmem>>, vector<8x1024xf32>,
    %cst_5 = arith.constant dense<0.000000e+00> : vector<1024xf32>
    %4 = vector.multi_reduction <add>, %2, %cst_5 [0] : vector<8x1024xf32> to vector<1024xf32>
    %5 = vector.shape_cast %4 : vector<1024xf32> to vector<1x1024xf32>
    %c0_6 = arith.constant 0 : index
    %c0_7 = arith.constant 0 : index
    %6 = vector.load %arg4[%c0_6, %c0_7] : memref<8x1024xf32, #tpu.memory_space<vmem>>, vector<1x1024xf32>
    tpu.vector_store %arg4[%c0_6, %c0_7], %5 {strides = array<i32>} : memref<8x1024xf32, #tpu.memory_space<vmem>>, vector<1x1024xf32>,
    %7 = arith.mulf %2, %2 : vector<8x1024xf32>
    %cst_8 = arith.constant dense<0.000000e+00> : vector<1024xf32>
    %8 = vector.multi_reduction <add>, %7, %cst_8 [0] : vector<8x1024xf32> to vector<1024xf32>
    %9 = vector.shape_cast %8 : vector<1024xf32> to vector<1x1024xf32>
    %c1 = arith.constant 1 : index
    %c0_9 = arith.constant 0 : index
    %10 = vector.load %arg4[%c1, %c0_9] : memref<8x1024xf32, #tpu.memory_space<vmem>>, vector<1x1024xf32>
    tpu.vector_store %arg4[%c1, %c0_9], %9 {strides = array<i32>} : memref<8x1024xf32, #tpu.memory_space<vmem>>, vector<1x1024xf32>,
    return
  }
  func.func @transform_0(%arg0: i32) -> (i32, i32) {
    %c0_i32 = arith.constant 0 : i32
    %c0_i32_0 = arith.constant 0 : i32
    return %arg0, %c0_i32 : i32, i32
  }
  func.func @transform_1(%arg0: i32) -> (i32, i32) {
    %c0_i32 = arith.constant 0 : i32
    %c0_i32_0 = arith.constant 0 : i32
    %c0_i32_1 = arith.constant 0 : i32
    return %c0_i32, %c0_i32_0 : i32, i32
  }
  func.func @transform_2(%arg0: i32) -> (i32, i32) {
    %c0_i32 = arith.constant 0 : i32
    %c0_i32_0 = arith.constant 0 : i32
    return %arg0, %c0_i32 : i32, i32
  }
  func.func @transform_3(%arg0: i32) -> (i32, i32) {
    %c0_i32 = arith.constant 0 : i32
    %c0_i32_0 = arith.constant 0 : i32
    return %arg0, %c0_i32 : i32, i32
  }
}

module attributes {stable_mosaic.version = 11 : i64} {
  func.func @_scale_shift_relu_kernel(%arg0: i32, %arg1: memref<8x1024xf32, #tpu.memory_space<vmem>>, %arg2: memref<1x1024xf32, #tpu.memory_space<vmem>>, %arg3: memref<1x1024xf32, #tpu.memory_space<vmem>>, %arg4: memref<8x1024xf32, #tpu.memory_space<vmem>>) attributes {dimension_semantics = [#tpu.dimension_semantics<parallel>], iteration_bounds = array<i64: 1>, scalar_prefetch = 0 : i64, scratch_operands = 0 : i64, tpu.core_type = #tpu.core_type<tc>, window_params = [{transform_indices = @transform_0, window_bounds = array<i64: 8, 1024>}, {pipeline_mode = #tpu.pipeline_mode<synchronous>, transform_indices = @transform_1, window_bounds = array<i64: 1, 1024>}, {pipeline_mode = #tpu.pipeline_mode<synchronous>, transform_indices = @transform_2, window_bounds = array<i64: 1, 1024>}, {transform_indices = @transform_3, window_bounds = array<i64: 8, 1024>}]} {
    %c0 = arith.constant 0 : index
    %c0_0 = arith.constant 0 : index
    %0 = vector.load %arg1[%c0, %c0_0] : memref<8x1024xf32, #tpu.memory_space<vmem>>, vector<8x1024xf32>
    %c0_1 = arith.constant 0 : index
    %c0_2 = arith.constant 0 : index
    %1 = vector.load %arg2[%c0_1, %c0_2] : memref<1x1024xf32, #tpu.memory_space<vmem>>, vector<1x1024xf32>
    %2 = vector.broadcast %1 : vector<1x1024xf32> to vector<8x1024xf32>
    %3 = arith.mulf %0, %2 : vector<8x1024xf32>
    %c0_3 = arith.constant 0 : index
    %c0_4 = arith.constant 0 : index
    %4 = vector.load %arg3[%c0_3, %c0_4] : memref<1x1024xf32, #tpu.memory_space<vmem>>, vector<1x1024xf32>
    %5 = vector.broadcast %4 : vector<1x1024xf32> to vector<8x1024xf32>
    %6 = arith.addf %3, %5 : vector<8x1024xf32>
    %cst = arith.constant 0.000000e+00 : f32
    %7 = vector.broadcast %cst : f32 to vector<8x1024xf32>
    %8 = arith.maximumf %6, %7 : vector<8x1024xf32>
    %c0_5 = arith.constant 0 : index
    %c0_6 = arith.constant 0 : index
    %9 = vector.load %arg4[%c0_5, %c0_6] : memref<8x1024xf32, #tpu.memory_space<vmem>>, vector<8x1024xf32>
    tpu.vector_store %arg4[%c0_5, %c0_6], %8 {strides = array<i32>} : memref<8x1024xf32, #tpu.memory_space<vmem>>, vector<8x1024xf32>,
    return
  }
  func.func @transform_0(%arg0: i32) -> (i32, i32) {
    %c0_i32 = arith.constant 0 : i32
    %c0_i32_0 = arith.constant 0 : i32
    return %arg0, %c0_i32 : i32, i32
  }
  func.func @transform_1(%arg0: i32) -> (i32, i32) {
    %c0_i32 = arith.constant 0 : i32
    %c0_i32_0 = arith.constant 0 : i32
    %c0_i32_1 = arith.constant 0 : i32
    return %c0_i32, %c0_i32_0 : i32, i32
  }
  func.func @transform_2(%arg0: i32) -> (i32, i32) {
    %c0_i32 = arith.constant 0 : i32
    %c0_i32_0 = arith.constant 0 : i32
    %c0_i32_1 = arith.constant 0 : i32
    return %c0_i32, %c0_i32_0 : i32, i32
  }
  func.func @transform_3(%arg0: i32) -> (i32, i32) {
    %c0_i32 = arith.constant 0 : i32
    %c0_i32_0 = arith.constant 0 : i32
    return %arg0, %c0_i32 : i32, i32
  }
}

module attributes {stable_mosaic.version = 11 : i64} {
  func.func @_gemm_stats_kernel(%arg0: i32, %arg1: memref<32x576xbf16, #tpu.memory_space<vmem>>, %arg2: memref<576x128xbf16, #tpu.memory_space<vmem>>, %arg3: memref<32x128xf32, #tpu.memory_space<vmem>>, %arg4: memref<8x128xf32, #tpu.memory_space<vmem>>) attributes {dimension_semantics = [#tpu.dimension_semantics<parallel>], iteration_bounds = array<i64: 1>, scalar_prefetch = 0 : i64, scratch_operands = 0 : i64, tpu.core_type = #tpu.core_type<tc>, window_params = [{transform_indices = @transform_0, window_bounds = array<i64: 32, 576>}, {pipeline_mode = #tpu.pipeline_mode<synchronous>, transform_indices = @transform_1, window_bounds = array<i64: 576, 128>}, {transform_indices = @transform_2, window_bounds = array<i64: 32, 128>}, {transform_indices = @transform_3, window_bounds = array<i64: 8, 128>}]} {
    %c0 = arith.constant 0 : index
    %c0_0 = arith.constant 0 : index
    %0 = vector.load %arg1[%c0, %c0_0] : memref<32x576xbf16, #tpu.memory_space<vmem>>, vector<32x576xbf16>
    %c0_1 = arith.constant 0 : index
    %c0_2 = arith.constant 0 : index
    %1 = vector.load %arg2[%c0_1, %c0_2] : memref<576x128xbf16, #tpu.memory_space<vmem>>, vector<576x128xbf16>
    %cst = arith.constant dense<0.000000e+00> : vector<32x128xf32>
    %2 = tpu.matmul %0, %1, %cst {dimension_numbers = #tpu.dot_dimension_numbers<[1], [0], [0], [1], [0, 0, 1, 1], [], []>} : vector<32x576xbf16>, vector<576x128xbf16>, vector<32x128xf32> -> vector<32x128xf32>
    %c0_3 = arith.constant 0 : index
    %c0_4 = arith.constant 0 : index
    %3 = vector.load %arg3[%c0_3, %c0_4] : memref<32x128xf32, #tpu.memory_space<vmem>>, vector<32x128xf32>
    tpu.vector_store %arg3[%c0_3, %c0_4], %2 {strides = array<i32>} : memref<32x128xf32, #tpu.memory_space<vmem>>, vector<32x128xf32>,
    %cst_5 = arith.constant dense<0.000000e+00> : vector<128xf32>
    %4 = vector.multi_reduction <add>, %2, %cst_5 [0] : vector<32x128xf32> to vector<128xf32>
    %5 = vector.shape_cast %4 : vector<128xf32> to vector<1x128xf32>
    %c0_6 = arith.constant 0 : index
    %c0_7 = arith.constant 0 : index
    %6 = vector.load %arg4[%c0_6, %c0_7] : memref<8x128xf32, #tpu.memory_space<vmem>>, vector<1x128xf32>
    tpu.vector_store %arg4[%c0_6, %c0_7], %5 {strides = array<i32>} : memref<8x128xf32, #tpu.memory_space<vmem>>, vector<1x128xf32>,
    %7 = arith.mulf %2, %2 : vector<32x128xf32>
    %cst_8 = arith.constant dense<0.000000e+00> : vector<128xf32>
    %8 = vector.multi_reduction <add>, %7, %cst_8 [0] : vector<32x128xf32> to vector<128xf32>
    %9 = vector.shape_cast %8 : vector<128xf32> to vector<1x128xf32>
    %c1 = arith.constant 1 : index
    %c0_9 = arith.constant 0 : index
    %10 = vector.load %arg4[%c1, %c0_9] : memref<8x128xf32, #tpu.memory_space<vmem>>, vector<1x128xf32>
    tpu.vector_store %arg4[%c1, %c0_9], %9 {strides = array<i32>} : memref<8x128xf32, #tpu.memory_space<vmem>>, vector<1x128xf32>,
    return
  }
  func.func @transform_0(%arg0: i32) -> (i32, i32) {
    %c0_i32 = arith.constant 0 : i32
    %c0_i32_0 = arith.constant 0 : i32
    return %arg0, %c0_i32 : i32, i32
  }
  func.func @transform_1(%arg0: i32) -> (i32, i32) {
    %c0_i32 = arith.constant 0 : i32
    %c0_i32_0 = arith.constant 0 : i32
    %c0_i32_1 = arith.constant 0 : i32
    return %c0_i32, %c0_i32_0 : i32, i32
  }
  func.func @transform_2(%arg0: i32) -> (i32, i32) {
    %c0_i32 = arith.constant 0 : i32
    %c0_i32_0 = arith.constant 0 : i32
    return %arg0, %c0_i32 : i32, i32
  }
  func.func @transform_3(%arg0: i32) -> (i32, i32) {
    %c0_i32 = arith.constant 0 : i32
    %c0_i32_0 = arith.constant 0 : i32
    return %arg0, %c0_i32 : i32, i32
  }
}

module attributes {stable_mosaic.version = 11 : i64} {
  func.func @_scale_shift_relu_kernel(%arg0: i32, %arg1: memref<32x128xf32, #tpu.memory_space<vmem>>, %arg2: memref<1x128xf32, #tpu.memory_space<vmem>>, %arg3: memref<1x128xf32, #tpu.memory_space<vmem>>, %arg4: memref<32x128xf32, #tpu.memory_space<vmem>>) attributes {dimension_semantics = [#tpu.dimension_semantics<parallel>], iteration_bounds = array<i64: 1>, scalar_prefetch = 0 : i64, scratch_operands = 0 : i64, tpu.core_type = #tpu.core_type<tc>, window_params = [{transform_indices = @transform_0, window_bounds = array<i64: 32, 128>}, {pipeline_mode = #tpu.pipeline_mode<synchronous>, transform_indices = @transform_1, window_bounds = array<i64: 1, 128>}, {pipeline_mode = #tpu.pipeline_mode<synchronous>, transform_indices = @transform_2, window_bounds = array<i64: 1, 128>}, {transform_indices = @transform_3, window_bounds = array<i64: 32, 128>}]} {
    %c0 = arith.constant 0 : index
    %c0_0 = arith.constant 0 : index
    %0 = vector.load %arg1[%c0, %c0_0] : memref<32x128xf32, #tpu.memory_space<vmem>>, vector<32x128xf32>
    %c0_1 = arith.constant 0 : index
    %c0_2 = arith.constant 0 : index
    %1 = vector.load %arg2[%c0_1, %c0_2] : memref<1x128xf32, #tpu.memory_space<vmem>>, vector<1x128xf32>
    %2 = vector.broadcast %1 : vector<1x128xf32> to vector<32x128xf32>
    %3 = arith.mulf %0, %2 : vector<32x128xf32>
    %c0_3 = arith.constant 0 : index
    %c0_4 = arith.constant 0 : index
    %4 = vector.load %arg3[%c0_3, %c0_4] : memref<1x128xf32, #tpu.memory_space<vmem>>, vector<1x128xf32>
    %5 = vector.broadcast %4 : vector<1x128xf32> to vector<32x128xf32>
    %6 = arith.addf %3, %5 : vector<32x128xf32>
    %cst = arith.constant 0.000000e+00 : f32
    %7 = vector.broadcast %cst : f32 to vector<32x128xf32>
    %8 = arith.maximumf %6, %7 : vector<32x128xf32>
    %c0_5 = arith.constant 0 : index
    %c0_6 = arith.constant 0 : index
    %9 = vector.load %arg4[%c0_5, %c0_6] : memref<32x128xf32, #tpu.memory_space<vmem>>, vector<32x128xf32>
    tpu.vector_store %arg4[%c0_5, %c0_6], %8 {strides = array<i32>} : memref<32x128xf32, #tpu.memory_space<vmem>>, vector<32x128xf32>,
    return
  }
  func.func @transform_0(%arg0: i32) -> (i32, i32) {
    %c0_i32 = arith.constant 0 : i32
    %c0_i32_0 = arith.constant 0 : i32
    return %arg0, %c0_i32 : i32, i32
  }
  func.func @transform_1(%arg0: i32) -> (i32, i32) {
    %c0_i32 = arith.constant 0 : i32
    %c0_i32_0 = arith.constant 0 : i32
    %c0_i32_1 = arith.constant 0 : i32
    return %c0_i32, %c0_i32_0 : i32, i32
  }
  func.func @transform_2(%arg0: i32) -> (i32, i32) {
    %c0_i32 = arith.constant 0 : i32
    %c0_i32_0 = arith.constant 0 : i32
    %c0_i32_1 = arith.constant 0 : i32
    return %c0_i32, %c0_i32_0 : i32, i32
  }
  func.func @transform_3(%arg0: i32) -> (i32, i32) {
    %c0_i32 = arith.constant 0 : i32
    %c0_i32_0 = arith.constant 0 : i32
    return %arg0, %c0_i32 : i32, i32
  }
}

module attributes {stable_mosaic.version = 11 : i64} {
  func.func @_gemm_stats_kernel(%arg0: i32, %arg1: memref<128x288xbf16, #tpu.memory_space<vmem>>, %arg2: memref<288x64xbf16, #tpu.memory_space<vmem>>, %arg3: memref<128x64xf32, #tpu.memory_space<vmem>>, %arg4: memref<8x64xf32, #tpu.memory_space<vmem>>) attributes {dimension_semantics = [#tpu.dimension_semantics<parallel>], iteration_bounds = array<i64: 1>, scalar_prefetch = 0 : i64, scratch_operands = 0 : i64, tpu.core_type = #tpu.core_type<tc>, window_params = [{transform_indices = @transform_0, window_bounds = array<i64: 128, 288>}, {pipeline_mode = #tpu.pipeline_mode<synchronous>, transform_indices = @transform_1, window_bounds = array<i64: 288, 64>}, {transform_indices = @transform_2, window_bounds = array<i64: 128, 64>}, {transform_indices = @transform_3, window_bounds = array<i64: 8, 64>}]} {
    %c0 = arith.constant 0 : index
    %c0_0 = arith.constant 0 : index
    %0 = vector.load %arg1[%c0, %c0_0] : memref<128x288xbf16, #tpu.memory_space<vmem>>, vector<128x288xbf16>
    %c0_1 = arith.constant 0 : index
    %c0_2 = arith.constant 0 : index
    %1 = vector.load %arg2[%c0_1, %c0_2] : memref<288x64xbf16, #tpu.memory_space<vmem>>, vector<288x64xbf16>
    %cst = arith.constant dense<0.000000e+00> : vector<128x64xf32>
    %2 = tpu.matmul %0, %1, %cst {dimension_numbers = #tpu.dot_dimension_numbers<[1], [0], [0], [1], [0, 0, 1, 1], [], []>} : vector<128x288xbf16>, vector<288x64xbf16>, vector<128x64xf32> -> vector<128x64xf32>
    %c0_3 = arith.constant 0 : index
    %c0_4 = arith.constant 0 : index
    %3 = vector.load %arg3[%c0_3, %c0_4] : memref<128x64xf32, #tpu.memory_space<vmem>>, vector<128x64xf32>
    tpu.vector_store %arg3[%c0_3, %c0_4], %2 {strides = array<i32>} : memref<128x64xf32, #tpu.memory_space<vmem>>, vector<128x64xf32>,
    %cst_5 = arith.constant dense<0.000000e+00> : vector<64xf32>
    %4 = vector.multi_reduction <add>, %2, %cst_5 [0] : vector<128x64xf32> to vector<64xf32>
    %5 = vector.shape_cast %4 : vector<64xf32> to vector<1x64xf32>
    %c0_6 = arith.constant 0 : index
    %c0_7 = arith.constant 0 : index
    %6 = vector.load %arg4[%c0_6, %c0_7] : memref<8x64xf32, #tpu.memory_space<vmem>>, vector<1x64xf32>
    tpu.vector_store %arg4[%c0_6, %c0_7], %5 {strides = array<i32>} : memref<8x64xf32, #tpu.memory_space<vmem>>, vector<1x64xf32>,
    %7 = arith.mulf %2, %2 : vector<128x64xf32>
    %cst_8 = arith.constant dense<0.000000e+00> : vector<64xf32>
    %8 = vector.multi_reduction <add>, %7, %cst_8 [0] : vector<128x64xf32> to vector<64xf32>
    %9 = vector.shape_cast %8 : vector<64xf32> to vector<1x64xf32>
    %c1 = arith.constant 1 : index
    %c0_9 = arith.constant 0 : index
    %10 = vector.load %arg4[%c1, %c0_9] : memref<8x64xf32, #tpu.memory_space<vmem>>, vector<1x64xf32>
    tpu.vector_store %arg4[%c1, %c0_9], %9 {strides = array<i32>} : memref<8x64xf32, #tpu.memory_space<vmem>>, vector<1x64xf32>,
    return
  }
  func.func @transform_0(%arg0: i32) -> (i32, i32) {
    %c0_i32 = arith.constant 0 : i32
    %c0_i32_0 = arith.constant 0 : i32
    return %arg0, %c0_i32 : i32, i32
  }
  func.func @transform_1(%arg0: i32) -> (i32, i32) {
    %c0_i32 = arith.constant 0 : i32
    %c0_i32_0 = arith.constant 0 : i32
    %c0_i32_1 = arith.constant 0 : i32
    return %c0_i32, %c0_i32_0 : i32, i32
  }
  func.func @transform_2(%arg0: i32) -> (i32, i32) {
    %c0_i32 = arith.constant 0 : i32
    %c0_i32_0 = arith.constant 0 : i32
    return %arg0, %c0_i32 : i32, i32
  }
  func.func @transform_3(%arg0: i32) -> (i32, i32) {
    %c0_i32 = arith.constant 0 : i32
    %c0_i32_0 = arith.constant 0 : i32
    return %arg0, %c0_i32 : i32, i32
  }
}

module attributes {stable_mosaic.version = 11 : i64} {
  func.func @_scale_shift_relu_kernel(%arg0: i32, %arg1: memref<128x64xf32, #tpu.memory_space<vmem>>, %arg2: memref<1x64xf32, #tpu.memory_space<vmem>>, %arg3: memref<1x64xf32, #tpu.memory_space<vmem>>, %arg4: memref<128x64xf32, #tpu.memory_space<vmem>>) attributes {dimension_semantics = [#tpu.dimension_semantics<parallel>], iteration_bounds = array<i64: 1>, scalar_prefetch = 0 : i64, scratch_operands = 0 : i64, tpu.core_type = #tpu.core_type<tc>, window_params = [{transform_indices = @transform_0, window_bounds = array<i64: 128, 64>}, {pipeline_mode = #tpu.pipeline_mode<synchronous>, transform_indices = @transform_1, window_bounds = array<i64: 1, 64>}, {pipeline_mode = #tpu.pipeline_mode<synchronous>, transform_indices = @transform_2, window_bounds = array<i64: 1, 64>}, {transform_indices = @transform_3, window_bounds = array<i64: 128, 64>}]} {
    %c0 = arith.constant 0 : index
    %c0_0 = arith.constant 0 : index
    %0 = vector.load %arg1[%c0, %c0_0] : memref<128x64xf32, #tpu.memory_space<vmem>>, vector<128x64xf32>
    %c0_1 = arith.constant 0 : index
    %c0_2 = arith.constant 0 : index
    %1 = vector.load %arg2[%c0_1, %c0_2] : memref<1x64xf32, #tpu.memory_space<vmem>>, vector<1x64xf32>
    %2 = vector.broadcast %1 : vector<1x64xf32> to vector<128x64xf32>
    %3 = arith.mulf %0, %2 : vector<128x64xf32>
    %c0_3 = arith.constant 0 : index
    %c0_4 = arith.constant 0 : index
    %4 = vector.load %arg3[%c0_3, %c0_4] : memref<1x64xf32, #tpu.memory_space<vmem>>, vector<1x64xf32>
    %5 = vector.broadcast %4 : vector<1x64xf32> to vector<128x64xf32>
    %6 = arith.addf %3, %5 : vector<128x64xf32>
    %cst = arith.constant 0.000000e+00 : f32
    %7 = vector.broadcast %cst : f32 to vector<128x64xf32>
    %8 = arith.maximumf %6, %7 : vector<128x64xf32>
    %c0_5 = arith.constant 0 : index
    %c0_6 = arith.constant 0 : index
    %9 = vector.load %arg4[%c0_5, %c0_6] : memref<128x64xf32, #tpu.memory_space<vmem>>, vector<128x64xf32>
    tpu.vector_store %arg4[%c0_5, %c0_6], %8 {strides = array<i32>} : memref<128x64xf32, #tpu.memory_space<vmem>>, vector<128x64xf32>,
    return
  }
  func.func @transform_0(%arg0: i32) -> (i32, i32) {
    %c0_i32 = arith.constant 0 : i32
    %c0_i32_0 = arith.constant 0 : i32
    return %arg0, %c0_i32 : i32, i32
  }
  func.func @transform_1(%arg0: i32) -> (i32, i32) {
    %c0_i32 = arith.constant 0 : i32
    %c0_i32_0 = arith.constant 0 : i32
    %c0_i32_1 = arith.constant 0 : i32
    return %c0_i32, %c0_i32_0 : i32, i32
  }
  func.func @transform_2(%arg0: i32) -> (i32, i32) {
    %c0_i32 = arith.constant 0 : i32
    %c0_i32_0 = arith.constant 0 : i32
    %c0_i32_1 = arith.constant 0 : i32
    return %c0_i32, %c0_i32_0 : i32, i32
  }
  func.func @transform_3(%arg0: i32) -> (i32, i32) {
    %c0_i32 = arith.constant 0 : i32
    %c0_i32_0 = arith.constant 0 : i32
    return %arg0, %c0_i32 : i32, i32
  }
}

module attributes {stable_mosaic.version = 11 : i64} {
  func.func @_gemm_stats_kernel(%arg0: i32, %arg1: memref<512x144xbf16, #tpu.memory_space<vmem>>, %arg2: memref<144x32xbf16, #tpu.memory_space<vmem>>, %arg3: memref<512x32xf32, #tpu.memory_space<vmem>>, %arg4: memref<8x32xf32, #tpu.memory_space<vmem>>) attributes {dimension_semantics = [#tpu.dimension_semantics<parallel>], iteration_bounds = array<i64: 1>, scalar_prefetch = 0 : i64, scratch_operands = 0 : i64, tpu.core_type = #tpu.core_type<tc>, window_params = [{transform_indices = @transform_0, window_bounds = array<i64: 512, 144>}, {pipeline_mode = #tpu.pipeline_mode<synchronous>, transform_indices = @transform_1, window_bounds = array<i64: 144, 32>}, {transform_indices = @transform_2, window_bounds = array<i64: 512, 32>}, {transform_indices = @transform_3, window_bounds = array<i64: 8, 32>}]} {
    %c0 = arith.constant 0 : index
    %c0_0 = arith.constant 0 : index
    %0 = vector.load %arg1[%c0, %c0_0] : memref<512x144xbf16, #tpu.memory_space<vmem>>, vector<512x144xbf16>
    %c0_1 = arith.constant 0 : index
    %c0_2 = arith.constant 0 : index
    %1 = vector.load %arg2[%c0_1, %c0_2] : memref<144x32xbf16, #tpu.memory_space<vmem>>, vector<144x32xbf16>
    %cst = arith.constant dense<0.000000e+00> : vector<512x32xf32>
    %2 = tpu.matmul %0, %1, %cst {dimension_numbers = #tpu.dot_dimension_numbers<[1], [0], [0], [1], [0, 0, 1, 1], [], []>} : vector<512x144xbf16>, vector<144x32xbf16>, vector<512x32xf32> -> vector<512x32xf32>
    %c0_3 = arith.constant 0 : index
    %c0_4 = arith.constant 0 : index
    %3 = vector.load %arg3[%c0_3, %c0_4] : memref<512x32xf32, #tpu.memory_space<vmem>>, vector<512x32xf32>
    tpu.vector_store %arg3[%c0_3, %c0_4], %2 {strides = array<i32>} : memref<512x32xf32, #tpu.memory_space<vmem>>, vector<512x32xf32>,
    %cst_5 = arith.constant dense<0.000000e+00> : vector<32xf32>
    %4 = vector.multi_reduction <add>, %2, %cst_5 [0] : vector<512x32xf32> to vector<32xf32>
    %5 = vector.shape_cast %4 : vector<32xf32> to vector<1x32xf32>
    %c0_6 = arith.constant 0 : index
    %c0_7 = arith.constant 0 : index
    %6 = vector.load %arg4[%c0_6, %c0_7] : memref<8x32xf32, #tpu.memory_space<vmem>>, vector<1x32xf32>
    tpu.vector_store %arg4[%c0_6, %c0_7], %5 {strides = array<i32>} : memref<8x32xf32, #tpu.memory_space<vmem>>, vector<1x32xf32>,
    %7 = arith.mulf %2, %2 : vector<512x32xf32>
    %cst_8 = arith.constant dense<0.000000e+00> : vector<32xf32>
    %8 = vector.multi_reduction <add>, %7, %cst_8 [0] : vector<512x32xf32> to vector<32xf32>
    %9 = vector.shape_cast %8 : vector<32xf32> to vector<1x32xf32>
    %c1 = arith.constant 1 : index
    %c0_9 = arith.constant 0 : index
    %10 = vector.load %arg4[%c1, %c0_9] : memref<8x32xf32, #tpu.memory_space<vmem>>, vector<1x32xf32>
    tpu.vector_store %arg4[%c1, %c0_9], %9 {strides = array<i32>} : memref<8x32xf32, #tpu.memory_space<vmem>>, vector<1x32xf32>,
    return
  }
  func.func @transform_0(%arg0: i32) -> (i32, i32) {
    %c0_i32 = arith.constant 0 : i32
    %c0_i32_0 = arith.constant 0 : i32
    return %arg0, %c0_i32 : i32, i32
  }
  func.func @transform_1(%arg0: i32) -> (i32, i32) {
    %c0_i32 = arith.constant 0 : i32
    %c0_i32_0 = arith.constant 0 : i32
    %c0_i32_1 = arith.constant 0 : i32
    return %c0_i32, %c0_i32_0 : i32, i32
  }
  func.func @transform_2(%arg0: i32) -> (i32, i32) {
    %c0_i32 = arith.constant 0 : i32
    %c0_i32_0 = arith.constant 0 : i32
    return %arg0, %c0_i32 : i32, i32
  }
  func.func @transform_3(%arg0: i32) -> (i32, i32) {
    %c0_i32 = arith.constant 0 : i32
    %c0_i32_0 = arith.constant 0 : i32
    return %arg0, %c0_i32 : i32, i32
  }
}

module attributes {stable_mosaic.version = 11 : i64} {
  func.func @_scale_shift_relu_kernel(%arg0: i32, %arg1: memref<512x32xf32, #tpu.memory_space<vmem>>, %arg2: memref<1x32xf32, #tpu.memory_space<vmem>>, %arg3: memref<1x32xf32, #tpu.memory_space<vmem>>, %arg4: memref<512x32xf32, #tpu.memory_space<vmem>>) attributes {dimension_semantics = [#tpu.dimension_semantics<parallel>], iteration_bounds = array<i64: 1>, scalar_prefetch = 0 : i64, scratch_operands = 0 : i64, tpu.core_type = #tpu.core_type<tc>, window_params = [{transform_indices = @transform_0, window_bounds = array<i64: 512, 32>}, {pipeline_mode = #tpu.pipeline_mode<synchronous>, transform_indices = @transform_1, window_bounds = array<i64: 1, 32>}, {pipeline_mode = #tpu.pipeline_mode<synchronous>, transform_indices = @transform_2, window_bounds = array<i64: 1, 32>}, {transform_indices = @transform_3, window_bounds = array<i64: 512, 32>}]} {
    %c0 = arith.constant 0 : index
    %c0_0 = arith.constant 0 : index
    %0 = vector.load %arg1[%c0, %c0_0] : memref<512x32xf32, #tpu.memory_space<vmem>>, vector<512x32xf32>
    %c0_1 = arith.constant 0 : index
    %c0_2 = arith.constant 0 : index
    %1 = vector.load %arg2[%c0_1, %c0_2] : memref<1x32xf32, #tpu.memory_space<vmem>>, vector<1x32xf32>
    %2 = vector.broadcast %1 : vector<1x32xf32> to vector<512x32xf32>
    %3 = arith.mulf %0, %2 : vector<512x32xf32>
    %c0_3 = arith.constant 0 : index
    %c0_4 = arith.constant 0 : index
    %4 = vector.load %arg3[%c0_3, %c0_4] : memref<1x32xf32, #tpu.memory_space<vmem>>, vector<1x32xf32>
    %5 = vector.broadcast %4 : vector<1x32xf32> to vector<512x32xf32>
    %6 = arith.addf %3, %5 : vector<512x32xf32>
    %cst = arith.constant 0.000000e+00 : f32
    %7 = vector.broadcast %cst : f32 to vector<512x32xf32>
    %8 = arith.maximumf %6, %7 : vector<512x32xf32>
    %c0_5 = arith.constant 0 : index
    %c0_6 = arith.constant 0 : index
    %9 = vector.load %arg4[%c0_5, %c0_6] : memref<512x32xf32, #tpu.memory_space<vmem>>, vector<512x32xf32>
    tpu.vector_store %arg4[%c0_5, %c0_6], %8 {strides = array<i32>} : memref<512x32xf32, #tpu.memory_space<vmem>>, vector<512x32xf32>,
    return
  }
  func.func @transform_0(%arg0: i32) -> (i32, i32) {
    %c0_i32 = arith.constant 0 : i32
    %c0_i32_0 = arith.constant 0 : i32
    return %arg0, %c0_i32 : i32, i32
  }
  func.func @transform_1(%arg0: i32) -> (i32, i32) {
    %c0_i32 = arith.constant 0 : i32
    %c0_i32_0 = arith.constant 0 : i32
    %c0_i32_1 = arith.constant 0 : i32
    return %c0_i32, %c0_i32_0 : i32, i32
  }
  func.func @transform_2(%arg0: i32) -> (i32, i32) {
    %c0_i32 = arith.constant 0 : i32
    %c0_i32_0 = arith.constant 0 : i32
    %c0_i32_1 = arith.constant 0 : i32
    return %c0_i32, %c0_i32_0 : i32, i32
  }
  func.func @transform_3(%arg0: i32) -> (i32, i32) {
    %c0_i32 = arith.constant 0 : i32
    %c0_i32_0 = arith.constant 0 : i32
    return %arg0, %c0_i32 : i32, i32
  }
}

module attributes {stable_mosaic.version = 11 : i64} {
  func.func @_gemm_tanh_t_kernel(%arg0: i32, %arg1: memref<12x72xbf16, #tpu.memory_space<vmem>>, %arg2: memref<72x512xbf16, #tpu.memory_space<vmem>>, %arg3: memref<12x512xf32, #tpu.memory_space<vmem>>) attributes {dimension_semantics = [#tpu.dimension_semantics<parallel>], iteration_bounds = array<i64: 4>, scalar_prefetch = 0 : i64, scratch_operands = 0 : i64, tpu.core_type = #tpu.core_type<tc>, window_params = [{pipeline_mode = #tpu.pipeline_mode<synchronous>, transform_indices = @transform_0, window_bounds = array<i64: 12, 72>}, {transform_indices = @transform_1, window_bounds = array<i64: 72, 512>}, {transform_indices = @transform_2, window_bounds = array<i64: 12, 512>}]} {
    %c0 = arith.constant 0 : index
    %c0_0 = arith.constant 0 : index
    %0 = vector.load %arg1[%c0, %c0_0] : memref<12x72xbf16, #tpu.memory_space<vmem>>, vector<12x72xbf16>
    %c0_1 = arith.constant 0 : index
    %c0_2 = arith.constant 0 : index
    %1 = vector.load %arg2[%c0_1, %c0_2] : memref<72x512xbf16, #tpu.memory_space<vmem>>, vector<72x512xbf16>
    %cst = arith.constant dense<0.000000e+00> : vector<12x512xf32>
    %2 = tpu.matmul %0, %1, %cst {dimension_numbers = #tpu.dot_dimension_numbers<[1], [0], [0], [1], [0, 0, 1, 1], [], []>} : vector<12x72xbf16>, vector<72x512xbf16>, vector<12x512xf32> -> vector<12x512xf32>
    %3 = math.tanh %2 : vector<12x512xf32>
    %c0_3 = arith.constant 0 : index
    %c0_4 = arith.constant 0 : index
    %4 = vector.load %arg3[%c0_3, %c0_4] : memref<12x512xf32, #tpu.memory_space<vmem>>, vector<12x512xf32>
    tpu.vector_store %arg3[%c0_3, %c0_4], %3 {strides = array<i32>} : memref<12x512xf32, #tpu.memory_space<vmem>>, vector<12x512xf32>,
    return
  }
  func.func @transform_0(%arg0: i32) -> (i32, i32) {
    %c0_i32 = arith.constant 0 : i32
    %c0_i32_0 = arith.constant 0 : i32
    %c0_i32_1 = arith.constant 0 : i32
    return %c0_i32, %c0_i32_0 : i32, i32
  }
  func.func @transform_1(%arg0: i32) -> (i32, i32) {
    %c0_i32 = arith.constant 0 : i32
    %c0_i32_0 = arith.constant 0 : i32
    return %c0_i32, %arg0 : i32, i32
  }
  func.func @transform_2(%arg0: i32) -> (i32, i32) {
    %c0_i32 = arith.constant 0 : i32
    %c0_i32_0 = arith.constant 0 : i32
    return %c0_i32, %arg0 : i32, i32
  }
}

</mosaic_0001>

<llo_original>
// kernel: tile.48
$region0: #{tile.48}
  #allocation0 [shape = 's32[1]{0}', space=sflag, size = 0x4, scoped, tag = 'scoped memory for tile.48']
  %s0 = inlined_call_operand.vmem [shape: f32[64], index: 0, kind: input, shape index: {}]
  %s1 = inlined_call_operand.vmem [shape: f32[16,64], index: 1, kind: output, shape index: {}]
  // Predicated region
  $region2: #{tile.48} parent=0 // pred_check
    _
  $region3: #{tile.48} parent=0 // pred_check_branch
    %3 = sbr.rel (0) target = $region5
  $region4: #{tile.48} parent=0 // pred_region
    _
  $region5: #{tile.48} parent=0 // pred_fallthru
    _
  %v4 = vld [vmem:[%s0] ss:$0 sm:$0xff]
  %5 = vst [vmem:[%s1] sm:$0xff] %v4
  %s6 = scalar_lea.vmem %s1, 8
  %7 = vst [vmem:[%s6] sm:$0xff] %v4

// kernel: tile.49
$region0: #{tile.49}
  %s0 = inlined_call_operand.vmem [shape: f32[16,64], index: 0, kind: input, shape index: {}]
  %s1 = inlined_call_operand.vmem [shape: f32[1,1024], index: 1, kind: output, shape index: {}]
  $region1: #{tile.49} parent=0
    #allocation0 [shape = 'u8[32768]{0}', space=vmem, size = 0x8000, scoped, tag = 'scoped mem for output reshape']
    %v2 = vld [vmem:[%s0] ss:$2 sm:$0xff]
    %vm3 = vcmask 523264
    %4 = vst.msk [vmem:[#allocation0] ss:$8 sm:$0xf] %vm3, %v2
    %5 = vst.msk [vmem:[#allocation0] ss:$8 sm:$0xf0] %vm3, %v2
    %s6 = scalar_lea.vmem %s0, 1
    %v7 = vld [vmem:[%s6] ss:$2 sm:$0xff]
    %8 = vrot.lane.b32.xlu0 %v7, 64
    %v9 = vpop.permute.xlu0 %8
    %vm10 = vcmask 1048064
    %11 = vst.msk [vmem:[#allocation0] ss:$8 sm:$0xf] %vm10, %v9
    %12 = vst.msk [vmem:[#allocation0] ss:$8 sm:$0xf0] %vm10, %v9
    %s14 = ssub.s32 2, 1
    %v15 = vld [vmem:[#allocation0] sm:%s14]
    %s17 = ssub.s32 2, 1
    %18 = vst [vmem:[%s1] sm:%s17] %v15
    %s19 = scalar_lea.vmem [#allocation0], 8
    %v20 = vld [vmem:[%s19] sm:%s14]
    %s22 = ssub.s32 2, 1
    %s23 = scalar_lea.vmem %s1, 1
    %24 = vst [vmem:[%s23] sm:%s22] %v20
    %s25 = scalar_lea.vmem [#allocation0], 16
    %v26 = vld [vmem:[%s25] sm:%s14]
    %s28 = ssub.s32 2, 1
    %s29 = scalar_lea.vmem %s1, 2
    %30 = vst [vmem:[%s29] sm:%s28] %v26
    %s31 = scalar_lea.vmem [#allocation0], 24
    %v32 = vld [vmem:[%s31] sm:%s14]
    %s34 = ssub.s32 2, 1
    %s35 = scalar_lea.vmem %s1, 3
    %36 = vst [vmem:[%s35] sm:%s34] %v32
    %s37 = scalar_lea.vmem [#allocation0], 32
    %v38 = vld [vmem:[%s37] sm:%s14]
    %s40 = ssub.s32 2, 1
    %s41 = scalar_lea.vmem %s1, 4
    %42 = vst [vmem:[%s41] sm:%s40] %v38
    %s43 = scalar_lea.vmem [#allocation0], 40
    %v44 = vld [vmem:[%s43] sm:%s14]
    %s46 = ssub.s32 2, 1
    %s47 = scalar_lea.vmem %s1, 5
    %48 = vst [vmem:[%s47] sm:%s46] %v44
    %s49 = scalar_lea.vmem [#allocation0], 48
    %v50 = vld [vmem:[%s49] sm:%s14]
    %s52 = ssub.s32 2, 1
    %s53 = scalar_lea.vmem %s1, 6
    %54 = vst [vmem:[%s53] sm:%s52] %v50
    %s55 = scalar_lea.vmem [#allocation0], 56
    %v56 = vld [vmem:[%s55] sm:%s14]
    %s58 = ssub.s32 2, 1
    %s59 = scalar_lea.vmem %s1, 7
    %60 = vst [vmem:[%s59] sm:%s58] %v56

// kernel: generator_forward.9
$region0: #{generator_forward.9}
  #allocation0 [shape = 'u32[]', space=smem, size = 0x4, offset = 0x4, fixed_abs, tag = 'smem constant byte address 0x4 - core index']
  #allocation1 [shape = 'u32[72,128]{1,0:T(1,128)}', space=vmem, size = 0x9000, scoped, tag = 'internal scratch']
  %s0 = inlined_call_operand.vmem [shape: bf16[8,16], index: 0, kind: input, shape index: {}]
  %s1 = inlined_call_operand.vmem [shape: bf16[16,1024], index: 1, kind: input, shape index: {}]
  %s2 = inlined_call_operand.vmem [shape: f32[8,1024], index: 2, kind: output, shape index: {0}]
  %s3 = inlined_call_operand.vmem [shape: f32[8,1024], index: 3, kind: output, shape index: {1}]
  %4 = xla_tuple %s2, %s3
  %s5 = sld [smem:[#allocation0]]
  $region26: #{generator_forward.9} parent=0
    _
  %s7 = ssub.s32 1, %s5
  %s8 = scalar_select 0, %s7, %s5
  // Predicated region
  $region2: #{generator_forward.9} parent=0 // pred_check
    _
  $region3: #{generator_forward.9} parent=0 // pred_check_branch
    %10 = sbr.rel (0) target = $region5
  $region4: #{generator_forward.9} parent=0 // pred_region
    _
  $region5: #{generator_forward.9} parent=0 // pred_fallthru
    _
  // Predicated region
  $region6: #{generator_forward.9} parent=0 // pred_check
    _
  $region7: #{generator_forward.9} parent=0 // pred_check_branch
    %12 = sbr.rel (0) target = $region9
  $region8: #{generator_forward.9} parent=0 // pred_region
    _
  $region9: #{generator_forward.9} parent=0 // pred_fallthru
    _
  %v14 = vld [vmem:[%s0] sm:$0xf]
  %v15 = vld [vmem:[%s1] sm:$0xff]
  %v16 = vld [vmem:[%s1 + $0x8] sm:$0xff]
  %v17 = vld [vmem:[%s1 + $0x10] sm:$0xff]
  %v18 = vld [vmem:[%s1 + $0x18] sm:$0xff]
  %v19 = vld [vmem:[%s1 + $0x20] sm:$0xff]
  %v20 = vld [vmem:[%s1 + $0x28] sm:$0xff]
  %v21 = vld [vmem:[%s1 + $0x30] sm:$0xff]
  %v22 = vld [vmem:[%s1 + $0x38] sm:$0xff]
  %v31 = vunpack.c.l.b16 %v15
  %v32 = vunpack.c.h.b16 %v15
  %v33 = vunpack.c.l.b16 %v16
  %v34 = vunpack.c.h.b16 %v16
  %v35 = vunpack.c.l.b16 %v17
  %v36 = vunpack.c.h.b16 %v17
  %v37 = vunpack.c.l.b16 %v18
  %v38 = vunpack.c.h.b16 %v18
  %v39 = vunpack.c.l.b16 %v19
  %v40 = vunpack.c.h.b16 %v19
  %v41 = vunpack.c.l.b16 %v20
  %v42 = vunpack.c.h.b16 %v20
  %v43 = vunpack.c.l.b16 %v21
  %v44 = vunpack.c.h.b16 %v21
  %v45 = vunpack.c.l.b16 %v22
  %v46 = vunpack.c.h.b16 %v22
  %v47 = vpack.c.b16 %v39, %v31
  %v48 = vpack.c.b16 %v40, %v32
  %v49 = vpack.c.b16 %v41, %v33
  %v50 = vpack.c.b16 %v42, %v34
  %v51 = vpack.c.b16 %v43, %v35
  %v52 = vpack.c.b16 %v44, %v36
  %v53 = vpack.c.b16 %v45, %v37
  %v54 = vpack.c.b16 %v46, %v38
  %vm63 = vcmask 130048
  %v65 = vsel %vm63, %v14, 0
  %67 = vmatpush.bf16.msra.mxu0 0
  %68 = vmatpush.bf16.msra.mxu0 0
  %69 = vmatpush.bf16.msra.mxu0 0
  %70 = vmatpush.bf16.msra.mxu0 0
  %71 = vmatpush.bf16.msra.mxu0 0
  %72 = vmatpush.bf16.msra.mxu0 0
  %73 = vmatpush.bf16.msra.mxu0 0
  %74 = vmatpush.bf16.msra.mxu0 %v47
  %75 = vmatmul.bf16.gmra.mxu0 %v65
  %v76 = vpop.f32.mrf.mxu0
  %v77 = vadd.f32 0.0, %v76
  %v78 = vpop.f32.mrf.mxu0
  %79 = vdwg.mxu0
  %80 = vmatpush.bf16.msra.mxu0 0
  %81 = vmatpush.bf16.msra.mxu0 0
  %82 = vmatpush.bf16.msra.mxu0 0
  %83 = vmatpush.bf16.msra.mxu0 0
  %84 = vmatpush.bf16.msra.mxu0 0
  %85 = vmatpush.bf16.msra.mxu0 0
  %86 = vmatpush.bf16.msra.mxu0 0
  %87 = vmatpush.bf16.msra.mxu0 %v48
  %88 = vmatmul.bf16.gmra.mxu0 %v65
  %v89 = vpop.f32.mrf.mxu0
  %v90 = vadd.f32 0.0, %v89
  %v91 = vpop.f32.mrf.mxu0
  %92 = vdwg.mxu0
  %93 = vmatpush.bf16.msra.mxu0 0
  %94 = vmatpush.bf16.msra.mxu0 0
  %95 = vmatpush.bf16.msra.mxu0 0
  %96 = vmatpush.bf16.msra.mxu0 0
  %97 = vmatpush.bf16.msra.mxu0 0
  %98 = vmatpush.bf16.msra.mxu0 0
  %99 = vmatpush.bf16.msra.mxu0 0
  %100 = vmatpush.bf16.msra.mxu0 %v49
  %101 = vmatmul.bf16.gmra.mxu0 %v65
  %v102 = vpop.f32.mrf.mxu0
  %v103 = vadd.f32 0.0, %v102
  %v104 = vpop.f32.mrf.mxu0
  %105 = vdwg.mxu0
  %106 = vmatpush.bf16.msra.mxu0 0
  %107 = vmatpush.bf16.msra.mxu0 0
  %108 = vmatpush.bf16.msra.mxu0 0
  %109 = vmatpush.bf16.msra.mxu0 0
  %110 = vmatpush.bf16.msra.mxu0 0
  %111 = vmatpush.bf16.msra.mxu0 0
  %112 = vmatpush.bf16.msra.mxu0 0
  %113 = vmatpush.bf16.msra.mxu0 %v50
  %114 = vmatmul.bf16.gmra.mxu0 %v65
  %v115 = vpop.f32.mrf.mxu0
  %v116 = vadd.f32 0.0, %v115
  %v117 = vpop.f32.mrf.mxu0
  %118 = vdwg.mxu0
  %119 = vmatpush.bf16.msra.mxu0 0
  %120 = vmatpush.bf16.msra.mxu0 0
  %121 = vmatpush.bf16.msra.mxu0 0
  %122 = vmatpush.bf16.msra.mxu0 0
  %123 = vmatpush.bf16.msra.mxu0 0
  %124 = vmatpush.bf16.msra.mxu0 0
  %125 = vmatpush.bf16.msra.mxu0 0
  %126 = vmatpush.bf16.msra.mxu0 %v51
  %127 = vmatmul.bf16.gmra.mxu0 %v65
  %v128 = vpop.f32.mrf.mxu0
  %v129 = vadd.f32 0.0, %v128
  %v130 = vpop.f32.mrf.mxu0
  %131 = vdwg.mxu0
  %132 = vmatpush.bf16.msra.mxu0 0
  %133 = vmatpush.bf16.msra.mxu0 0
  %134 = vmatpush.bf16.msra.mxu0 0
  %135 = vmatpush.bf16.msra.mxu0 0
  %136 = vmatpush.bf16.msra.mxu0 0
  %137 = vmatpush.bf16.msra.mxu0 0
  %138 = vmatpush.bf16.msra.mxu0 0
  %139 = vmatpush.bf16.msra.mxu0 %v52
  %140 = vmatmul.bf16.gmra.mxu0 %v65
  %v141 = vpop.f32.mrf.mxu0
  %v142 = vadd.f32 0.0, %v141
  %v143 = vpop.f32.mrf.mxu0
  %144 = vdwg.mxu0
  %145 = vmatpush.bf16.msra.mxu0 0
  %146 = vmatpush.bf16.msra.mxu0 0
  %147 = vmatpush.bf16.msra.mxu0 0
  %148 = vmatpush.bf16.msra.mxu0 0
  %149 = vmatpush.bf16.msra.mxu0 0
  %150 = vmatpush.bf16.msra.mxu0 0
  %151 = vmatpush.bf16.msra.mxu0 0
  %152 = vmatpush.bf16.msra.mxu0 %v53
  %153 = vmatmul.bf16.gmra.mxu0 %v65
  %v154 = vpop.f32.mrf.mxu0
  %v155 = vadd.f32 0.0, %v154
  %v156 = vpop.f32.mrf.mxu0
  %157 = vdwg.mxu0
  %158 = vmatpush.bf16.msra.mxu0 0
  %159 = vmatpush.bf16.msra.mxu0 0
  %160 = vmatpush.bf16.msra.mxu0 0
  %161 = vmatpush.bf16.msra.mxu0 0
  %162 = vmatpush.bf16.msra.mxu0 0
  %163 = vmatpush.bf16.msra.mxu0 0
  %164 = vmatpush.bf16.msra.mxu0 0
  %165 = vmatpush.bf16.msra.mxu0 %v54
  %166 = vmatmul.bf16.gmra.mxu0 %v65
  %v167 = vpop.f32.mrf.mxu0
  %v168 = vadd.f32 0.0, %v167
  %v169 = vpop.f32.mrf.mxu0
  %170 = vdwg.mxu0
  %171 = vst [vmem:[%s2] sm:$0xff] %v77
  %172 = vst [vmem:[%s2 + $0x8] sm:$0xff] %v90
  %173 = vst [vmem:[%s2 + $0x10] sm:$0xff] %v103
  %174 = vst [vmem:[%s2 + $0x18] sm:$0xff] %v116
  %175 = vst [vmem:[%s2 + $0x20] sm:$0xff] %v129
  %176 = vst [vmem:[%s2 + $0x28] sm:$0xff] %v142
  %177 = vst [vmem:[%s2 + $0x30] sm:$0xff] %v155
  %178 = vst [vmem:[%s2 + $0x38] sm:$0xff] %v168
  %v179 = vrot.slane %v77, 4
  %v180 = vadd.f32 %v77, %v179
  %v181 = vrot.slane %v180, 2
  %v182 = vadd.f32 %v180, %v181
  %v183 = vrot.slane %v182, 1
  %v184 = vadd.f32 %v182, %v183
  %v185 = vrot.slane %v90, 4
  %v186 = vadd.f32 %v90, %v185
  %v187 = vrot.slane %v186, 2
  %v188 = vadd.f32 %v186, %v187
  %v189 = vrot.slane %v188, 1
  %v190 = vadd.f32 %v188, %v189
  %v191 = vrot.slane %v103, 4
  %v192 = vadd.f32 %v103, %v191
  %v193 = vrot.slane %v192, 2
  %v194 = vadd.f32 %v192, %v193
  %v195 = vrot.slane %v194, 1
  %v196 = vadd.f32 %v194, %v195
  %v197 = vrot.slane %v116, 4
  %v198 = vadd.f32 %v116, %v197
  %v199 = vrot.slane %v198, 2
  %v200 = vadd.f32 %v198, %v199
  %v201 = vrot.slane %v200, 1
  %v202 = vadd.f32 %v200, %v201
  %v203 = vrot.slane %v129, 4
  %v204 = vadd.f32 %v129, %v203
  %v205 = vrot.slane %v204, 2
  %v206 = vadd.f32 %v204, %v205
  %v207 = vrot.slane %v206, 1
  %v208 = vadd.f32 %v206, %v207
  %v209 = vrot.slane %v142, 4
  %v210 = vadd.f32 %v142, %v209
  %v211 = vrot.slane %v210, 2
  %v212 = vadd.f32 %v210, %v211
  %v213 = vrot.slane %v212, 1
  %v214 = vadd.f32 %v212, %v213
  %v215 = vrot.slane %v155, 4
  %v216 = vadd.f32 %v155, %v215
  %v217 = vrot.slane %v216, 2
  %v218 = vadd.f32 %v216, %v217
  %v219 = vrot.slane %v218, 1
  %v220 = vadd.f32 %v218, %v219
  %v221 = vrot.slane %v168, 4
  %v222 = vadd.f32 %v168, %v221
  %v223 = vrot.slane %v222, 2
  %v224 = vadd.f32 %v222, %v223
  %v225 = vrot.slane %v224, 1
  %v226 = vadd.f32 %v224, %v225
  %v235 = vrot.slane %v190, 7
  %v236 = vrot.slane %v196, 6
  %v237 = vrot.slane %v202, 5
  %v238 = vrot.slane %v208, 4
  %v239 = vrot.slane %v214, 3
  %v240 = vrot.slane %v220, 2
  %v241 = vrot.slane %v226, 1
  %vm242 = vcmask 1040384
  %v243 = vsel %vm242, %v184, %v235
  %vm244 = vcmask 1042434
  %v245 = vsel %vm244, %v236, %v237
  %vm246 = vcmask 1041408
  %v247 = vsel %vm246, %v243, %v245
  %vm248 = vcmask 1044484
  %v249 = vsel %vm248, %v238, %v239
  %vm250 = vcmask 1046534
  %v251 = vsel %vm250, %v240, %v241
  %vm252 = vcmask 1045508
  %v253 = vsel %vm252, %v249, %v251
  %vm254 = vcmask 1043456
  %v255 = vsel %vm254, %v247, %v253
  %257 = vst [vmem:[%s3] ss:$8 sm:$0xf] %v255
  %258 = vst [vmem:[%s3] ss:$8 sm:$0xf0] %v255
  %v259 = vmul.f32 %v77, %v77
  %v260 = vmul.f32 %v90, %v90
  %v261 = vmul.f32 %v103, %v103
  %v262 = vmul.f32 %v116, %v116
  %v263 = vmul.f32 %v129, %v129
  %v264 = vmul.f32 %v142, %v142
  %v265 = vmul.f32 %v155, %v155
  %v266 = vmul.f32 %v168, %v168
  %v267 = vrot.slane %v259, 4
  %v268 = vadd.f32 %v259, %v267
  %v269 = vrot.slane %v268, 2
  %v270 = vadd.f32 %v268, %v269
  %v271 = vrot.slane %v270, 1
  %v272 = vadd.f32 %v270, %v271
  %v273 = vrot.slane %v260, 4
  %v274 = vadd.f32 %v260, %v273
  %v275 = vrot.slane %v274, 2
  %v276 = vadd.f32 %v274, %v275
  %v277 = vrot.slane %v276, 1
  %v278 = vadd.f32 %v276, %v277
  %v279 = vrot.slane %v261, 4
  %v280 = vadd.f32 %v261, %v279
  %v281 = vrot.slane %v280, 2
  %v282 = vadd.f32 %v280, %v281
  %v283 = vrot.slane %v282, 1
  %v284 = vadd.f32 %v282, %v283
  %v285 = vrot.slane %v262, 4
  %v286 = vadd.f32 %v262, %v285
  %v287 = vrot.slane %v286, 2
  %v288 = vadd.f32 %v286, %v287
  %v289 = vrot.slane %v288, 1
  %v290 = vadd.f32 %v288, %v289
  %v291 = vrot.slane %v263, 4
  %v292 = vadd.f32 %v263, %v291
  %v293 = vrot.slane %v292, 2
  %v294 = vadd.f32 %v292, %v293
  %v295 = vrot.slane %v294, 1
  %v296 = vadd.f32 %v294, %v295
  %v297 = vrot.slane %v264, 4
  %v298 = vadd.f32 %v264, %v297
  %v299 = vrot.slane %v298, 2
  %v300 = vadd.f32 %v298, %v299
  %v301 = vrot.slane %v300, 1
  %v302 = vadd.f32 %v300, %v301
  %v303 = vrot.slane %v265, 4
  %v304 = vadd.f32 %v265, %v303
  %v305 = vrot.slane %v304, 2
  %v306 = vadd.f32 %v304, %v305
  %v307 = vrot.slane %v306, 1
  %v308 = vadd.f32 %v306, %v307
  %v309 = vrot.slane %v266, 4
  %v310 = vadd.f32 %v266, %v309
  %v311 = vrot.slane %v310, 2
  %v312 = vadd.f32 %v310, %v311
  %v313 = vrot.slane %v312, 1
  %v314 = vadd.f32 %v312, %v313
  %v323 = vrot.slane %v278, 7
  %v324 = vrot.slane %v284, 6
  %v325 = vrot.slane %v290, 5
  %v326 = vrot.slane %v296, 4
  %v327 = vrot.slane %v302, 3
  %v328 = vrot.slane %v308, 2
  %v329 = vrot.slane %v314, 1
  %v330 = vsel %vm242, %v272, %v323
  %v331 = vsel %vm244, %v324, %v325
  %v332 = vsel %vm246, %v330, %v331
  %v333 = vsel %vm248, %v326, %v327
  %v334 = vsel %vm250, %v328, %v329
  %v335 = vsel %vm252, %v333, %v334
  %v336 = vsel %vm254, %v332, %v335
  %s338 = scalar_lea.vmem %s3, 1
  %339 = vst [vmem:[%s338] ss:$8 sm:$0xf] %v336
  %340 = vst [vmem:[%s338] ss:$8 sm:$0xf0] %v336
  // Predicated region
  $region10: #{generator_forward.9} parent=0 // pred_check
    _
  $region11: #{generator_forward.9} parent=0 // pred_check_branch
    %342 = sbr.rel (0) target = $region13
  $region12: #{generator_forward.9} parent=0 // pred_region
    _
  $region13: #{generator_forward.9} parent=0 // pred_fallthru
    _
  // Predicated region
  $region14: #{generator_forward.9} parent=0 // pred_check
    _
  $region15: #{generator_forward.9} parent=0 // pred_check_branch
    %344 = sbr.rel (0) target = $region17
  $region16: #{generator_forward.9} parent=0 // pred_region
    _
  $region17: #{generator_forward.9} parent=0 // pred_fallthru
    _
  // Predicated region
  $region18: #{generator_forward.9} parent=0 // pred_check
    _
  $region19: #{generator_forward.9} parent=0 // pred_check_branch
    %346 = sbr.rel (0) target = $region21
  $region20: #{generator_forward.9} parent=0 // pred_region
    _
  $region21: #{generator_forward.9} parent=0 // pred_fallthru
    _
  // Predicated region
  $region22: #{generator_forward.9} parent=0 // pred_check
    _
  $region23: #{generator_forward.9} parent=0 // pred_check_branch
    %348 = sbr.rel (0) target = $region25
  $region24: #{generator_forward.9} parent=0 // pred_region
    _
  $region25: #{generator_forward.9} parent=0 // pred_fallthru
    _

// kernel: generator_forward.10
$region0: #{generator_forward.10}
  #allocation0 [shape = 'u32[]', space=smem, size = 0x4, offset = 0x4, fixed_abs, tag = 'smem constant byte address 0x4 - core index']
  #allocation1 [shape = 'u32[72,128]{1,0:T(1,128)}', space=vmem, size = 0x9000, scoped, tag = 'internal scratch']
  %s0 = inlined_call_operand.vmem [shape: f32[8,1024], index: 0, kind: input, shape index: {}]
  %s1 = inlined_call_operand.vmem [shape: f32[1,1024], index: 1, kind: input, shape index: {}]
  %s2 = inlined_call_operand.vmem [shape: f32[1,1024], index: 2, kind: input, shape index: {}]
  %s3 = inlined_call_operand.vmem [shape: f32[8,1024], index: 3, kind: output, shape index: {}]
  %s4 = sld [smem:[#allocation0]]
  $region22: #{generator_forward.10} parent=0
    _
  %s6 = ssub.s32 1, %s4
  %s7 = scalar_select 0, %s6, %s4
  // Predicated region
  $region2: #{generator_forward.10} parent=0 // pred_check
    _
  $region3: #{generator_forward.10} parent=0 // pred_check_branch
    %9 = sbr.rel (0) target = $region5
  $region4: #{generator_forward.10} parent=0 // pred_region
    _
  $region5: #{generator_forward.10} parent=0 // pred_fallthru
    _
  // Predicated region
  $region6: #{generator_forward.10} parent=0 // pred_check
    _
  $region7: #{generator_forward.10} parent=0 // pred_check_branch
    %11 = sbr.rel (0) target = $region9
  $region8: #{generator_forward.10} parent=0 // pred_region
    _
  $region9: #{generator_forward.10} parent=0 // pred_fallthru
    _
  // Predicated region
  $region10: #{generator_forward.10} parent=0 // pred_check
    _
  $region11: #{generator_forward.10} parent=0 // pred_check_branch
    %13 = sbr.rel (0) target = $region13
  $region12: #{generator_forward.10} parent=0 // pred_region
    _
  $region13: #{generator_forward.10} parent=0 // pred_fallthru
    _
  %v14 = vld [vmem:[%s0] sm:$0xff]
  %v15 = vld [vmem:[%s0 + $0x8] sm:$0xff]
  %v16 = vld [vmem:[%s0 + $0x10] sm:$0xff]
  %v17 = vld [vmem:[%s0 + $0x18] sm:$0xff]
  %v18 = vld [vmem:[%s0 + $0x20] sm:$0xff]
  %v19 = vld [vmem:[%s0 + $0x28] sm:$0xff]
  %v20 = vld [vmem:[%s0 + $0x30] sm:$0xff]
  %v21 = vld [vmem:[%s0 + $0x38] sm:$0xff]
  %v22 = vld [vmem:[%s1] sm:$0xff]
  %v24 = vperm.slane %v22, 0
  %v25 = vperm.slane %v22, 1
  %v26 = vperm.slane %v22, 2
  %v27 = vperm.slane %v22, 3
  %v28 = vperm.slane %v22, 4
  %v29 = vperm.slane %v22, 5
  %v30 = vperm.slane %v22, 6
  %v31 = vperm.slane %v22, 7
  %v40 = vmul.f32 %v14, %v24
  %v41 = vmul.f32 %v15, %v25
  %v42 = vmul.f32 %v16, %v26
  %v43 = vmul.f32 %v17, %v27
  %v44 = vmul.f32 %v18, %v28
  %v45 = vmul.f32 %v19, %v29
  %v46 = vmul.f32 %v20, %v30
  %v47 = vmul.f32 %v21, %v31
  %v48 = vld [vmem:[%s2] sm:$0xff]
  %v50 = vperm.slane %v48, 0
  %v51 = vperm.slane %v48, 1
  %v52 = vperm.slane %v48, 2
  %v53 = vperm.slane %v48, 3
  %v54 = vperm.slane %v48, 4
  %v55 = vperm.slane %v48, 5
  %v56 = vperm.slane %v48, 6
  %v57 = vperm.slane %v48, 7
  %v66 = vadd.f32 %v40, %v50
  %v67 = vadd.f32 %v41, %v51
  %v68 = vadd.f32 %v42, %v52
  %v69 = vadd.f32 %v43, %v53
  %v70 = vadd.f32 %v44, %v54
  %v71 = vadd.f32 %v45, %v55
  %v72 = vadd.f32 %v46, %v56
  %v73 = vadd.f32 %v47, %v57
  %v74 = vmax.f32 %v66, 0.0
  %v75 = vmax.f32 %v67, 0.0
  %v76 = vmax.f32 %v68, 0.0
  %v77 = vmax.f32 %v69, 0.0
  %v78 = vmax.f32 %v70, 0.0
  %v79 = vmax.f32 %v71, 0.0
  %v80 = vmax.f32 %v72, 0.0
  %v81 = vmax.f32 %v73, 0.0
  %82 = vst [vmem:[%s3] sm:$0xff] %v74
  %83 = vst [vmem:[%s3 + $0x8] sm:$0xff] %v75
  %84 = vst [vmem:[%s3 + $0x10] sm:$0xff] %v76
  %85 = vst [vmem:[%s3 + $0x18] sm:$0xff] %v77
  %86 = vst [vmem:[%s3 + $0x20] sm:$0xff] %v78
  %87 = vst [vmem:[%s3 + $0x28] sm:$0xff] %v79
  %88 = vst [vmem:[%s3 + $0x30] sm:$0xff] %v80
  %89 = vst [vmem:[%s3 + $0x38] sm:$0xff] %v81
  // Predicated region
  $region14: #{generator_forward.10} parent=0 // pred_check
    _
  $region15: #{generator_forward.10} parent=0 // pred_check_branch
    %91 = sbr.rel (0) target = $region17
  $region16: #{generator_forward.10} parent=0 // pred_region
    _
  $region17: #{generator_forward.10} parent=0 // pred_fallthru
    _
  // Predicated region
  $region18: #{generator_forward.10} parent=0 // pred_check
    _
  $region19: #{generator_forward.10} parent=0 // pred_check_branch
    %93 = sbr.rel (0) target = $region21
  $region20: #{generator_forward.10} parent=0 // pred_region
    _
  $region21: #{generator_forward.10} parent=0 // pred_fallthru
    _

// kernel: tile.58
$region0: #{tile.58}
  #allocation0 [shape = 's32[1]{0}', space=sflag, size = 0x4, scoped, tag = 'scoped memory for tile.58']
  %s0 = inlined_call_operand.vmem [shape: f32[32], index: 0, kind: input, shape index: {}]
  %s1 = inlined_call_operand.vmem [shape: f32[4,32], index: 1, kind: output, shape index: {}]
  // Predicated region
  $region2: #{tile.58} parent=0 // pred_check
    _
  $region3: #{tile.58} parent=0 // pred_check_branch
    %3 = sbr.rel (0) target = $region5
  $region4: #{tile.58} parent=0 // pred_region
    _
  $region5: #{tile.58} parent=0 // pred_fallthru
    _
  %v4 = vld [vmem:[%s0] ss:$0 sm:$0xff]
  %5 = vst [vmem:[%s1] sm:$0xf] %v4

// kernel: tile.59
$region0: #{tile.59}
  %s0 = inlined_call_operand.vmem [shape: f32[4,32], index: 0, kind: input, shape index: {}]
  %s1 = inlined_call_operand.vmem [shape: f32[1,128], index: 1, kind: output, shape index: {}]
  $region1: #{tile.59} parent=0
    #allocation0 [shape = 'u8[4096]{0}', space=vmem, size = 0x1000, scoped, tag = 'scoped mem for output reshape']
    #allocation1 [shape = 'u8[4096]{0}', space=vmem, size = 0x1000, scoped, tag = 'scoped mem for input reshape']
    %s3 = ssub.s32 16, 1
    %v4 = vld [vmem:[%s0] sm:%s3]
    %5 = vst [vmem:[#allocation1] sm:%s3] %v4
    %v6 = vld [vmem:[#allocation1] sm:$0x1]
    %vm7 = vcmask 261120
    %8 = vst.msk [vmem:[#allocation0] sm:$0x1] %vm7, %v6
    %s9 = scalar_lea.vmem [#allocation1], 3
    %v10 = vld [vmem:[%s9] sm:$0x1]
    %11 = vrot.lane.b32.xlu0 %v10, 96
    %v12 = vpop.permute.xlu0 %11
    %vm13 = vcmask 1048320
    %14 = vst.msk [vmem:[#allocation0] sm:$0x1] %vm13, %v12
    %s15 = scalar_lea.vmem [#allocation1], 2
    %v16 = vld [vmem:[%s15] sm:$0x1]
    %17 = vrot.lane.b32.xlu0 %v16, 64
    %v18 = vpop.permute.xlu0 %17
    %vm19 = vcmask 785920
    %20 = vst.msk [vmem:[#allocation0] sm:$0x1] %vm19, %v18
    %s21 = scalar_lea.vmem [#allocation1], 1
    %v22 = vld [vmem:[%s21] sm:$0x1]
    %23 = vrot.lane.b32.xlu0 %v22, 32
    %v24 = vpop.permute.xlu0 %23
    %vm25 = vcmask 523520
    %26 = vst.msk [vmem:[#allocation0] sm:$0x1] %vm25, %v24
    %s28 = ssub.s32 2, 1
    %v29 = vld [vmem:[#allocation0] sm:%s28]
    %s31 = ssub.s32 2, 1
    %32 = vst [vmem:[%s1] sm:%s31] %v29

// kernel: generator_forward.11
$region0: #{generator_forward.11}
  #allocation0 [shape = 'u32[]', space=smem, size = 0x4, offset = 0x4, fixed_abs, tag = 'smem constant byte address 0x4 - core index']
  #allocation1 [shape = 'u32[72,128]{1,0:T(1,128)}', space=vmem, size = 0x9000, scoped, tag = 'internal scratch']
  %s0 = inlined_call_operand.vmem [shape: bf16[32,576], index: 0, kind: input, shape index: {}]
  %s1 = inlined_call_operand.vmem [shape: bf16[576,128], index: 1, kind: input, shape index: {}]
  %s2 = inlined_call_operand.vmem [shape: f32[32,128], index: 2, kind: output, shape index: {0}]
  %s3 = inlined_call_operand.vmem [shape: f32[8,128], index: 3, kind: output, shape index: {1}]
  %4 = xla_tuple %s2, %s3
  %s5 = sld [smem:[#allocation0]]
  $region26: #{generator_forward.11} parent=0
    _
  %s7 = ssub.s32 1, %s5
  %s8 = scalar_select 0, %s7, %s5
  // Predicated region
  $region2: #{generator_forward.11} parent=0 // pred_check
    _
  $region3: #{generator_forward.11} parent=0 // pred_check_branch
    %10 = sbr.rel (0) target = $region5
  $region4: #{generator_forward.11} parent=0 // pred_region
    _
  $region5: #{generator_forward.11} parent=0 // pred_fallthru
    _
  // Predicated region
  $region6: #{generator_forward.11} parent=0 // pred_check
    _
  $region7: #{generator_forward.11} parent=0 // pred_check_branch
    %12 = sbr.rel (0) target = $region9
  $region8: #{generator_forward.11} parent=0 // pred_region
    _
  $region9: #{generator_forward.11} parent=0 // pred_fallthru
    _
  %v14 = vld [vmem:[%s0] sm:$0xff]
  %v15 = vld [vmem:[%s0 + $0x8] sm:$0xff]
  %v16 = vld [vmem:[%s0 + $0x10] sm:$0xf]
  %v17 = vld [vmem:[%s0 + $0x14] sm:$0xff]
  %v18 = vld [vmem:[%s0 + $0x1c] sm:$0xff]
  %v19 = vld [vmem:[%s0 + $0x24] sm:$0xf]
  %v20 = vld [vmem:[%s0 + $0x28] sm:$0xff]
  %v21 = vld [vmem:[%s0 + $0x30] sm:$0xff]
  %v22 = vld [vmem:[%s0 + $0x38] sm:$0xf]
  %v23 = vld [vmem:[%s0 + $0x3c] sm:$0xff]
  %v24 = vld [vmem:[%s0 + $0x44] sm:$0xff]
  %v25 = vld [vmem:[%s0 + $0x4c] sm:$0xf]
  %v26 = vld [vmem:[%s1] sm:$0xf]
  %v27 = vld [vmem:[%s1 + $0x4] sm:$0xf]
  %v28 = vld [vmem:[%s1 + $0x8] sm:$0xf]
  %v29 = vld [vmem:[%s1 + $0xc] sm:$0xf]
  %v30 = vld [vmem:[%s1 + $0x10] sm:$0xf]
  %v31 = vld [vmem:[%s1 + $0x14] sm:$0xf]
  %v32 = vld [vmem:[%s1 + $0x18] sm:$0xf]
  %v33 = vld [vmem:[%s1 + $0x1c] sm:$0xf]
  %v34 = vld [vmem:[%s1 + $0x20] sm:$0xf]
  %v35 = vld [vmem:[%s1 + $0x24] sm:$0xf]
  %v36 = vld [vmem:[%s1 + $0x28] sm:$0xf]
  %v37 = vld [vmem:[%s1 + $0x2c] sm:$0xf]
  %v38 = vld [vmem:[%s1 + $0x30] sm:$0xf]
  %v39 = vld [vmem:[%s1 + $0x34] sm:$0xf]
  %v40 = vld [vmem:[%s1 + $0x38] sm:$0xf]
  %v41 = vld [vmem:[%s1 + $0x3c] sm:$0xf]
  %v42 = vld [vmem:[%s1 + $0x40] sm:$0xf]
  %v43 = vld [vmem:[%s1 + $0x44] sm:$0xf]
  %v44 = vld [vmem:[%s1 + $0x48] sm:$0xf]
  %v45 = vld [vmem:[%s1 + $0x4c] sm:$0xf]
  %v46 = vld [vmem:[%s1 + $0x50] sm:$0xf]
  %v47 = vld [vmem:[%s1 + $0x54] sm:$0xf]
  %v48 = vld [vmem:[%s1 + $0x58] sm:$0xf]
  %v49 = vld [vmem:[%s1 + $0x5c] sm:$0xf]
  %v50 = vld [vmem:[%s1 + $0x60] sm:$0xf]
  %v51 = vld [vmem:[%s1 + $0x64] sm:$0xf]
  %v52 = vld [vmem:[%s1 + $0x68] sm:$0xf]
  %v53 = vld [vmem:[%s1 + $0x6c] sm:$0xf]
  %v54 = vld [vmem:[%s1 + $0x70] sm:$0xf]
  %v55 = vld [vmem:[%s1 + $0x74] sm:$0xf]
  %v56 = vld [vmem:[%s1 + $0x78] sm:$0xf]
  %v57 = vld [vmem:[%s1 + $0x7c] sm:$0xf]
  %v58 = vld [vmem:[%s1 + $0x80] sm:$0xf]
  %v59 = vld [vmem:[%s1 + $0x84] sm:$0xf]
  %v60 = vld [vmem:[%s1 + $0x88] sm:$0xf]
  %v61 = vld [vmem:[%s1 + $0x8c] sm:$0xf]
  %v62 = vld [vmem:[%s1 + $0x90] sm:$0xf]
  %v63 = vld [vmem:[%s1 + $0x94] sm:$0xf]
  %v64 = vld [vmem:[%s1 + $0x98] sm:$0xf]
  %v65 = vld [vmem:[%s1 + $0x9c] sm:$0xf]
  %v66 = vld [vmem:[%s1 + $0xa0] sm:$0xf]
  %v67 = vld [vmem:[%s1 + $0xa4] sm:$0xf]
  %v68 = vld [vmem:[%s1 + $0xa8] sm:$0xf]
  %v69 = vld [vmem:[%s1 + $0xac] sm:$0xf]
  %v70 = vld [vmem:[%s1 + $0xb0] sm:$0xf]
  %v71 = vld [vmem:[%s1 + $0xb4] sm:$0xf]
  %v72 = vld [vmem:[%s1 + $0xb8] sm:$0xf]
  %v73 = vld [vmem:[%s1 + $0xbc] sm:$0xf]
  %v74 = vld [vmem:[%s1 + $0xc0] sm:$0xf]
  %v75 = vld [vmem:[%s1 + $0xc4] sm:$0xf]
  %v76 = vld [vmem:[%s1 + $0xc8] sm:$0xf]
  %v77 = vld [vmem:[%s1 + $0xcc] sm:$0xf]
  %v78 = vld [vmem:[%s1 + $0xd0] sm:$0xf]
  %v79 = vld [vmem:[%s1 + $0xd4] sm:$0xf]
  %v80 = vld [vmem:[%s1 + $0xd8] sm:$0xf]
  %v81 = vld [vmem:[%s1 + $0xdc] sm:$0xf]
  %v82 = vld [vmem:[%s1 + $0xe0] sm:$0xf]
  %v83 = vld [vmem:[%s1 + $0xe4] sm:$0xf]
  %v84 = vld [vmem:[%s1 + $0xe8] sm:$0xf]
  %v85 = vld [vmem:[%s1 + $0xec] sm:$0xf]
  %v86 = vld [vmem:[%s1 + $0xf0] sm:$0xf]
  %v87 = vld [vmem:[%s1 + $0xf4] sm:$0xf]
  %v88 = vld [vmem:[%s1 + $0xf8] sm:$0xf]
  %v89 = vld [vmem:[%s1 + $0xfc] sm:$0xf]
  %v90 = vld [vmem:[%s1 + $0x100] sm:$0xf]
  %v91 = vld [vmem:[%s1 + $0x104] sm:$0xf]
  %v92 = vld [vmem:[%s1 + $0x108] sm:$0xf]
  %v93 = vld [vmem:[%s1 + $0x10c] sm:$0xf]
  %v94 = vld [vmem:[%s1 + $0x110] sm:$0xf]
  %v95 = vld [vmem:[%s1 + $0x114] sm:$0xf]
  %v96 = vld [vmem:[%s1 + $0x118] sm:$0xf]
  %v97 = vld [vmem:[%s1 + $0x11c] sm:$0xf]
  %v110 = vunpack.c.l.b16 %v14
  %v111 = vunpack.c.h.b16 %v14
  %v112 = vunpack.c.l.b16 %v15
  %v113 = vunpack.c.h.b16 %v15
  %v114 = vunpack.c.l.b16 %v16
  %v115 = vunpack.c.l.b16 %v17
  %v116 = vunpack.c.h.b16 %v17
  %v117 = vunpack.c.l.b16 %v18
  %v118 = vunpack.c.h.b16 %v18
  %v119 = vunpack.c.l.b16 %v19
  %v120 = vunpack.c.l.b16 %v20
  %v121 = vunpack.c.h.b16 %v20
  %v122 = vunpack.c.l.b16 %v21
  %v123 = vunpack.c.h.b16 %v21
  %v124 = vunpack.c.l.b16 %v22
  %v125 = vunpack.c.l.b16 %v23
  %v126 = vunpack.c.h.b16 %v23
  %v127 = vunpack.c.l.b16 %v24
  %v128 = vunpack.c.h.b16 %v24
  %v129 = vunpack.c.l.b16 %v25
  %v130 = vpack.c.b16 %v115, %v110
  %v131 = vpack.c.b16 %v116, %v111
  %v132 = vpack.c.b16 %v117, %v112
  %v133 = vpack.c.b16 %v118, %v113
  %v134 = vpack.c.b16 %v119, %v114
  %v135 = vpack.c.b16 %v125, %v120
  %v136 = vpack.c.b16 %v126, %v121
  %v137 = vpack.c.b16 %v127, %v122
  %v138 = vpack.c.b16 %v128, %v123
  %v139 = vpack.c.b16 %v129, %v124
  %v220 = vunpack.c.l.b16 %v26
  %v221 = vunpack.c.l.b16 %v27
  %v222 = vunpack.c.l.b16 %v28
  %v223 = vunpack.c.l.b16 %v29
  %v224 = vunpack.c.l.b16 %v30
  %v225 = vunpack.c.l.b16 %v31
  %v226 = vunpack.c.l.b16 %v32
  %v227 = vunpack.c.l.b16 %v33
  %v228 = vunpack.c.l.b16 %v34
  %v229 = vunpack.c.l.b16 %v35
  %v230 = vunpack.c.l.b16 %v36
  %v231 = vunpack.c.l.b16 %v37
  %v232 = vunpack.c.l.b16 %v38
  %v233 = vunpack.c.l.b16 %v39
  %v234 = vunpack.c.l.b16 %v40
  %v235 = vunpack.c.l.b16 %v41
  %v236 = vunpack.c.l.b16 %v42
  %v237 = vunpack.c.l.b16 %v43
  %v238 = vunpack.c.l.b16 %v44
  %v239 = vunpack.c.l.b16 %v45
  %v240 = vunpack.c.l.b16 %v46
  %v241 = vunpack.c.l.b16 %v47
  %v242 = vunpack.c.l.b16 %v48
  %v243 = vunpack.c.l.b16 %v49
  %v244 = vunpack.c.l.b16 %v50
  %v245 = vunpack.c.l.b16 %v51
  %v246 = vunpack.c.l.b16 %v52
  %v247 = vunpack.c.l.b16 %v53
  %v248 = vunpack.c.l.b16 %v54
  %v249 = vunpack.c.l.b16 %v55
  %v250 = vunpack.c.l.b16 %v56
  %v251 = vunpack.c.l.b16 %v57
  %v252 = vunpack.c.l.b16 %v58
  %v253 = vunpack.c.l.b16 %v59
  %v254 = vunpack.c.l.b16 %v60
  %v255 = vunpack.c.l.b16 %v61
  %v256 = vunpack.c.l.b16 %v62
  %v257 = vunpack.c.l.b16 %v63
  %v258 = vunpack.c.l.b16 %v64
  %v259 = vunpack.c.l.b16 %v65
  %v260 = vunpack.c.l.b16 %v66
  %v261 = vunpack.c.l.b16 %v67
  %v262 = vunpack.c.l.b16 %v68
  %v263 = vunpack.c.l.b16 %v69
  %v264 = vunpack.c.l.b16 %v70
  %v265 = vunpack.c.l.b16 %v71
  %v266 = vunpack.c.l.b16 %v72
  %v267 = vunpack.c.l.b16 %v73
  %v268 = vunpack.c.l.b16 %v74
  %v269 = vunpack.c.l.b16 %v75
  %v270 = vunpack.c.l.b16 %v76
  %v271 = vunpack.c.l.b16 %v77
  %v272 = vunpack.c.l.b16 %v78
  %v273 = vunpack.c.l.b16 %v79
  %v274 = vunpack.c.l.b16 %v80
  %v275 = vunpack.c.l.b16 %v81
  %v276 = vunpack.c.l.b16 %v82
  %v277 = vunpack.c.l.b16 %v83
  %v278 = vunpack.c.l.b16 %v84
  %v279 = vunpack.c.l.b16 %v85
  %v280 = vunpack.c.l.b16 %v86
  %v281 = vunpack.c.l.b16 %v87
  %v282 = vunpack.c.l.b16 %v88
  %v283 = vunpack.c.l.b16 %v89
  %v284 = vunpack.c.l.b16 %v90
  %v285 = vunpack.c.l.b16 %v91
  %v286 = vunpack.c.l.b16 %v92
  %v287 = vunpack.c.l.b16 %v93
  %v288 = vunpack.c.l.b16 %v94
  %v289 = vunpack.c.l.b16 %v95
  %v290 = vunpack.c.l.b16 %v96
  %v291 = vunpack.c.l.b16 %v97
  %v292 = vpack.c.b16 %v221, %v220
  %v293 = vpack.c.b16 %v223, %v222
  %v294 = vpack.c.b16 %v225, %v224
  %v295 = vpack.c.b16 %v227, %v226
  %v296 = vpack.c.b16 %v229, %v228
  %v297 = vpack.c.b16 %v231, %v230
  %v298 = vpack.c.b16 %v233, %v232
  %v299 = vpack.c.b16 %v235, %v234
  %v300 = vpack.c.b16 %v237, %v236
  %v301 = vpack.c.b16 %v239, %v238
  %v302 = vpack.c.b16 %v241, %v240
  %v303 = vpack.c.b16 %v243, %v242
  %v304 = vpack.c.b16 %v245, %v244
  %v305 = vpack.c.b16 %v247, %v246
  %v306 = vpack.c.b16 %v249, %v248
  %v307 = vpack.c.b16 %v251, %v250
  %v308 = vpack.c.b16 %v253, %v252
  %v309 = vpack.c.b16 %v255, %v254
  %v310 = vpack.c.b16 %v257, %v256
  %v311 = vpack.c.b16 %v259, %v258
  %v312 = vpack.c.b16 %v261, %v260
  %v313 = vpack.c.b16 %v263, %v262
  %v314 = vpack.c.b16 %v265, %v264
  %v315 = vpack.c.b16 %v267, %v266
  %v316 = vpack.c.b16 %v269, %v268
  %v317 = vpack.c.b16 %v271, %v270
  %v318 = vpack.c.b16 %v273, %v272
  %v319 = vpack.c.b16 %v275, %v274
  %v320 = vpack.c.b16 %v277, %v276
  %v321 = vpack.c.b16 %v279, %v278
  %v322 = vpack.c.b16 %v281, %v280
  %v323 = vpack.c.b16 %v283, %v282
  %v324 = vpack.c.b16 %v285, %v284
  %v325 = vpack.c.b16 %v287, %v286
  %v326 = vpack.c.b16 %v289, %v288
  %v327 = vpack.c.b16 %v291, %v290
  %vm364 = vcmask 523264
  %v366 = vsel %vm364, %v134, 0
  %v369 = vsel %vm364, %v139, 0
  %371 = vmatpush.bf16.msra.mxu0 %v299
  %372 = vmatpush.bf16.msra.mxu0 %v298
  %373 = vmatpush.bf16.msra.mxu0 %v297
  %374 = vmatpush.bf16.msra.mxu0 %v296
  %375 = vmatpush.bf16.msra.mxu0 %v295
  %376 = vmatpush.bf16.msra.mxu0 %v294
  %377 = vmatpush.bf16.msra.mxu0 %v293
  %378 = vmatpush.bf16.msra.mxu0 %v292
  %379 = vmatmul.bf16.gmra.mxu0 %v130
  %v380 = vpop.f32.mrf.mxu0
  %v381 = vadd.f32 0.0, %v380
  %v382 = vpop.f32.mrf.mxu0
  %v383 = vadd.f32 0.0, %v382
  %384 = vmatmul.bf16.gmra.mxu0 %v135
  %v385 = vpop.f32.mrf.mxu0
  %v386 = vadd.f32 0.0, %v385
  %v387 = vpop.f32.mrf.mxu0
  %v388 = vadd.f32 0.0, %v387
  %389 = vdwg.mxu0
  %390 = vmatpush.bf16.msra.mxu0 %v307
  %391 = vmatpush.bf16.msra.mxu0 %v306
  %392 = vmatpush.bf16.msra.mxu0 %v305
  %393 = vmatpush.bf16.msra.mxu0 %v304
  %394 = vmatpush.bf16.msra.mxu0 %v303
  %395 = vmatpush.bf16.msra.mxu0 %v302
  %396 = vmatpush.bf16.msra.mxu0 %v301
  %397 = vmatpush.bf16.msra.mxu0 %v300
  %398 = vmatmul.bf16.gmra.mxu0 %v131
  %v399 = vpop.f32.mrf.mxu0
  %v400 = vadd.f32 %v381, %v399
  %v401 = vpop.f32.mrf.mxu0
  %v402 = vadd.f32 %v383, %v401
  %403 = vmatmul.bf16.gmra.mxu0 %v136
  %v404 = vpop.f32.mrf.mxu0
  %v405 = vadd.f32 %v386, %v404
  %v406 = vpop.f32.mrf.mxu0
  %v407 = vadd.f32 %v388, %v406
  %408 = vdwg.mxu0
  %409 = vmatpush.bf16.msra.mxu0 %v315
  %410 = vmatpush.bf16.msra.mxu0 %v314
  %411 = vmatpush.bf16.msra.mxu0 %v313
  %412 = vmatpush.bf16.msra.mxu0 %v312
  %413 = vmatpush.bf16.msra.mxu0 %v311
  %414 = vmatpush.bf16.msra.mxu0 %v310
  %415 = vmatpush.bf16.msra.mxu0 %v309
  %416 = vmatpush.bf16.msra.mxu0 %v308
  %417 = vmatmul.bf16.gmra.mxu0 %v132
  %v418 = vpop.f32.mrf.mxu0
  %v419 = vadd.f32 %v400, %v418
  %v420 = vpop.f32.mrf.mxu0
  %v421 = vadd.f32 %v402, %v420
  %422 = vmatmul.bf16.gmra.mxu0 %v137
  %v423 = vpop.f32.mrf.mxu0
  %v424 = vadd.f32 %v405, %v423
  %v425 = vpop.f32.mrf.mxu0
  %v426 = vadd.f32 %v407, %v425
  %427 = vdwg.mxu0
  %428 = vmatpush.bf16.msra.mxu0 %v323
  %429 = vmatpush.bf16.msra.mxu0 %v322
  %430 = vmatpush.bf16.msra.mxu0 %v321
  %431 = vmatpush.bf16.msra.mxu0 %v320
  %432 = vmatpush.bf16.msra.mxu0 %v319
  %433 = vmatpush.bf16.msra.mxu0 %v318
  %434 = vmatpush.bf16.msra.mxu0 %v317
  %435 = vmatpush.bf16.msra.mxu0 %v316
  %436 = vmatmul.bf16.gmra.mxu0 %v133
  %v437 = vpop.f32.mrf.mxu0
  %v438 = vadd.f32 %v419, %v437
  %v439 = vpop.f32.mrf.mxu0
  %v440 = vadd.f32 %v421, %v439
  %441 = vmatmul.bf16.gmra.mxu0 %v138
  %v442 = vpop.f32.mrf.mxu0
  %v443 = vadd.f32 %v424, %v442
  %v444 = vpop.f32.mrf.mxu0
  %v445 = vadd.f32 %v426, %v444
  %446 = vdwg.mxu0
  %447 = vmatpush.bf16.msra.mxu0 0
  %448 = vmatpush.bf16.msra.mxu0 0
  %449 = vmatpush.bf16.msra.mxu0 0
  %450 = vmatpush.bf16.msra.mxu0 0
  %451 = vmatpush.bf16.msra.mxu0 %v327
  %452 = vmatpush.bf16.msra.mxu0 %v326
  %453 = vmatpush.bf16.msra.mxu0 %v325
  %454 = vmatpush.bf16.msra.mxu0 %v324
  %455 = vmatmul.bf16.gmra.mxu0 %v366
  %v456 = vpop.f32.mrf.mxu0
  %v457 = vadd.f32 %v438, %v456
  %v458 = vpop.f32.mrf.mxu0
  %v459 = vadd.f32 %v440, %v458
  %460 = vmatmul.bf16.gmra.mxu0 %v369
  %v461 = vpop.f32.mrf.mxu0
  %v462 = vadd.f32 %v443, %v461
  %v463 = vpop.f32.mrf.mxu0
  %v464 = vadd.f32 %v445, %v463
  %465 = vdwg.mxu0
  %466 = vst [vmem:[%s2] sm:$0xff] %v457
  %467 = vst [vmem:[%s2 + $0x8] sm:$0xff] %v459
  %468 = vst [vmem:[%s2 + $0x10] sm:$0xff] %v462
  %469 = vst [vmem:[%s2 + $0x18] sm:$0xff] %v464
  %v470 = vadd.f32 %v457, %v459
  %v471 = vadd.f32 %v470, %v462
  %v472 = vadd.f32 %v471, %v464
  %v473 = vrot.slane %v472, 4
  %v474 = vadd.f32 %v472, %v473
  %v475 = vrot.slane %v474, 2
  %v476 = vadd.f32 %v474, %v475
  %v477 = vrot.slane %v476, 1
  %v478 = vadd.f32 %v476, %v477
  %479 = vst [vmem:[%s3] sm:$0x1] %v478
  %v480 = vmul.f32 %v457, %v457
  %v481 = vmul.f32 %v459, %v459
  %v482 = vmul.f32 %v462, %v462
  %v483 = vmul.f32 %v464, %v464
  %v484 = vadd.f32 %v480, %v481
  %v485 = vadd.f32 %v484, %v482
  %v486 = vadd.f32 %v485, %v483
  %v487 = vrot.slane %v486, 4
  %v488 = vadd.f32 %v486, %v487
  %v489 = vrot.slane %v488, 2
  %v490 = vadd.f32 %v488, %v489
  %v491 = vrot.slane %v490, 1
  %v492 = vadd.f32 %v490, %v491
  %493 = vst [vmem:[%s3 + $0x1] sm:$0x1] %v492
  // Predicated region
  $region10: #{generator_forward.11} parent=0 // pred_check
    _
  $region11: #{generator_forward.11} parent=0 // pred_check_branch
    %495 = sbr.rel (0) target = $region13
  $region12: #{generator_forward.11} parent=0 // pred_region
    _
  $region13: #{generator_forward.11} parent=0 // pred_fallthru
    _
  // Predicated region
  $region14: #{generator_forward.11} parent=0 // pred_check
    _
  $region15: #{generator_forward.11} parent=0 // pred_check_branch
    %497 = sbr.rel (0) target = $region17
  $region16: #{generator_forward.11} parent=0 // pred_region
    _
  $region17: #{generator_forward.11} parent=0 // pred_fallthru
    _
  // Predicated region
  $region18: #{generator_forward.11} parent=0 // pred_check
    _
  $region19: #{generator_forward.11} parent=0 // pred_check_branch
    %499 = sbr.rel (0) target = $region21
  $region20: #{generator_forward.11} parent=0 // pred_region
    _
  $region21: #{generator_forward.11} parent=0 // pred_fallthru
    _
  // Predicated region
  $region22: #{generator_forward.11} parent=0 // pred_check
    _
  $region23: #{generator_forward.11} parent=0 // pred_check_branch
    %501 = sbr.rel (0) target = $region25
  $region24: #{generator_forward.11} parent=0 // pred_region
    _
  $region25: #{generator_forward.11} parent=0 // pred_fallthru
    _

// kernel: generator_forward.12
$region0: #{generator_forward.12}
  #allocation0 [shape = 'u32[]', space=smem, size = 0x4, offset = 0x4, fixed_abs, tag = 'smem constant byte address 0x4 - core index']
  #allocation1 [shape = 'u32[72,128]{1,0:T(1,128)}', space=vmem, size = 0x9000, scoped, tag = 'internal scratch']
  %s0 = inlined_call_operand.vmem [shape: f32[32,128], index: 0, kind: input, shape index: {}]
  %s1 = inlined_call_operand.vmem [shape: f32[1,128], index: 1, kind: input, shape index: {}]
  %s2 = inlined_call_operand.vmem [shape: f32[1,128], index: 2, kind: input, shape index: {}]
  %s3 = inlined_call_operand.vmem [shape: f32[32,128], index: 3, kind: output, shape index: {}]
  %s4 = sld [smem:[#allocation0]]
  $region22: #{generator_forward.12} parent=0
    _
  %s6 = ssub.s32 1, %s4
  %s7 = scalar_select 0, %s6, %s4
  // Predicated region
  $region2: #{generator_forward.12} parent=0 // pred_check
    _
  $region3: #{generator_forward.12} parent=0 // pred_check_branch
    %9 = sbr.rel (0) target = $region5
  $region4: #{generator_forward.12} parent=0 // pred_region
    _
  $region5: #{generator_forward.12} parent=0 // pred_fallthru
    _
  // Predicated region
  $region6: #{generator_forward.12} parent=0 // pred_check
    _
  $region7: #{generator_forward.12} parent=0 // pred_check_branch
    %11 = sbr.rel (0) target = $region9
  $region8: #{generator_forward.12} parent=0 // pred_region
    _
  $region9: #{generator_forward.12} parent=0 // pred_fallthru
    _
  // Predicated region
  $region10: #{generator_forward.12} parent=0 // pred_check
    _
  $region11: #{generator_forward.12} parent=0 // pred_check_branch
    %13 = sbr.rel (0) target = $region13
  $region12: #{generator_forward.12} parent=0 // pred_region
    _
  $region13: #{generator_forward.12} parent=0 // pred_fallthru
    _
  %v14 = vld [vmem:[%s0] sm:$0xff]
  %v15 = vld [vmem:[%s0 + $0x8] sm:$0xff]
  %v16 = vld [vmem:[%s0 + $0x10] sm:$0xff]
  %v17 = vld [vmem:[%s0 + $0x18] sm:$0xff]
  %v18 = vld [vmem:[%s1] sm:$0x1]
  %v20 = vperm.slane %v18, 0
  %v22 = vmul.f32 %v14, %v20
  %v23 = vmul.f32 %v15, %v20
  %v24 = vmul.f32 %v16, %v20
  %v25 = vmul.f32 %v17, %v20
  %v26 = vld [vmem:[%s2] sm:$0x1]
  %v28 = vperm.slane %v26, 0
  %v30 = vadd.f32 %v22, %v28
  %v31 = vadd.f32 %v23, %v28
  %v32 = vadd.f32 %v24, %v28
  %v33 = vadd.f32 %v25, %v28
  %v34 = vmax.f32 %v30, 0.0
  %v35 = vmax.f32 %v31, 0.0
  %v36 = vmax.f32 %v32, 0.0
  %v37 = vmax.f32 %v33, 0.0
  %38 = vst [vmem:[%s3] sm:$0xff] %v34
  %39 = vst [vmem:[%s3 + $0x8] sm:$0xff] %v35
  %40 = vst [vmem:[%s3 + $0x10] sm:$0xff] %v36
  %41 = vst [vmem:[%s3 + $0x18] sm:$0xff] %v37
  // Predicated region
  $region14: #{generator_forward.12} parent=0 // pred_check
    _
  $region15: #{generator_forward.12} parent=0 // pred_check_branch
    %43 = sbr.rel (0) target = $region17
  $region16: #{generator_forward.12} parent=0 // pred_region
    _
  $region17: #{generator_forward.12} parent=0 // pred_fallthru
    _
  // Predicated region
  $region18: #{generator_forward.12} parent=0 // pred_check
    _
  $region19: #{generator_forward.12} parent=0 // pred_check_branch
    %45 = sbr.rel (0) target = $region21
  $region20: #{generator_forward.12} parent=0 // pred_region
    _
  $region21: #{generator_forward.12} parent=0 // pred_fallthru
    _

// kernel: tile.68
$region0: #{tile.68}
  #allocation0 [shape = 's32[1]{0}', space=sflag, size = 0x4, scoped, tag = 'scoped memory for tile.68']
  %s0 = inlined_call_operand.vmem [shape: f32[16], index: 0, kind: input, shape index: {}]
  %s1 = inlined_call_operand.vmem [shape: f32[4,16], index: 1, kind: output, shape index: {}]
  // Predicated region
  $region2: #{tile.68} parent=0 // pred_check
    _
  $region3: #{tile.68} parent=0 // pred_check_branch
    %3 = sbr.rel (0) target = $region5
  $region4: #{tile.68} parent=0 // pred_region
    _
  $region5: #{tile.68} parent=0 // pred_fallthru
    _
  %v4 = vld [vmem:[%s0] ss:$0 sm:$0xff]
  %5 = vst [vmem:[%s1] sm:$0xf] %v4

// kernel: tile.69
$region0: #{tile.69}
  %s0 = inlined_call_operand.vmem [shape: f32[4,16], index: 0, kind: input, shape index: {}]
  %s1 = inlined_call_operand.vmem [shape: f32[1,64], index: 1, kind: output, shape index: {}]
  $region1: #{tile.69} parent=0
    #allocation0 [shape = 'u8[4096]{0}', space=vmem, size = 0x1000, scoped, tag = 'scoped mem for output reshape']
    #allocation1 [shape = 'u8[4096]{0}', space=vmem, size = 0x1000, scoped, tag = 'scoped mem for input reshape']
    %s3 = ssub.s32 16, 1
    %v4 = vld [vmem:[%s0] sm:%s3]
    %5 = vst [vmem:[#allocation1] sm:%s3] %v4
    %v6 = vld [vmem:[#allocation1] sm:$0x1]
    %vm7 = vcmask 130048
    %8 = vst.msk [vmem:[#allocation0] sm:$0x1] %vm7, %v6
    %s9 = scalar_lea.vmem [#allocation1], 3
    %v10 = vld [vmem:[%s9] sm:$0x1]
    %11 = vrot.lane.b32.xlu0 %v10, 48
    %v12 = vpop.permute.xlu0 %11
    %vm13 = vcmask 523648
    %14 = vst.msk [vmem:[#allocation0] sm:$0x1] %vm13, %v12
    %s15 = scalar_lea.vmem [#allocation1], 2
    %v16 = vld [vmem:[%s15] sm:$0x1]
    %17 = vrot.lane.b32.xlu0 %v16, 32
    %v18 = vpop.permute.xlu0 %17
    %vm19 = vcmask 392448
    %20 = vst.msk [vmem:[#allocation0] sm:$0x1] %vm19, %v18
    %s21 = scalar_lea.vmem [#allocation1], 1
    %v22 = vld [vmem:[%s21] sm:$0x1]
    %23 = vrot.lane.b32.xlu0 %v22, 16
    %v24 = vpop.permute.xlu0 %23
    %vm25 = vcmask 261248
    %26 = vst.msk [vmem:[#allocation0] sm:$0x1] %vm25, %v24
    %s28 = ssub.s32 2, 1
    %v29 = vld [vmem:[#allocation0] sm:%s28]
    %s31 = ssub.s32 2, 1
    %32 = vst [vmem:[%s1] sm:%s31] %v29

// kernel: generator_forward.13
$region0: #{generator_forward.13}
  #allocation0 [shape = 'u32[]', space=smem, size = 0x4, offset = 0x4, fixed_abs, tag = 'smem constant byte address 0x4 - core index']
  #allocation1 [shape = 'u32[72,128]{1,0:T(1,128)}', space=vmem, size = 0x9000, scoped, tag = 'internal scratch']
  %s0 = inlined_call_operand.vmem [shape: bf16[128,288], index: 0, kind: input, shape index: {}]
  %s1 = inlined_call_operand.vmem [shape: bf16[288,64], index: 1, kind: input, shape index: {}]
  %s2 = inlined_call_operand.vmem [shape: f32[128,64], index: 2, kind: output, shape index: {0}]
  %s3 = inlined_call_operand.vmem [shape: f32[8,64], index: 3, kind: output, shape index: {1}]
  %4 = xla_tuple %s2, %s3
  %s5 = sld [smem:[#allocation0]]
  $region26: #{generator_forward.13} parent=0
    _
  %s7 = ssub.s32 1, %s5
  %s8 = scalar_select 0, %s7, %s5
  // Predicated region
  $region2: #{generator_forward.13} parent=0 // pred_check
    _
  $region3: #{generator_forward.13} parent=0 // pred_check_branch
    %10 = sbr.rel (0) target = $region5
  $region4: #{generator_forward.13} parent=0 // pred_region
    _
  $region5: #{generator_forward.13} parent=0 // pred_fallthru
    _
  // Predicated region
  $region6: #{generator_forward.13} parent=0 // pred_check
    _
  $region7: #{generator_forward.13} parent=0 // pred_check_branch
    %12 = sbr.rel (0) target = $region9
  $region8: #{generator_forward.13} parent=0 // pred_region
    _
  $region9: #{generator_forward.13} parent=0 // pred_fallthru
    _
  %v14 = vld [vmem:[%s0] sm:$0xff]
  %v15 = vld [vmem:[%s0 + $0x8] sm:$0xf]
  %v16 = vld [vmem:[%s0 + $0xc] sm:$0xff]
  %v17 = vld [vmem:[%s0 + $0x14] sm:$0xf]
  %v18 = vld [vmem:[%s0 + $0x18] sm:$0xff]
  %v19 = vld [vmem:[%s0 + $0x20] sm:$0xf]
  %v20 = vld [vmem:[%s0 + $0x24] sm:$0xff]
  %v21 = vld [vmem:[%s0 + $0x2c] sm:$0xf]
  %v22 = vld [vmem:[%s0 + $0x30] sm:$0xff]
  %v23 = vld [vmem:[%s0 + $0x38] sm:$0xf]
  %v24 = vld [vmem:[%s0 + $0x3c] sm:$0xff]
  %v25 = vld [vmem:[%s0 + $0x44] sm:$0xf]
  %v26 = vld [vmem:[%s0 + $0x48] sm:$0xff]
  %v27 = vld [vmem:[%s0 + $0x50] sm:$0xf]
  %v28 = vld [vmem:[%s0 + $0x54] sm:$0xff]
  %v29 = vld [vmem:[%s0 + $0x5c] sm:$0xf]
  %v30 = vld [vmem:[%s0 + $0x60] sm:$0xff]
  %v31 = vld [vmem:[%s0 + $0x68] sm:$0xf]
  %v32 = vld [vmem:[%s0 + $0x6c] sm:$0xff]
  %v33 = vld [vmem:[%s0 + $0x74] sm:$0xf]
  %v34 = vld [vmem:[%s0 + $0x78] sm:$0xff]
  %v35 = vld [vmem:[%s0 + $0x80] sm:$0xf]
  %v36 = vld [vmem:[%s0 + $0x84] sm:$0xff]
  %v37 = vld [vmem:[%s0 + $0x8c] sm:$0xf]
  %v38 = vld [vmem:[%s0 + $0x90] sm:$0xff]
  %v39 = vld [vmem:[%s0 + $0x98] sm:$0xf]
  %v40 = vld [vmem:[%s0 + $0x9c] sm:$0xff]
  %v41 = vld [vmem:[%s0 + $0xa4] sm:$0xf]
  %v42 = vld [vmem:[%s0 + $0xa8] sm:$0xff]
  %v43 = vld [vmem:[%s0 + $0xb0] sm:$0xf]
  %v44 = vld [vmem:[%s0 + $0xb4] sm:$0xff]
  %v45 = vld [vmem:[%s0 + $0xbc] sm:$0xf]
  %v46 = vld [vmem:[%s1] sm:$0xf]
  %v47 = vld [vmem:[%s1 + $0x4] sm:$0xf]
  %v48 = vld [vmem:[%s1 + $0x8] sm:$0xf]
  %v49 = vld [vmem:[%s1 + $0xc] sm:$0xf]
  %v50 = vld [vmem:[%s1 + $0x10] sm:$0xf]
  %v51 = vld [vmem:[%s1 + $0x14] sm:$0xf]
  %v52 = vld [vmem:[%s1 + $0x18] sm:$0xf]
  %v53 = vld [vmem:[%s1 + $0x1c] sm:$0xf]
  %v54 = vld [vmem:[%s1 + $0x20] sm:$0xf]
  %v55 = vld [vmem:[%s1 + $0x24] sm:$0xf]
  %v56 = vld [vmem:[%s1 + $0x28] sm:$0xf]
  %v57 = vld [vmem:[%s1 + $0x2c] sm:$0xf]
  %v58 = vld [vmem:[%s1 + $0x30] sm:$0xf]
  %v59 = vld [vmem:[%s1 + $0x34] sm:$0xf]
  %v60 = vld [vmem:[%s1 + $0x38] sm:$0xf]
  %v61 = vld [vmem:[%s1 + $0x3c] sm:$0xf]
  %v62 = vld [vmem:[%s1 + $0x40] sm:$0xf]
  %v63 = vld [vmem:[%s1 + $0x44] sm:$0xf]
  %v64 = vld [vmem:[%s1 + $0x48] sm:$0xf]
  %v65 = vld [vmem:[%s1 + $0x4c] sm:$0xf]
  %v66 = vld [vmem:[%s1 + $0x50] sm:$0xf]
  %v67 = vld [vmem:[%s1 + $0x54] sm:$0xf]
  %v68 = vld [vmem:[%s1 + $0x58] sm:$0xf]
  %v69 = vld [vmem:[%s1 + $0x5c] sm:$0xf]
  %v70 = vld [vmem:[%s1 + $0x60] sm:$0xf]
  %v71 = vld [vmem:[%s1 + $0x64] sm:$0xf]
  %v72 = vld [vmem:[%s1 + $0x68] sm:$0xf]
  %v73 = vld [vmem:[%s1 + $0x6c] sm:$0xf]
  %v74 = vld [vmem:[%s1 + $0x70] sm:$0xf]
  %v75 = vld [vmem:[%s1 + $0x74] sm:$0xf]
  %v76 = vld [vmem:[%s1 + $0x78] sm:$0xf]
  %v77 = vld [vmem:[%s1 + $0x7c] sm:$0xf]
  %v78 = vld [vmem:[%s1 + $0x80] sm:$0xf]
  %v79 = vld [vmem:[%s1 + $0x84] sm:$0xf]
  %v80 = vld [vmem:[%s1 + $0x88] sm:$0xf]
  %v81 = vld [vmem:[%s1 + $0x8c] sm:$0xf]
  %v114 = vunpack.c.l.b16 %v14
  %v115 = vunpack.c.h.b16 %v14
  %v116 = vunpack.c.l.b16 %v15
  %v117 = vunpack.c.l.b16 %v16
  %v118 = vunpack.c.h.b16 %v16
  %v119 = vunpack.c.l.b16 %v17
  %v120 = vunpack.c.l.b16 %v18
  %v121 = vunpack.c.h.b16 %v18
  %v122 = vunpack.c.l.b16 %v19
  %v123 = vunpack.c.l.b16 %v20
  %v124 = vunpack.c.h.b16 %v20
  %v125 = vunpack.c.l.b16 %v21
  %v126 = vunpack.c.l.b16 %v22
  %v127 = vunpack.c.h.b16 %v22
  %v128 = vunpack.c.l.b16 %v23
  %v129 = vunpack.c.l.b16 %v24
  %v130 = vunpack.c.h.b16 %v24
  %v131 = vunpack.c.l.b16 %v25
  %v132 = vunpack.c.l.b16 %v26
  %v133 = vunpack.c.h.b16 %v26
  %v134 = vunpack.c.l.b16 %v27
  %v135 = vunpack.c.l.b16 %v28
  %v136 = vunpack.c.h.b16 %v28
  %v137 = vunpack.c.l.b16 %v29
  %v138 = vunpack.c.l.b16 %v30
  %v139 = vunpack.c.h.b16 %v30
  %v140 = vunpack.c.l.b16 %v31
  %v141 = vunpack.c.l.b16 %v32
  %v142 = vunpack.c.h.b16 %v32
  %v143 = vunpack.c.l.b16 %v33
  %v144 = vunpack.c.l.b16 %v34
  %v145 = vunpack.c.h.b16 %v34
  %v146 = vunpack.c.l.b16 %v35
  %v147 = vunpack.c.l.b16 %v36
  %v148 = vunpack.c.h.b16 %v36
  %v149 = vunpack.c.l.b16 %v37
  %v150 = vunpack.c.l.b16 %v38
  %v151 = vunpack.c.h.b16 %v38
  %v152 = vunpack.c.l.b16 %v39
  %v153 = vunpack.c.l.b16 %v40
  %v154 = vunpack.c.h.b16 %v40
  %v155 = vunpack.c.l.b16 %v41
  %v156 = vunpack.c.l.b16 %v42
  %v157 = vunpack.c.h.b16 %v42
  %v158 = vunpack.c.l.b16 %v43
  %v159 = vunpack.c.l.b16 %v44
  %v160 = vunpack.c.h.b16 %v44
  %v161 = vunpack.c.l.b16 %v45
  %v162 = vpack.c.b16 %v117, %v114
  %v163 = vpack.c.b16 %v118, %v115
  %v164 = vpack.c.b16 %v119, %v116
  %v165 = vpack.c.b16 %v123, %v120
  %v166 = vpack.c.b16 %v124, %v121
  %v167 = vpack.c.b16 %v125, %v122
  %v168 = vpack.c.b16 %v129, %v126
  %v169 = vpack.c.b16 %v130, %v127
  %v170 = vpack.c.b16 %v131, %v128
  %v171 = vpack.c.b16 %v135, %v132
  %v172 = vpack.c.b16 %v136, %v133
  %v173 = vpack.c.b16 %v137, %v134
  %v174 = vpack.c.b16 %v141, %v138
  %v175 = vpack.c.b16 %v142, %v139
  %v176 = vpack.c.b16 %v143, %v140
  %v177 = vpack.c.b16 %v147, %v144
  %v178 = vpack.c.b16 %v148, %v145
  %v179 = vpack.c.b16 %v149, %v146
  %v180 = vpack.c.b16 %v153, %v150
  %v181 = vpack.c.b16 %v154, %v151
  %v182 = vpack.c.b16 %v155, %v152
  %v183 = vpack.c.b16 %v159, %v156
  %v184 = vpack.c.b16 %v160, %v157
  %v185 = vpack.c.b16 %v161, %v158
  %v238 = vunpack.c.l.b16 %v46
  %v239 = vunpack.c.l.b16 %v47
  %v240 = vunpack.c.l.b16 %v48
  %v241 = vunpack.c.l.b16 %v49
  %v242 = vunpack.c.l.b16 %v50
  %v243 = vunpack.c.l.b16 %v51
  %v244 = vunpack.c.l.b16 %v52
  %v245 = vunpack.c.l.b16 %v53
  %v246 = vunpack.c.l.b16 %v54
  %v247 = vunpack.c.l.b16 %v55
  %v248 = vunpack.c.l.b16 %v56
  %v249 = vunpack.c.l.b16 %v57
  %v250 = vunpack.c.l.b16 %v58
  %v251 = vunpack.c.l.b16 %v59
  %v252 = vunpack.c.l.b16 %v60
  %v253 = vunpack.c.l.b16 %v61
  %v254 = vunpack.c.l.b16 %v62
  %v255 = vunpack.c.l.b16 %v63
  %v256 = vunpack.c.l.b16 %v64
  %v257 = vunpack.c.l.b16 %v65
  %v258 = vunpack.c.l.b16 %v66
  %v259 = vunpack.c.l.b16 %v67
  %v260 = vunpack.c.l.b16 %v68
  %v261 = vunpack.c.l.b16 %v69
  %v262 = vunpack.c.l.b16 %v70
  %v263 = vunpack.c.l.b16 %v71
  %v264 = vunpack.c.l.b16 %v72
  %v265 = vunpack.c.l.b16 %v73
  %v266 = vunpack.c.l.b16 %v74
  %v267 = vunpack.c.l.b16 %v75
  %v268 = vunpack.c.l.b16 %v76
  %v269 = vunpack.c.l.b16 %v77
  %v270 = vunpack.c.l.b16 %v78
  %v271 = vunpack.c.l.b16 %v79
  %v272 = vunpack.c.l.b16 %v80
  %v273 = vunpack.c.l.b16 %v81
  %v274 = vpack.c.b16 %v239, %v238
  %v275 = vpack.c.b16 %v241, %v240
  %v276 = vpack.c.b16 %v243, %v242
  %v277 = vpack.c.b16 %v245, %v244
  %v278 = vpack.c.b16 %v247, %v246
  %v279 = vpack.c.b16 %v249, %v248
  %v280 = vpack.c.b16 %v251, %v250
  %v281 = vpack.c.b16 %v253, %v252
  %v282 = vpack.c.b16 %v255, %v254
  %v283 = vpack.c.b16 %v257, %v256
  %v284 = vpack.c.b16 %v259, %v258
  %v285 = vpack.c.b16 %v261, %v260
  %v286 = vpack.c.b16 %v263, %v262
  %v287 = vpack.c.b16 %v265, %v264
  %v288 = vpack.c.b16 %v267, %v266
  %v289 = vpack.c.b16 %v269, %v268
  %v290 = vpack.c.b16 %v271, %v270
  %v291 = vpack.c.b16 %v273, %v272
  %vm310 = vcmask 261120
  %v312 = vsel %vm310, %v164, 0
  %v315 = vsel %vm310, %v167, 0
  %v318 = vsel %vm310, %v170, 0
  %v321 = vsel %vm310, %v173, 0
  %v324 = vsel %vm310, %v176, 0
  %v327 = vsel %vm310, %v179, 0
  %v330 = vsel %vm310, %v182, 0
  %v333 = vsel %vm310, %v185, 0
  %335 = vmatpush.bf16.msra.mxu0 %v281
  %336 = vmatpush.bf16.msra.mxu0 %v280
  %337 = vmatpush.bf16.msra.mxu0 %v279
  %338 = vmatpush.bf16.msra.mxu0 %v278
  %339 = vmatpush.bf16.msra.mxu0 %v277
  %340 = vmatpush.bf16.msra.mxu0 %v276
  %341 = vmatpush.bf16.msra.mxu0 %v275
  %342 = vmatpush.bf16.msra.mxu0 %v274
  %343 = vmatmul.bf16.gmra.mxu0 %v162
  %v344 = vpop.f32.mrf.mxu0
  %v345 = vadd.f32 0.0, %v344
  %v346 = vpop.f32.mrf.mxu0
  %v347 = vadd.f32 0.0, %v346
  %348 = vmatmul.bf16.gmra.mxu0 %v165
  %v349 = vpop.f32.mrf.mxu0
  %v350 = vadd.f32 0.0, %v349
  %v351 = vpop.f32.mrf.mxu0
  %v352 = vadd.f32 0.0, %v351
  %353 = vmatmul.bf16.gmra.mxu0 %v168
  %v354 = vpop.f32.mrf.mxu0
  %v355 = vadd.f32 0.0, %v354
  %v356 = vpop.f32.mrf.mxu0
  %v357 = vadd.f32 0.0, %v356
  %358 = vmatmul.bf16.gmra.mxu0 %v171
  %v359 = vpop.f32.mrf.mxu0
  %v360 = vadd.f32 0.0, %v359
  %v361 = vpop.f32.mrf.mxu0
  %v362 = vadd.f32 0.0, %v361
  %363 = vmatmul.bf16.gmra.mxu0 %v174
  %v364 = vpop.f32.mrf.mxu0
  %v365 = vadd.f32 0.0, %v364
  %v366 = vpop.f32.mrf.mxu0
  %v367 = vadd.f32 0.0, %v366
  %368 = vmatmul.bf16.gmra.mxu0 %v177
  %v369 = vpop.f32.mrf.mxu0
  %v370 = vadd.f32 0.0, %v369
  %v371 = vpop.f32.mrf.mxu0
  %v372 = vadd.f32 0.0, %v371
  %373 = vmatmul.bf16.gmra.mxu0 %v180
  %v374 = vpop.f32.mrf.mxu0
  %v375 = vadd.f32 0.0, %v374
  %v376 = vpop.f32.mrf.mxu0
  %v377 = vadd.f32 0.0, %v376
  %378 = vmatmul.bf16.gmra.mxu0 %v183
  %v379 = vpop.f32.mrf.mxu0
  %v380 = vadd.f32 0.0, %v379
  %v381 = vpop.f32.mrf.mxu0
  %v382 = vadd.f32 0.0, %v381
  %383 = vdwg.mxu0
  %384 = vmatpush.bf16.msra.mxu0 %v289
  %385 = vmatpush.bf16.msra.mxu0 %v288
  %386 = vmatpush.bf16.msra.mxu0 %v287
  %387 = vmatpush.bf16.msra.mxu0 %v286
  %388 = vmatpush.bf16.msra.mxu0 %v285
  %389 = vmatpush.bf16.msra.mxu0 %v284
  %390 = vmatpush.bf16.msra.mxu0 %v283
  %391 = vmatpush.bf16.msra.mxu0 %v282
  %392 = vmatmul.bf16.gmra.mxu0 %v163
  %v393 = vpop.f32.mrf.mxu0
  %v394 = vadd.f32 %v345, %v393
  %v395 = vpop.f32.mrf.mxu0
  %v396 = vadd.f32 %v347, %v395
  %397 = vmatmul.bf16.gmra.mxu0 %v166
  %v398 = vpop.f32.mrf.mxu0
  %v399 = vadd.f32 %v350, %v398
  %v400 = vpop.f32.mrf.mxu0
  %v401 = vadd.f32 %v352, %v400
  %402 = vmatmul.bf16.gmra.mxu0 %v169
  %v403 = vpop.f32.mrf.mxu0
  %v404 = vadd.f32 %v355, %v403
  %v405 = vpop.f32.mrf.mxu0
  %v406 = vadd.f32 %v357, %v405
  %407 = vmatmul.bf16.gmra.mxu0 %v172
  %v408 = vpop.f32.mrf.mxu0
  %v409 = vadd.f32 %v360, %v408
  %v410 = vpop.f32.mrf.mxu0
  %v411 = vadd.f32 %v362, %v410
  %412 = vmatmul.bf16.gmra.mxu0 %v175
  %v413 = vpop.f32.mrf.mxu0
  %v414 = vadd.f32 %v365, %v413
  %v415 = vpop.f32.mrf.mxu0
  %v416 = vadd.f32 %v367, %v415
  %417 = vmatmul.bf16.gmra.mxu0 %v178
  %v418 = vpop.f32.mrf.mxu0
  %v419 = vadd.f32 %v370, %v418
  %v420 = vpop.f32.mrf.mxu0
  %v421 = vadd.f32 %v372, %v420
  %422 = vmatmul.bf16.gmra.mxu0 %v181
  %v423 = vpop.f32.mrf.mxu0
  %v424 = vadd.f32 %v375, %v423
  %v425 = vpop.f32.mrf.mxu0
  %v426 = vadd.f32 %v377, %v425
  %427 = vmatmul.bf16.gmra.mxu0 %v184
  %v428 = vpop.f32.mrf.mxu0
  %v429 = vadd.f32 %v380, %v428
  %v430 = vpop.f32.mrf.mxu0
  %v431 = vadd.f32 %v382, %v430
  %432 = vdwg.mxu0
  %433 = vmatpush.bf16.msra.mxu0 0
  %434 = vmatpush.bf16.msra.mxu0 0
  %435 = vmatpush.bf16.msra.mxu0 0
  %436 = vmatpush.bf16.msra.mxu0 0
  %437 = vmatpush.bf16.msra.mxu0 0
  %438 = vmatpush.bf16.msra.mxu0 0
  %439 = vmatpush.bf16.msra.mxu0 %v291
  %440 = vmatpush.bf16.msra.mxu0 %v290
  %441 = vmatmul.bf16.gmra.mxu0 %v312
  %v442 = vpop.f32.mrf.mxu0
  %v443 = vadd.f32 %v394, %v442
  %v444 = vpop.f32.mrf.mxu0
  %v445 = vadd.f32 %v396, %v444
  %446 = vmatmul.bf16.gmra.mxu0 %v315
  %v447 = vpop.f32.mrf.mxu0
  %v448 = vadd.f32 %v399, %v447
  %v449 = vpop.f32.mrf.mxu0
  %v450 = vadd.f32 %v401, %v449
  %451 = vmatmul.bf16.gmra.mxu0 %v318
  %v452 = vpop.f32.mrf.mxu0
  %v453 = vadd.f32 %v404, %v452
  %v454 = vpop.f32.mrf.mxu0
  %v455 = vadd.f32 %v406, %v454
  %456 = vmatmul.bf16.gmra.mxu0 %v321
  %v457 = vpop.f32.mrf.mxu0
  %v458 = vadd.f32 %v409, %v457
  %v459 = vpop.f32.mrf.mxu0
  %v460 = vadd.f32 %v411, %v459
  %461 = vmatmul.bf16.gmra.mxu0 %v324
  %v462 = vpop.f32.mrf.mxu0
  %v463 = vadd.f32 %v414, %v462
  %v464 = vpop.f32.mrf.mxu0
  %v465 = vadd.f32 %v416, %v464
  %466 = vmatmul.bf16.gmra.mxu0 %v327
  %v467 = vpop.f32.mrf.mxu0
  %v468 = vadd.f32 %v419, %v467
  %v469 = vpop.f32.mrf.mxu0
  %v470 = vadd.f32 %v421, %v469
  %471 = vmatmul.bf16.gmra.mxu0 %v330
  %v472 = vpop.f32.mrf.mxu0
  %v473 = vadd.f32 %v424, %v472
  %v474 = vpop.f32.mrf.mxu0
  %v475 = vadd.f32 %v426, %v474
  %476 = vmatmul.bf16.gmra.mxu0 %v333
  %v477 = vpop.f32.mrf.mxu0
  %v478 = vadd.f32 %v429, %v477
  %v479 = vpop.f32.mrf.mxu0
  %v480 = vadd.f32 %v431, %v479
  %481 = vdwg.mxu0
  %vm482 = vcmask 523264
  %483 = vst.msk [vmem:[%s2] sm:$0xff] %vm482, %v443
  %484 = vst.msk [vmem:[%s2 + $0x8] sm:$0xff] %vm482, %v445
  %485 = vst.msk [vmem:[%s2 + $0x10] sm:$0xff] %vm482, %v448
  %486 = vst.msk [vmem:[%s2 + $0x18] sm:$0xff] %vm482, %v450
  %487 = vst.msk [vmem:[%s2 + $0x20] sm:$0xff] %vm482, %v453
  %488 = vst.msk [vmem:[%s2 + $0x28] sm:$0xff] %vm482, %v455
  %489 = vst.msk [vmem:[%s2 + $0x30] sm:$0xff] %vm482, %v458
  %490 = vst.msk [vmem:[%s2 + $0x38] sm:$0xff] %vm482, %v460
  %491 = vst.msk [vmem:[%s2 + $0x40] sm:$0xff] %vm482, %v463
  %492 = vst.msk [vmem:[%s2 + $0x48] sm:$0xff] %vm482, %v465
  %493 = vst.msk [vmem:[%s2 + $0x50] sm:$0xff] %vm482, %v468
  %494 = vst.msk [vmem:[%s2 + $0x58] sm:$0xff] %vm482, %v470
  %495 = vst.msk [vmem:[%s2 + $0x60] sm:$0xff] %vm482, %v473
  %496 = vst.msk [vmem:[%s2 + $0x68] sm:$0xff] %vm482, %v475
  %497 = vst.msk [vmem:[%s2 + $0x70] sm:$0xff] %vm482, %v478
  %498 = vst.msk [vmem:[%s2 + $0x78] sm:$0xff] %vm482, %v480
  %v499 = vsel %vm482, %v443, 0.0
  %v500 = vsel %vm482, %v445, 0.0
  %v501 = vadd.f32 %v499, %v500
  %v502 = vsel %vm482, %v448, 0.0
  %v503 = vadd.f32 %v501, %v502
  %v504 = vsel %vm482, %v450, 0.0
  %v505 = vadd.f32 %v503, %v504
  %v506 = vsel %vm482, %v453, 0.0
  %v507 = vadd.f32 %v505, %v506
  %v508 = vsel %vm482, %v455, 0.0
  %v509 = vadd.f32 %v507, %v508
  %v510 = vsel %vm482, %v458, 0.0
  %v511 = vadd.f32 %v509, %v510
  %v512 = vsel %vm482, %v460, 0.0
  %v513 = vadd.f32 %v511, %v512
  %v514 = vsel %vm482, %v463, 0.0
  %v515 = vadd.f32 %v513, %v514
  %v516 = vsel %vm482, %v465, 0.0
  %v517 = vadd.f32 %v515, %v516
  %v518 = vsel %vm482, %v468, 0.0
  %v519 = vadd.f32 %v517, %v518
  %v520 = vsel %vm482, %v470, 0.0
  %v521 = vadd.f32 %v519, %v520
  %v522 = vsel %vm482, %v473, 0.0
  %v523 = vadd.f32 %v521, %v522
  %v524 = vsel %vm482, %v475, 0.0
  %v525 = vadd.f32 %v523, %v524
  %v526 = vsel %vm482, %v478, 0.0
  %v527 = vadd.f32 %v525, %v526
  %v528 = vsel %vm482, %v480, 0.0
  %v529 = vadd.f32 %v527, %v528
  %v530 = vrot.slane %v529, 4
  %v531 = vadd.f32 %v529, %v530
  %v532 = vrot.slane %v531, 2
  %v533 = vadd.f32 %v531, %v532
  %v534 = vrot.slane %v533, 1
  %v535 = vadd.f32 %v533, %v534
  %vm536 = vcmask 516096
  %537 = vst.msk [vmem:[%s3] sm:$0x1] %vm536, %v535
  %v538 = vmul.f32 %v443, %v443
  %v539 = vmul.f32 %v445, %v445
  %v540 = vmul.f32 %v448, %v448
  %v541 = vmul.f32 %v450, %v450
  %v542 = vmul.f32 %v453, %v453
  %v543 = vmul.f32 %v455, %v455
  %v544 = vmul.f32 %v458, %v458
  %v545 = vmul.f32 %v460, %v460
  %v546 = vmul.f32 %v463, %v463
  %v547 = vmul.f32 %v465, %v465
  %v548 = vmul.f32 %v468, %v468
  %v549 = vmul.f32 %v470, %v470
  %v550 = vmul.f32 %v473, %v473
  %v551 = vmul.f32 %v475, %v475
  %v552 = vmul.f32 %v478, %v478
  %v553 = vmul.f32 %v480, %v480
  %v554 = vsel %vm482, %v538, 0.0
  %v555 = vsel %vm482, %v539, 0.0
  %v556 = vadd.f32 %v554, %v555
  %v557 = vsel %vm482, %v540, 0.0
  %v558 = vadd.f32 %v556, %v557
  %v559 = vsel %vm482, %v541, 0.0
  %v560 = vadd.f32 %v558, %v559
  %v561 = vsel %vm482, %v542, 0.0
  %v562 = vadd.f32 %v560, %v561
  %v563 = vsel %vm482, %v543, 0.0
  %v564 = vadd.f32 %v562, %v563
  %v565 = vsel %vm482, %v544, 0.0
  %v566 = vadd.f32 %v564, %v565
  %v567 = vsel %vm482, %v545, 0.0
  %v568 = vadd.f32 %v566, %v567
  %v569 = vsel %vm482, %v546, 0.0
  %v570 = vadd.f32 %v568, %v569
  %v571 = vsel %vm482, %v547, 0.0
  %v572 = vadd.f32 %v570, %v571
  %v573 = vsel %vm482, %v548, 0.0
  %v574 = vadd.f32 %v572, %v573
  %v575 = vsel %vm482, %v549, 0.0
  %v576 = vadd.f32 %v574, %v575
  %v577 = vsel %vm482, %v550, 0.0
  %v578 = vadd.f32 %v576, %v577
  %v579 = vsel %vm482, %v551, 0.0
  %v580 = vadd.f32 %v578, %v579
  %v581 = vsel %vm482, %v552, 0.0
  %v582 = vadd.f32 %v580, %v581
  %v583 = vsel %vm482, %v553, 0.0
  %v584 = vadd.f32 %v582, %v583
  %v585 = vrot.slane %v584, 4
  %v586 = vadd.f32 %v584, %v585
  %v587 = vrot.slane %v586, 2
  %v588 = vadd.f32 %v586, %v587
  %v589 = vrot.slane %v588, 1
  %v590 = vadd.f32 %v588, %v589
  %591 = vst.msk [vmem:[%s3 + $0x1] sm:$0x1] %vm536, %v590
  // Predicated region
  $region10: #{generator_forward.13} parent=0 // pred_check
    _
  $region11: #{generator_forward.13} parent=0 // pred_check_branch
    %593 = sbr.rel (0) target = $region13
  $region12: #{generator_forward.13} parent=0 // pred_region
    _
  $region13: #{generator_forward.13} parent=0 // pred_fallthru
    _
  // Predicated region
  $region14: #{generator_forward.13} parent=0 // pred_check
    _
  $region15: #{generator_forward.13} parent=0 // pred_check_branch
    %595 = sbr.rel (0) target = $region17
  $region16: #{generator_forward.13} parent=0 // pred_region
    _
  $region17: #{generator_forward.13} parent=0 // pred_fallthru
    _
  // Predicated region
  $region18: #{generator_forward.13} parent=0 // pred_check
    _
  $region19: #{generator_forward.13} parent=0 // pred_check_branch
    %597 = sbr.rel (0) target = $region21
  $region20: #{generator_forward.13} parent=0 // pred_region
    _
  $region21: #{generator_forward.13} parent=0 // pred_fallthru
    _
  // Predicated region
  $region22: #{generator_forward.13} parent=0 // pred_check
    _
  $region23: #{generator_forward.13} parent=0 // pred_check_branch
    %599 = sbr.rel (0) target = $region25
  $region24: #{generator_forward.13} parent=0 // pred_region
    _
  $region25: #{generator_forward.13} parent=0 // pred_fallthru
    _

// kernel: generator_forward.14
$region0: #{generator_forward.14}
  #allocation0 [shape = 'u32[]', space=smem, size = 0x4, offset = 0x4, fixed_abs, tag = 'smem constant byte address 0x4 - core index']
  #allocation1 [shape = 'u32[72,128]{1,0:T(1,128)}', space=vmem, size = 0x9000, scoped, tag = 'internal scratch']
  %s0 = inlined_call_operand.vmem [shape: f32[128,64], index: 0, kind: input, shape index: {}]
  %s1 = inlined_call_operand.vmem [shape: f32[1,64], index: 1, kind: input, shape index: {}]
  %s2 = inlined_call_operand.vmem [shape: f32[1,64], index: 2, kind: input, shape index: {}]
  %s3 = inlined_call_operand.vmem [shape: f32[128,64], index: 3, kind: output, shape index: {}]
  %s4 = sld [smem:[#allocation0]]
  $region22: #{generator_forward.14} parent=0
    _
  %s6 = ssub.s32 1, %s4
  %s7 = scalar_select 0, %s6, %s4
  // Predicated region
  $region2: #{generator_forward.14} parent=0 // pred_check
    _
  $region3: #{generator_forward.14} parent=0 // pred_check_branch
    %9 = sbr.rel (0) target = $region5
  $region4: #{generator_forward.14} parent=0 // pred_region
    _
  $region5: #{generator_forward.14} parent=0 // pred_fallthru
    _
  // Predicated region
  $region6: #{generator_forward.14} parent=0 // pred_check
    _
  $region7: #{generator_forward.14} parent=0 // pred_check_branch
    %11 = sbr.rel (0) target = $region9
  $region8: #{generator_forward.14} parent=0 // pred_region
    _
  $region9: #{generator_forward.14} parent=0 // pred_fallthru
    _
  // Predicated region
  $region10: #{generator_forward.14} parent=0 // pred_check
    _
  $region11: #{generator_forward.14} parent=0 // pred_check_branch
    %13 = sbr.rel (0) target = $region13
  $region12: #{generator_forward.14} parent=0 // pred_region
    _
  $region13: #{generator_forward.14} parent=0 // pred_fallthru
    _
  %v14 = vld [vmem:[%s0] sm:$0xff]
  %v15 = vld [vmem:[%s0 + $0x8] sm:$0xff]
  %v16 = vld [vmem:[%s0 + $0x10] sm:$0xff]
  %v17 = vld [vmem:[%s0 + $0x18] sm:$0xff]
  %v18 = vld [vmem:[%s0 + $0x20] sm:$0xff]
  %v19 = vld [vmem:[%s0 + $0x28] sm:$0xff]
  %v20 = vld [vmem:[%s0 + $0x30] sm:$0xff]
  %v21 = vld [vmem:[%s0 + $0x38] sm:$0xff]
  %v22 = vld [vmem:[%s0 + $0x40] sm:$0xff]
  %v23 = vld [vmem:[%s0 + $0x48] sm:$0xff]
  %v24 = vld [vmem:[%s0 + $0x50] sm:$0xff]
  %v25 = vld [vmem:[%s0 + $0x58] sm:$0xff]
  %v26 = vld [vmem:[%s0 + $0x60] sm:$0xff]
  %v27 = vld [vmem:[%s0 + $0x68] sm:$0xff]
  %v28 = vld [vmem:[%s0 + $0x70] sm:$0xff]
  %v29 = vld [vmem:[%s0 + $0x78] sm:$0xff]
  %v30 = vld [vmem:[%s1] sm:$0x1]
  %v32 = vperm.slane %v30, 0
  %v34 = vmul.f32 %v14, %v32
  %v35 = vmul.f32 %v15, %v32
  %v36 = vmul.f32 %v16, %v32
  %v37 = vmul.f32 %v17, %v32
  %v38 = vmul.f32 %v18, %v32
  %v39 = vmul.f32 %v19, %v32
  %v40 = vmul.f32 %v20, %v32
  %v41 = vmul.f32 %v21, %v32
  %v42 = vmul.f32 %v22, %v32
  %v43 = vmul.f32 %v23, %v32
  %v44 = vmul.f32 %v24, %v32
  %v45 = vmul.f32 %v25, %v32
  %v46 = vmul.f32 %v26, %v32
  %v47 = vmul.f32 %v27, %v32
  %v48 = vmul.f32 %v28, %v32
  %v49 = vmul.f32 %v29, %v32
  %v50 = vld [vmem:[%s2] sm:$0x1]
  %v52 = vperm.slane %v50, 0
  %v54 = vadd.f32 %v34, %v52
  %v55 = vadd.f32 %v35, %v52
  %v56 = vadd.f32 %v36, %v52
  %v57 = vadd.f32 %v37, %v52
  %v58 = vadd.f32 %v38, %v52
  %v59 = vadd.f32 %v39, %v52
  %v60 = vadd.f32 %v40, %v52
  %v61 = vadd.f32 %v41, %v52
  %v62 = vadd.f32 %v42, %v52
  %v63 = vadd.f32 %v43, %v52
  %v64 = vadd.f32 %v44, %v52
  %v65 = vadd.f32 %v45, %v52
  %v66 = vadd.f32 %v46, %v52
  %v67 = vadd.f32 %v47, %v52
  %v68 = vadd.f32 %v48, %v52
  %v69 = vadd.f32 %v49, %v52
  %v70 = vmax.f32 %v54, 0.0
  %v71 = vmax.f32 %v55, 0.0
  %v72 = vmax.f32 %v56, 0.0
  %v73 = vmax.f32 %v57, 0.0
  %v74 = vmax.f32 %v58, 0.0
  %v75 = vmax.f32 %v59, 0.0
  %v76 = vmax.f32 %v60, 0.0
  %v77 = vmax.f32 %v61, 0.0
  %v78 = vmax.f32 %v62, 0.0
  %v79 = vmax.f32 %v63, 0.0
  %v80 = vmax.f32 %v64, 0.0
  %v81 = vmax.f32 %v65, 0.0
  %v82 = vmax.f32 %v66, 0.0
  %v83 = vmax.f32 %v67, 0.0
  %v84 = vmax.f32 %v68, 0.0
  %v85 = vmax.f32 %v69, 0.0
  %vm86 = vcmask 523264
  %87 = vst.msk [vmem:[%s3] sm:$0xff] %vm86, %v70
  %88 = vst.msk [vmem:[%s3 + $0x8] sm:$0xff] %vm86, %v71
  %89 = vst.msk [vmem:[%s3 + $0x10] sm:$0xff] %vm86, %v72
  %90 = vst.msk [vmem:[%s3 + $0x18] sm:$0xff] %vm86, %v73
  %91 = vst.msk [vmem:[%s3 + $0x20] sm:$0xff] %vm86, %v74
  %92 = vst.msk [vmem:[%s3 + $0x28] sm:$0xff] %vm86, %v75
  %93 = vst.msk [vmem:[%s3 + $0x30] sm:$0xff] %vm86, %v76
  %94 = vst.msk [vmem:[%s3 + $0x38] sm:$0xff] %vm86, %v77
  %95 = vst.msk [vmem:[%s3 + $0x40] sm:$0xff] %vm86, %v78
  %96 = vst.msk [vmem:[%s3 + $0x48] sm:$0xff] %vm86, %v79
  %97 = vst.msk [vmem:[%s3 + $0x50] sm:$0xff] %vm86, %v80
  %98 = vst.msk [vmem:[%s3 + $0x58] sm:$0xff] %vm86, %v81
  %99 = vst.msk [vmem:[%s3 + $0x60] sm:$0xff] %vm86, %v82
  %100 = vst.msk [vmem:[%s3 + $0x68] sm:$0xff] %vm86, %v83
  %101 = vst.msk [vmem:[%s3 + $0x70] sm:$0xff] %vm86, %v84
  %102 = vst.msk [vmem:[%s3 + $0x78] sm:$0xff] %vm86, %v85
  // Predicated region
  $region14: #{generator_forward.14} parent=0 // pred_check
    _
  $region15: #{generator_forward.14} parent=0 // pred_check_branch
    %104 = sbr.rel (0) target = $region17
  $region16: #{generator_forward.14} parent=0 // pred_region
    _
  $region17: #{generator_forward.14} parent=0 // pred_fallthru
    _
  // Predicated region
  $region18: #{generator_forward.14} parent=0 // pred_check
    _
  $region19: #{generator_forward.14} parent=0 // pred_check_branch
    %106 = sbr.rel (0) target = $region21
  $region20: #{generator_forward.14} parent=0 // pred_region
    _
  $region21: #{generator_forward.14} parent=0 // pred_fallthru
    _

// kernel: tile.78
$region0: #{tile.78}
  #allocation0 [shape = 's32[1]{0}', space=sflag, size = 0x4, scoped, tag = 'scoped memory for tile.78']
  %s0 = inlined_call_operand.vmem [shape: f32[8], index: 0, kind: input, shape index: {}]
  %s1 = inlined_call_operand.vmem [shape: f32[4,8], index: 1, kind: output, shape index: {}]
  // Predicated region
  $region2: #{tile.78} parent=0 // pred_check
    _
  $region3: #{tile.78} parent=0 // pred_check_branch
    %3 = sbr.rel (0) target = $region5
  $region4: #{tile.78} parent=0 // pred_region
    _
  $region5: #{tile.78} parent=0 // pred_fallthru
    _
  %v4 = vld [vmem:[%s0] ss:$0 sm:$0xff]
  %5 = vst [vmem:[%s1] sm:$0xf] %v4

// kernel: tile.79
$region0: #{tile.79}
  %s0 = inlined_call_operand.vmem [shape: f32[4,8], index: 0, kind: input, shape index: {}]
  %s1 = inlined_call_operand.vmem [shape: f32[1,32], index: 1, kind: output, shape index: {}]
  $region1: #{tile.79} parent=0
    #allocation0 [shape = 'u8[4096]{0}', space=vmem, size = 0x1000, scoped, tag = 'scoped mem for output reshape']
    #allocation1 [shape = 'u8[4096]{0}', space=vmem, size = 0x1000, scoped, tag = 'scoped mem for input reshape']
    %s3 = ssub.s32 16, 1
    %v4 = vld [vmem:[%s0] sm:%s3]
    %5 = vst [vmem:[#allocation1] sm:%s3] %v4
    %v6 = vld [vmem:[#allocation1] sm:$0x1]
    %vm7 = vcmask 64512
    %8 = vst.msk [vmem:[#allocation0] sm:$0x1] %vm7, %v6
    %s9 = scalar_lea.vmem [#allocation1], 3
    %v10 = vld [vmem:[%s9] sm:$0x1]
    %11 = vrot.lane.b32.xlu0 %v10, 24
    %v12 = vpop.permute.xlu0 %11
    %vm13 = vcmask 261312
    %14 = vst.msk [vmem:[#allocation0] sm:$0x1] %vm13, %v12
    %s15 = scalar_lea.vmem [#allocation1], 2
    %v16 = vld [vmem:[%s15] sm:$0x1]
    %17 = vrot.lane.b32.xlu0 %v16, 16
    %v18 = vpop.permute.xlu0 %17
    %vm19 = vcmask 195712
    %20 = vst.msk [vmem:[#allocation0] sm:$0x1] %vm19, %v18
    %s21 = scalar_lea.vmem [#allocation1], 1
    %v22 = vld [vmem:[%s21] sm:$0x1]
    %23 = vrot.lane.b32.xlu0 %v22, 8
    %v24 = vpop.permute.xlu0 %23
    %vm25 = vcmask 130112
    %26 = vst.msk [vmem:[#allocation0] sm:$0x1] %vm25, %v24
    %s28 = ssub.s32 2, 1
    %v29 = vld [vmem:[#allocation0] sm:%s28]
    %s31 = ssub.s32 2, 1
    %32 = vst [vmem:[%s1] sm:%s31] %v29

// kernel: generator_forward.16
$region0: #{generator_forward.16}
  #allocation0 [shape = 'u32[]', space=smem, size = 0x4, offset = 0x4, fixed_abs, tag = 'smem constant byte address 0x4 - core index']
  #allocation1 [shape = 'u32[72,128]{1,0:T(1,128)}', space=vmem, size = 0x9000, scoped, tag = 'internal scratch']
  %s0 = inlined_call_operand.vmem [shape: f32[512,32], index: 0, kind: input, shape index: {}]
  %s1 = inlined_call_operand.vmem [shape: f32[1,32], index: 1, kind: input, shape index: {}]
  %s2 = inlined_call_operand.vmem [shape: f32[1,32], index: 2, kind: input, shape index: {}]
  %s3 = inlined_call_operand.vmem [shape: f32[512,32], index: 3, kind: output, shape index: {}]
  %s4 = sld [smem:[#allocation0]]
  $region22: #{generator_forward.16} parent=0
    _
  %s6 = ssub.s32 1, %s4
  %s7 = scalar_select 0, %s6, %s4
  // Predicated region
  $region2: #{generator_forward.16} parent=0 // pred_check
    _
  $region3: #{generator_forward.16} parent=0 // pred_check_branch
    %9 = sbr.rel (0) target = $region5
  $region4: #{generator_forward.16} parent=0 // pred_region
    _
  $region5: #{generator_forward.16} parent=0 // pred_fallthru
    _
  // Predicated region
  $region6: #{generator_forward.16} parent=0 // pred_check
    _
  $region7: #{generator_forward.16} parent=0 // pred_check_branch
    %11 = sbr.rel (0) target = $region9
  $region8: #{generator_forward.16} parent=0 // pred_region
    _
  $region9: #{generator_forward.16} parent=0 // pred_fallthru
    _
  // Predicated region
  $region10: #{generator_forward.16} parent=0 // pred_check
    _
  $region11: #{generator_forward.16} parent=0 // pred_check_branch
    %13 = sbr.rel (0) target = $region13
  $region12: #{generator_forward.16} parent=0 // pred_region
    _
  $region13: #{generator_forward.16} parent=0 // pred_fallthru
    _
  %v14 = vld [vmem:[%s0] sm:$0xff]
  %v15 = vld [vmem:[%s0 + $0x8] sm:$0xff]
  %v16 = vld [vmem:[%s0 + $0x10] sm:$0xff]
  %v17 = vld [vmem:[%s0 + $0x18] sm:$0xff]
  %v18 = vld [vmem:[%s0 + $0x20] sm:$0xff]
  %v19 = vld [vmem:[%s0 + $0x28] sm:$0xff]
  %v20 = vld [vmem:[%s0 + $0x30] sm:$0xff]
  %v21 = vld [vmem:[%s0 + $0x38] sm:$0xff]
  %v22 = vld [vmem:[%s0 + $0x40] sm:$0xff]
  %v23 = vld [vmem:[%s0 + $0x48] sm:$0xff]
  %v24 = vld [vmem:[%s0 + $0x50] sm:$0xff]
  %v25 = vld [vmem:[%s0 + $0x58] sm:$0xff]
  %v26 = vld [vmem:[%s0 + $0x60] sm:$0xff]
  %v27 = vld [vmem:[%s0 + $0x68] sm:$0xff]
  %v28 = vld [vmem:[%s0 + $0x70] sm:$0xff]
  %v29 = vld [vmem:[%s0 + $0x78] sm:$0xff]
  %v30 = vld [vmem:[%s0 + $0x80] sm:$0xff]
  %v31 = vld [vmem:[%s0 + $0x88] sm:$0xff]
  %v32 = vld [vmem:[%s0 + $0x90] sm:$0xff]
  %v33 = vld [vmem:[%s0 + $0x98] sm:$0xff]
  %v34 = vld [vmem:[%s0 + $0xa0] sm:$0xff]
  %v35 = vld [vmem:[%s0 + $0xa8] sm:$0xff]
  %v36 = vld [vmem:[%s0 + $0xb0] sm:$0xff]
  %v37 = vld [vmem:[%s0 + $0xb8] sm:$0xff]
  %v38 = vld [vmem:[%s0 + $0xc0] sm:$0xff]
  %v39 = vld [vmem:[%s0 + $0xc8] sm:$0xff]
  %v40 = vld [vmem:[%s0 + $0xd0] sm:$0xff]
  %v41 = vld [vmem:[%s0 + $0xd8] sm:$0xff]
  %v42 = vld [vmem:[%s0 + $0xe0] sm:$0xff]
  %v43 = vld [vmem:[%s0 + $0xe8] sm:$0xff]
  %v44 = vld [vmem:[%s0 + $0xf0] sm:$0xff]
  %v45 = vld [vmem:[%s0 + $0xf8] sm:$0xff]
  %v46 = vld [vmem:[%s0 + $0x100] sm:$0xff]
  %v47 = vld [vmem:[%s0 + $0x108] sm:$0xff]
  %v48 = vld [vmem:[%s0 + $0x110] sm:$0xff]
  %v49 = vld [vmem:[%s0 + $0x118] sm:$0xff]
  %v50 = vld [vmem:[%s0 + $0x120] sm:$0xff]
  %v51 = vld [vmem:[%s0 + $0x128] sm:$0xff]
  %v52 = vld [vmem:[%s0 + $0x130] sm:$0xff]
  %v53 = vld [vmem:[%s0 + $0x138] sm:$0xff]
  %v54 = vld [vmem:[%s0 + $0x140] sm:$0xff]
  %v55 = vld [vmem:[%s0 + $0x148] sm:$0xff]
  %v56 = vld [vmem:[%s0 + $0x150] sm:$0xff]
  %v57 = vld [vmem:[%s0 + $0x158] sm:$0xff]
  %v58 = vld [vmem:[%s0 + $0x160] sm:$0xff]
  %v59 = vld [vmem:[%s0 + $0x168] sm:$0xff]
  %v60 = vld [vmem:[%s0 + $0x170] sm:$0xff]
  %v61 = vld [vmem:[%s0 + $0x178] sm:$0xff]
  %v62 = vld [vmem:[%s0 + $0x180] sm:$0xff]
  %v63 = vld [vmem:[%s0 + $0x188] sm:$0xff]
  %v64 = vld [vmem:[%s0 + $0x190] sm:$0xff]
  %v65 = vld [vmem:[%s0 + $0x198] sm:$0xff]
  %v66 = vld [vmem:[%s0 + $0x1a0] sm:$0xff]
  %v67 = vld [vmem:[%s0 + $0x1a8] sm:$0xff]
  %v68 = vld [vmem:[%s0 + $0x1b0] sm:$0xff]
  %v69 = vld [vmem:[%s0 + $0x1b8] sm:$0xff]
  %v70 = vld [vmem:[%s0 + $0x1c0] sm:$0xff]
  %v71 = vld [vmem:[%s0 + $0x1c8] sm:$0xff]
  %v72 = vld [vmem:[%s0 + $0x1d0] sm:$0xff]
  %v73 = vld [vmem:[%s0 + $0x1d8] sm:$0xff]
  %v74 = vld [vmem:[%s0 + $0x1e0] sm:$0xff]
  %v75 = vld [vmem:[%s0 + $0x1e8] sm:$0xff]
  %v76 = vld [vmem:[%s0 + $0x1f0] sm:$0xff]
  %v77 = vld [vmem:[%s0 + $0x1f8] sm:$0xff]
  %v78 = vld [vmem:[%s1] sm:$0x1]
  %v80 = vperm.slane %v78, 0
  %v82 = vmul.f32 %v14, %v80
  %v83 = vmul.f32 %v15, %v80
  %v84 = vmul.f32 %v16, %v80
  %v85 = vmul.f32 %v17, %v80
  %v86 = vmul.f32 %v18, %v80
  %v87 = vmul.f32 %v19, %v80
  %v88 = vmul.f32 %v20, %v80
  %v89 = vmul.f32 %v21, %v80
  %v90 = vmul.f32 %v22, %v80
  %v91 = vmul.f32 %v23, %v80
  %v92 = vmul.f32 %v24, %v80
  %v93 = vmul.f32 %v25, %v80
  %v94 = vmul.f32 %v26, %v80
  %v95 = vmul.f32 %v27, %v80
  %v96 = vmul.f32 %v28, %v80
  %v97 = vmul.f32 %v29, %v80
  %v98 = vmul.f32 %v30, %v80
  %v99 = vmul.f32 %v31, %v80
  %v100 = vmul.f32 %v32, %v80
  %v101 = vmul.f32 %v33, %v80
  %v102 = vmul.f32 %v34, %v80
  %v103 = vmul.f32 %v35, %v80
  %v104 = vmul.f32 %v36, %v80
  %v105 = vmul.f32 %v37, %v80
  %v106 = vmul.f32 %v38, %v80
  %v107 = vmul.f32 %v39, %v80
  %v108 = vmul.f32 %v40, %v80
  %v109 = vmul.f32 %v41, %v80
  %v110 = vmul.f32 %v42, %v80
  %v111 = vmul.f32 %v43, %v80
  %v112 = vmul.f32 %v44, %v80
  %v113 = vmul.f32 %v45, %v80
  %v114 = vmul.f32 %v46, %v80
  %v115 = vmul.f32 %v47, %v80
  %v116 = vmul.f32 %v48, %v80
  %v117 = vmul.f32 %v49, %v80
  %v118 = vmul.f32 %v50, %v80
  %v119 = vmul.f32 %v51, %v80
  %v120 = vmul.f32 %v52, %v80
  %v121 = vmul.f32 %v53, %v80
  %v122 = vmul.f32 %v54, %v80
  %v123 = vmul.f32 %v55, %v80
  %v124 = vmul.f32 %v56, %v80
  %v125 = vmul.f32 %v57, %v80
  %v126 = vmul.f32 %v58, %v80
  %v127 = vmul.f32 %v59, %v80
  %v128 = vmul.f32 %v60, %v80
  %v129 = vmul.f32 %v61, %v80
  %v130 = vmul.f32 %v62, %v80
  %v131 = vmul.f32 %v63, %v80
  %v132 = vmul.f32 %v64, %v80
  %v133 = vmul.f32 %v65, %v80
  %v134 = vmul.f32 %v66, %v80
  %v135 = vmul.f32 %v67, %v80
  %v136 = vmul.f32 %v68, %v80
  %v137 = vmul.f32 %v69, %v80
  %v138 = vmul.f32 %v70, %v80
  %v139 = vmul.f32 %v71, %v80
  %v140 = vmul.f32 %v72, %v80
  %v141 = vmul.f32 %v73, %v80
  %v142 = vmul.f32 %v74, %v80
  %v143 = vmul.f32 %v75, %v80
  %v144 = vmul.f32 %v76, %v80
  %v145 = vmul.f32 %v77, %v80
  %v146 = vld [vmem:[%s2] sm:$0x1]
  %v148 = vperm.slane %v146, 0
  %v150 = vadd.f32 %v82, %v148
  %v151 = vadd.f32 %v83, %v148
  %v152 = vadd.f32 %v84, %v148
  %v153 = vadd.f32 %v85, %v148
  %v154 = vadd.f32 %v86, %v148
  %v155 = vadd.f32 %v87, %v148
  %v156 = vadd.f32 %v88, %v148
  %v157 = vadd.f32 %v89, %v148
  %v158 = vadd.f32 %v90, %v148
  %v159 = vadd.f32 %v91, %v148
  %v160 = vadd.f32 %v92, %v148
  %v161 = vadd.f32 %v93, %v148
  %v162 = vadd.f32 %v94, %v148
  %v163 = vadd.f32 %v95, %v148
  %v164 = vadd.f32 %v96, %v148
  %v165 = vadd.f32 %v97, %v148
  %v166 = vadd.f32 %v98, %v148
  %v167 = vadd.f32 %v99, %v148
  %v168 = vadd.f32 %v100, %v148
  %v169 = vadd.f32 %v101, %v148
  %v170 = vadd.f32 %v102, %v148
  %v171 = vadd.f32 %v103, %v148
  %v172 = vadd.f32 %v104, %v148
  %v173 = vadd.f32 %v105, %v148
  %v174 = vadd.f32 %v106, %v148
  %v175 = vadd.f32 %v107, %v148
  %v176 = vadd.f32 %v108, %v148
  %v177 = vadd.f32 %v109, %v148
  %v178 = vadd.f32 %v110, %v148
  %v179 = vadd.f32 %v111, %v148
  %v180 = vadd.f32 %v112, %v148
  %v181 = vadd.f32 %v113, %v148
  %v182 = vadd.f32 %v114, %v148
  %v183 = vadd.f32 %v115, %v148
  %v184 = vadd.f32 %v116, %v148
  %v185 = vadd.f32 %v117, %v148
  %v186 = vadd.f32 %v118, %v148
  %v187 = vadd.f32 %v119, %v148
  %v188 = vadd.f32 %v120, %v148
  %v189 = vadd.f32 %v121, %v148
  %v190 = vadd.f32 %v122, %v148
  %v191 = vadd.f32 %v123, %v148
  %v192 = vadd.f32 %v124, %v148
  %v193 = vadd.f32 %v125, %v148
  %v194 = vadd.f32 %v126, %v148
  %v195 = vadd.f32 %v127, %v148
  %v196 = vadd.f32 %v128, %v148
  %v197 = vadd.f32 %v129, %v148
  %v198 = vadd.f32 %v130, %v148
  %v199 = vadd.f32 %v131, %v148
  %v200 = vadd.f32 %v132, %v148
  %v201 = vadd.f32 %v133, %v148
  %v202 = vadd.f32 %v134, %v148
  %v203 = vadd.f32 %v135, %v148
  %v204 = vadd.f32 %v136, %v148
  %v205 = vadd.f32 %v137, %v148
  %v206 = vadd.f32 %v138, %v148
  %v207 = vadd.f32 %v139, %v148
  %v208 = vadd.f32 %v140, %v148
  %v209 = vadd.f32 %v141, %v148
  %v210 = vadd.f32 %v142, %v148
  %v211 = vadd.f32 %v143, %v148
  %v212 = vadd.f32 %v144, %v148
  %v213 = vadd.f32 %v145, %v148
  %v214 = vmax.f32 %v150, 0.0
  %v215 = vmax.f32 %v151, 0.0
  %v216 = vmax.f32 %v152, 0.0
  %v217 = vmax.f32 %v153, 0.0
  %v218 = vmax.f32 %v154, 0.0
  %v219 = vmax.f32 %v155, 0.0
  %v220 = vmax.f32 %v156, 0.0
  %v221 = vmax.f32 %v157, 0.0
  %v222 = vmax.f32 %v158, 0.0
  %v223 = vmax.f32 %v159, 0.0
  %v224 = vmax.f32 %v160, 0.0
  %v225 = vmax.f32 %v161, 0.0
  %v226 = vmax.f32 %v162, 0.0
  %v227 = vmax.f32 %v163, 0.0
  %v228 = vmax.f32 %v164, 0.0
  %v229 = vmax.f32 %v165, 0.0
  %v230 = vmax.f32 %v166, 0.0
  %v231 = vmax.f32 %v167, 0.0
  %v232 = vmax.f32 %v168, 0.0
  %v233 = vmax.f32 %v169, 0.0
  %v234 = vmax.f32 %v170, 0.0
  %v235 = vmax.f32 %v171, 0.0
  %v236 = vmax.f32 %v172, 0.0
  %v237 = vmax.f32 %v173, 0.0
  %v238 = vmax.f32 %v174, 0.0
  %v239 = vmax.f32 %v175, 0.0
  %v240 = vmax.f32 %v176, 0.0
  %v241 = vmax.f32 %v177, 0.0
  %v242 = vmax.f32 %v178, 0.0
  %v243 = vmax.f32 %v179, 0.0
  %v244 = vmax.f32 %v180, 0.0
  %v245 = vmax.f32 %v181, 0.0
  %v246 = vmax.f32 %v182, 0.0
  %v247 = vmax.f32 %v183, 0.0
  %v248 = vmax.f32 %v184, 0.0
  %v249 = vmax.f32 %v185, 0.0
  %v250 = vmax.f32 %v186, 0.0
  %v251 = vmax.f32 %v187, 0.0
  %v252 = vmax.f32 %v188, 0.0
  %v253 = vmax.f32 %v189, 0.0
  %v254 = vmax.f32 %v190, 0.0
  %v255 = vmax.f32 %v191, 0.0
  %v256 = vmax.f32 %v192, 0.0
  %v257 = vmax.f32 %v193, 0.0
  %v258 = vmax.f32 %v194, 0.0
  %v259 = vmax.f32 %v195, 0.0
  %v260 = vmax.f32 %v196, 0.0
  %v261 = vmax.f32 %v197, 0.0
  %v262 = vmax.f32 %v198, 0.0
  %v263 = vmax.f32 %v199, 0.0
  %v264 = vmax.f32 %v200, 0.0
  %v265 = vmax.f32 %v201, 0.0
  %v266 = vmax.f32 %v202, 0.0
  %v267 = vmax.f32 %v203, 0.0
  %v268 = vmax.f32 %v204, 0.0
  %v269 = vmax.f32 %v205, 0.0
  %v270 = vmax.f32 %v206, 0.0
  %v271 = vmax.f32 %v207, 0.0
  %v272 = vmax.f32 %v208, 0.0
  %v273 = vmax.f32 %v209, 0.0
  %v274 = vmax.f32 %v210, 0.0
  %v275 = vmax.f32 %v211, 0.0
  %v276 = vmax.f32 %v212, 0.0
  %v277 = vmax.f32 %v213, 0.0
  %vm278 = vcmask 261120
  %279 = vst.msk [vmem:[%s3] sm:$0xff] %vm278, %v214
  %280 = vst.msk [vmem:[%s3 + $0x8] sm:$0xff] %vm278, %v215
  %281 = vst.msk [vmem:[%s3 + $0x10] sm:$0xff] %vm278, %v216
  %282 = vst.msk [vmem:[%s3 + $0x18] sm:$0xff] %vm278, %v217
  %283 = vst.msk [vmem:[%s3 + $0x20] sm:$0xff] %vm278, %v218
  %284 = vst.msk [vmem:[%s3 + $0x28] sm:$0xff] %vm278, %v219
  %285 = vst.msk [vmem:[%s3 + $0x30] sm:$0xff] %vm278, %v220
  %286 = vst.msk [vmem:[%s3 + $0x38] sm:$0xff] %vm278, %v221
  %287 = vst.msk [vmem:[%s3 + $0x40] sm:$0xff] %vm278, %v222
  %288 = vst.msk [vmem:[%s3 + $0x48] sm:$0xff] %vm278, %v223
  %289 = vst.msk [vmem:[%s3 + $0x50] sm:$0xff] %vm278, %v224
  %290 = vst.msk [vmem:[%s3 + $0x58] sm:$0xff] %vm278, %v225
  %291 = vst.msk [vmem:[%s3 + $0x60] sm:$0xff] %vm278, %v226
  %292 = vst.msk [vmem:[%s3 + $0x68] sm:$0xff] %vm278, %v227
  %293 = vst.msk [vmem:[%s3 + $0x70] sm:$0xff] %vm278, %v228
  %294 = vst.msk [vmem:[%s3 + $0x78] sm:$0xff] %vm278, %v229
  %295 = vst.msk [vmem:[%s3 + $0x80] sm:$0xff] %vm278, %v230
  %296 = vst.msk [vmem:[%s3 + $0x88] sm:$0xff] %vm278, %v231
  %297 = vst.msk [vmem:[%s3 + $0x90] sm:$0xff] %vm278, %v232
  %298 = vst.msk [vmem:[%s3 + $0x98] sm:$0xff] %vm278, %v233
  %299 = vst.msk [vmem:[%s3 + $0xa0] sm:$0xff] %vm278, %v234
  %300 = vst.msk [vmem:[%s3 + $0xa8] sm:$0xff] %vm278, %v235
  %301 = vst.msk [vmem:[%s3 + $0xb0] sm:$0xff] %vm278, %v236
  %302 = vst.msk [vmem:[%s3 + $0xb8] sm:$0xff] %vm278, %v237
  %303 = vst.msk [vmem:[%s3 + $0xc0] sm:$0xff] %vm278, %v238
  %304 = vst.msk [vmem:[%s3 + $0xc8] sm:$0xff] %vm278, %v239
  %305 = vst.msk [vmem:[%s3 + $0xd0] sm:$0xff] %vm278, %v240
  %306 = vst.msk [vmem:[%s3 + $0xd8] sm:$0xff] %vm278, %v241
  %307 = vst.msk [vmem:[%s3 + $0xe0] sm:$0xff] %vm278, %v242
  %308 = vst.msk [vmem:[%s3 + $0xe8] sm:$0xff] %vm278, %v243
  %309 = vst.msk [vmem:[%s3 + $0xf0] sm:$0xff] %vm278, %v244
  %310 = vst.msk [vmem:[%s3 + $0xf8] sm:$0xff] %vm278, %v245
  %311 = vst.msk [vmem:[%s3 + $0x100] sm:$0xff] %vm278, %v246
  %312 = vst.msk [vmem:[%s3 + $0x108] sm:$0xff] %vm278, %v247
  %313 = vst.msk [vmem:[%s3 + $0x110] sm:$0xff] %vm278, %v248
  %314 = vst.msk [vmem:[%s3 + $0x118] sm:$0xff] %vm278, %v249
  %315 = vst.msk [vmem:[%s3 + $0x120] sm:$0xff] %vm278, %v250
  %316 = vst.msk [vmem:[%s3 + $0x128] sm:$0xff] %vm278, %v251
  %317 = vst.msk [vmem:[%s3 + $0x130] sm:$0xff] %vm278, %v252
  %318 = vst.msk [vmem:[%s3 + $0x138] sm:$0xff] %vm278, %v253
  %319 = vst.msk [vmem:[%s3 + $0x140] sm:$0xff] %vm278, %v254
  %320 = vst.msk [vmem:[%s3 + $0x148] sm:$0xff] %vm278, %v255
  %321 = vst.msk [vmem:[%s3 + $0x150] sm:$0xff] %vm278, %v256
  %322 = vst.msk [vmem:[%s3 + $0x158] sm:$0xff] %vm278, %v257
  %323 = vst.msk [vmem:[%s3 + $0x160] sm:$0xff] %vm278, %v258
  %324 = vst.msk [vmem:[%s3 + $0x168] sm:$0xff] %vm278, %v259
  %325 = vst.msk [vmem:[%s3 + $0x170] sm:$0xff] %vm278, %v260
  %326 = vst.msk [vmem:[%s3 + $0x178] sm:$0xff] %vm278, %v261
  %327 = vst.msk [vmem:[%s3 + $0x180] sm:$0xff] %vm278, %v262
  %328 = vst.msk [vmem:[%s3 + $0x188] sm:$0xff] %vm278, %v263
  %329 = vst.msk [vmem:[%s3 + $0x190] sm:$0xff] %vm278, %v264
  %330 = vst.msk [vmem:[%s3 + $0x198] sm:$0xff] %vm278, %v265
  %331 = vst.msk [vmem:[%s3 + $0x1a0] sm:$0xff] %vm278, %v266
  %332 = vst.msk [vmem:[%s3 + $0x1a8] sm:$0xff] %vm278, %v267
  %333 = vst.msk [vmem:[%s3 + $0x1b0] sm:$0xff] %vm278, %v268
  %334 = vst.msk [vmem:[%s3 + $0x1b8] sm:$0xff] %vm278, %v269
  %335 = vst.msk [vmem:[%s3 + $0x1c0] sm:$0xff] %vm278, %v270
  %336 = vst.msk [vmem:[%s3 + $0x1c8] sm:$0xff] %vm278, %v271
  %337 = vst.msk [vmem:[%s3 + $0x1d0] sm:$0xff] %vm278, %v272
  %338 = vst.msk [vmem:[%s3 + $0x1d8] sm:$0xff] %vm278, %v273
  %339 = vst.msk [vmem:[%s3 + $0x1e0] sm:$0xff] %vm278, %v274
  %340 = vst.msk [vmem:[%s3 + $0x1e8] sm:$0xff] %vm278, %v275
  %341 = vst.msk [vmem:[%s3 + $0x1f0] sm:$0xff] %vm278, %v276
  %342 = vst.msk [vmem:[%s3 + $0x1f8] sm:$0xff] %vm278, %v277
  // Predicated region
  $region14: #{generator_forward.16} parent=0 // pred_check
    _
  $region15: #{generator_forward.16} parent=0 // pred_check_branch
    %344 = sbr.rel (0) target = $region17
  $region16: #{generator_forward.16} parent=0 // pred_region
    _
  $region17: #{generator_forward.16} parent=0 // pred_fallthru
    _
  // Predicated region
  $region18: #{generator_forward.16} parent=0 // pred_check
    _
  $region19: #{generator_forward.16} parent=0 // pred_check_branch
    %346 = sbr.rel (0) target = $region21
  $region20: #{generator_forward.16} parent=0 // pred_region
    _
  $region21: #{generator_forward.16} parent=0 // pred_fallthru
    _

// kernel: generator_forward.15
$region0: #{generator_forward.15}
  #allocation0 [shape = 'u32[]', space=smem, size = 0x4, offset = 0x4, fixed_abs, tag = 'smem constant byte address 0x4 - core index']
  #allocation1 [shape = 'u32[72,128]{1,0:T(1,128)}', space=vmem, size = 0x9000, scoped, tag = 'internal scratch']
  %s0 = inlined_call_operand.vmem [shape: bf16[512,144], index: 0, kind: input, shape index: {}]
  %s1 = inlined_call_operand.vmem [shape: bf16[144,32], index: 1, kind: input, shape index: {}]
  %s2 = inlined_call_operand.vmem [shape: f32[512,32], index: 2, kind: output, shape index: {0}]
  %s3 = inlined_call_operand.vmem [shape: f32[8,32], index: 3, kind: output, shape index: {1}]
  %4 = xla_tuple %s2, %s3
  %s5 = sld [smem:[#allocation0]]
  $region26: #{generator_forward.15} parent=0
    _
  %s7 = ssub.s32 1, %s5
  %s8 = scalar_select 0, %s7, %s5
  // Predicated region
  $region2: #{generator_forward.15} parent=0 // pred_check
    _
  $region3: #{generator_forward.15} parent=0 // pred_check_branch
    %10 = sbr.rel (0) target = $region5
  $region4: #{generator_forward.15} parent=0 // pred_region
    _
  $region5: #{generator_forward.15} parent=0 // pred_fallthru
    _
  // Predicated region
  $region6: #{generator_forward.15} parent=0 // pred_check
    _
  $region7: #{generator_forward.15} parent=0 // pred_check_branch
    %12 = sbr.rel (0) target = $region9
  $region8: #{generator_forward.15} parent=0 // pred_region
    _
  $region9: #{generator_forward.15} parent=0 // pred_fallthru
    _
  %v14 = vld [vmem:[%s0] sm:$0xff]
  %v15 = vld [vmem:[%s0 + $0x8] sm:$0xff]
  %v16 = vld [vmem:[%s0 + $0x10] sm:$0xff]
  %v17 = vld [vmem:[%s0 + $0x18] sm:$0xff]
  %v18 = vld [vmem:[%s0 + $0x20] sm:$0xff]
  %v19 = vld [vmem:[%s0 + $0x28] sm:$0xff]
  %v20 = vld [vmem:[%s0 + $0x30] sm:$0xff]
  %v21 = vld [vmem:[%s0 + $0x38] sm:$0xff]
  %v22 = vld [vmem:[%s0 + $0x40] sm:$0xff]
  %v23 = vld [vmem:[%s0 + $0x48] sm:$0xff]
  %v24 = vld [vmem:[%s0 + $0x50] sm:$0xff]
  %v25 = vld [vmem:[%s0 + $0x58] sm:$0xff]
  %v26 = vld [vmem:[%s0 + $0x60] sm:$0xff]
  %v27 = vld [vmem:[%s0 + $0x68] sm:$0xff]
  %v28 = vld [vmem:[%s0 + $0x70] sm:$0xff]
  %v29 = vld [vmem:[%s0 + $0x78] sm:$0xff]
  %v30 = vld [vmem:[%s0 + $0x80] sm:$0xff]
  %v31 = vld [vmem:[%s0 + $0x88] sm:$0xff]
  %v32 = vld [vmem:[%s0 + $0x90] sm:$0xff]
  %v33 = vld [vmem:[%s0 + $0x98] sm:$0xff]
  %v34 = vld [vmem:[%s0 + $0xa0] sm:$0xff]
  %v35 = vld [vmem:[%s0 + $0xa8] sm:$0xff]
  %v36 = vld [vmem:[%s0 + $0xb0] sm:$0xff]
  %v37 = vld [vmem:[%s0 + $0xb8] sm:$0xff]
  %v38 = vld [vmem:[%s0 + $0xc0] sm:$0xff]
  %v39 = vld [vmem:[%s0 + $0xc8] sm:$0xff]
  %v40 = vld [vmem:[%s0 + $0xd0] sm:$0xff]
  %v41 = vld [vmem:[%s0 + $0xd8] sm:$0xff]
  %v42 = vld [vmem:[%s0 + $0xe0] sm:$0xff]
  %v43 = vld [vmem:[%s0 + $0xe8] sm:$0xff]
  %v44 = vld [vmem:[%s0 + $0xf0] sm:$0xff]
  %v45 = vld [vmem:[%s0 + $0xf8] sm:$0xff]
  %v46 = vld [vmem:[%s0 + $0x100] sm:$0xff]
  %v47 = vld [vmem:[%s0 + $0x108] sm:$0xff]
  %v48 = vld [vmem:[%s0 + $0x110] sm:$0xff]
  %v49 = vld [vmem:[%s0 + $0x118] sm:$0xff]
  %v50 = vld [vmem:[%s0 + $0x120] sm:$0xff]
  %v51 = vld [vmem:[%s0 + $0x128] sm:$0xff]
  %v52 = vld [vmem:[%s0 + $0x130] sm:$0xff]
  %v53 = vld [vmem:[%s0 + $0x138] sm:$0xff]
  %v54 = vld [vmem:[%s0 + $0x140] sm:$0xff]
  %v55 = vld [vmem:[%s0 + $0x148] sm:$0xff]
  %v56 = vld [vmem:[%s0 + $0x150] sm:$0xff]
  %v57 = vld [vmem:[%s0 + $0x158] sm:$0xff]
  %v58 = vld [vmem:[%s0 + $0x160] sm:$0xff]
  %v59 = vld [vmem:[%s0 + $0x168] sm:$0xff]
  %v60 = vld [vmem:[%s0 + $0x170] sm:$0xff]
  %v61 = vld [vmem:[%s0 + $0x178] sm:$0xff]
  %v62 = vld [vmem:[%s0 + $0x180] sm:$0xff]
  %v63 = vld [vmem:[%s0 + $0x188] sm:$0xff]
  %v64 = vld [vmem:[%s0 + $0x190] sm:$0xff]
  %v65 = vld [vmem:[%s0 + $0x198] sm:$0xff]
  %v66 = vld [vmem:[%s0 + $0x1a0] sm:$0xff]
  %v67 = vld [vmem:[%s0 + $0x1a8] sm:$0xff]
  %v68 = vld [vmem:[%s0 + $0x1b0] sm:$0xff]
  %v69 = vld [vmem:[%s0 + $0x1b8] sm:$0xff]
  %v70 = vld [vmem:[%s0 + $0x1c0] sm:$0xff]
  %v71 = vld [vmem:[%s0 + $0x1c8] sm:$0xff]
  %v72 = vld [vmem:[%s0 + $0x1d0] sm:$0xff]
  %v73 = vld [vmem:[%s0 + $0x1d8] sm:$0xff]
  %v74 = vld [vmem:[%s0 + $0x1e0] sm:$0xff]
  %v75 = vld [vmem:[%s0 + $0x1e8] sm:$0xff]
  %v76 = vld [vmem:[%s0 + $0x1f0] sm:$0xff]
  %v77 = vld [vmem:[%s0 + $0x1f8] sm:$0xff]
  %v78 = vld [vmem:[%s1] sm:$0xf]
  %v79 = vld [vmem:[%s1 + $0x4] sm:$0xf]
  %v80 = vld [vmem:[%s1 + $0x8] sm:$0xf]
  %v81 = vld [vmem:[%s1 + $0xc] sm:$0xf]
  %v82 = vld [vmem:[%s1 + $0x10] sm:$0xf]
  %v83 = vld [vmem:[%s1 + $0x14] sm:$0xf]
  %v84 = vld [vmem:[%s1 + $0x18] sm:$0xf]
  %v85 = vld [vmem:[%s1 + $0x1c] sm:$0xf]
  %v86 = vld [vmem:[%s1 + $0x20] sm:$0xf]
  %v87 = vld [vmem:[%s1 + $0x24] sm:$0xf]
  %v88 = vld [vmem:[%s1 + $0x28] sm:$0xf]
  %v89 = vld [vmem:[%s1 + $0x2c] sm:$0xf]
  %v90 = vld [vmem:[%s1 + $0x30] sm:$0xf]
  %v91 = vld [vmem:[%s1 + $0x34] sm:$0xf]
  %v92 = vld [vmem:[%s1 + $0x38] sm:$0xf]
  %v93 = vld [vmem:[%s1 + $0x3c] sm:$0xf]
  %v94 = vld [vmem:[%s1 + $0x40] sm:$0xf]
  %v95 = vld [vmem:[%s1 + $0x44] sm:$0xf]
  %v160 = vunpack.c.l.b16 %v14
  %v161 = vunpack.c.h.b16 %v14
  %v162 = vunpack.c.l.b16 %v15
  %v163 = vunpack.c.h.b16 %v15
  %v164 = vunpack.c.l.b16 %v16
  %v165 = vunpack.c.h.b16 %v16
  %v166 = vunpack.c.l.b16 %v17
  %v167 = vunpack.c.h.b16 %v17
  %v168 = vunpack.c.l.b16 %v18
  %v169 = vunpack.c.h.b16 %v18
  %v170 = vunpack.c.l.b16 %v19
  %v171 = vunpack.c.h.b16 %v19
  %v172 = vunpack.c.l.b16 %v20
  %v173 = vunpack.c.h.b16 %v20
  %v174 = vunpack.c.l.b16 %v21
  %v175 = vunpack.c.h.b16 %v21
  %v176 = vunpack.c.l.b16 %v22
  %v177 = vunpack.c.h.b16 %v22
  %v178 = vunpack.c.l.b16 %v23
  %v179 = vunpack.c.h.b16 %v23
  %v180 = vunpack.c.l.b16 %v24
  %v181 = vunpack.c.h.b16 %v24
  %v182 = vunpack.c.l.b16 %v25
  %v183 = vunpack.c.h.b16 %v25
  %v184 = vunpack.c.l.b16 %v26
  %v185 = vunpack.c.h.b16 %v26
  %v186 = vunpack.c.l.b16 %v27
  %v187 = vunpack.c.h.b16 %v27
  %v188 = vunpack.c.l.b16 %v28
  %v189 = vunpack.c.h.b16 %v28
  %v190 = vunpack.c.l.b16 %v29
  %v191 = vunpack.c.h.b16 %v29
  %v192 = vunpack.c.l.b16 %v30
  %v193 = vunpack.c.h.b16 %v30
  %v194 = vunpack.c.l.b16 %v31
  %v195 = vunpack.c.h.b16 %v31
  %v196 = vunpack.c.l.b16 %v32
  %v197 = vunpack.c.h.b16 %v32
  %v198 = vunpack.c.l.b16 %v33
  %v199 = vunpack.c.h.b16 %v33
  %v200 = vunpack.c.l.b16 %v34
  %v201 = vunpack.c.h.b16 %v34
  %v202 = vunpack.c.l.b16 %v35
  %v203 = vunpack.c.h.b16 %v35
  %v204 = vunpack.c.l.b16 %v36
  %v205 = vunpack.c.h.b16 %v36
  %v206 = vunpack.c.l.b16 %v37
  %v207 = vunpack.c.h.b16 %v37
  %v208 = vunpack.c.l.b16 %v38
  %v209 = vunpack.c.h.b16 %v38
  %v210 = vunpack.c.l.b16 %v39
  %v211 = vunpack.c.h.b16 %v39
  %v212 = vunpack.c.l.b16 %v40
  %v213 = vunpack.c.h.b16 %v40
  %v214 = vunpack.c.l.b16 %v41
  %v215 = vunpack.c.h.b16 %v41
  %v216 = vunpack.c.l.b16 %v42
  %v217 = vunpack.c.h.b16 %v42
  %v218 = vunpack.c.l.b16 %v43
  %v219 = vunpack.c.h.b16 %v43
  %v220 = vunpack.c.l.b16 %v44
  %v221 = vunpack.c.h.b16 %v44
  %v222 = vunpack.c.l.b16 %v45
  %v223 = vunpack.c.h.b16 %v45
  %v224 = vunpack.c.l.b16 %v46
  %v225 = vunpack.c.h.b16 %v46
  %v226 = vunpack.c.l.b16 %v47
  %v227 = vunpack.c.h.b16 %v47
  %v228 = vunpack.c.l.b16 %v48
  %v229 = vunpack.c.h.b16 %v48
  %v230 = vunpack.c.l.b16 %v49
  %v231 = vunpack.c.h.b16 %v49
  %v232 = vunpack.c.l.b16 %v50
  %v233 = vunpack.c.h.b16 %v50
  %v234 = vunpack.c.l.b16 %v51
  %v235 = vunpack.c.h.b16 %v51
  %v236 = vunpack.c.l.b16 %v52
  %v237 = vunpack.c.h.b16 %v52
  %v238 = vunpack.c.l.b16 %v53
  %v239 = vunpack.c.h.b16 %v53
  %v240 = vunpack.c.l.b16 %v54
  %v241 = vunpack.c.h.b16 %v54
  %v242 = vunpack.c.l.b16 %v55
  %v243 = vunpack.c.h.b16 %v55
  %v244 = vunpack.c.l.b16 %v56
  %v245 = vunpack.c.h.b16 %v56
  %v246 = vunpack.c.l.b16 %v57
  %v247 = vunpack.c.h.b16 %v57
  %v248 = vunpack.c.l.b16 %v58
  %v249 = vunpack.c.h.b16 %v58
  %v250 = vunpack.c.l.b16 %v59
  %v251 = vunpack.c.h.b16 %v59
  %v252 = vunpack.c.l.b16 %v60
  %v253 = vunpack.c.h.b16 %v60
  %v254 = vunpack.c.l.b16 %v61
  %v255 = vunpack.c.h.b16 %v61
  %v256 = vunpack.c.l.b16 %v62
  %v257 = vunpack.c.h.b16 %v62
  %v258 = vunpack.c.l.b16 %v63
  %v259 = vunpack.c.h.b16 %v63
  %v260 = vunpack.c.l.b16 %v64
  %v261 = vunpack.c.h.b16 %v64
  %v262 = vunpack.c.l.b16 %v65
  %v263 = vunpack.c.h.b16 %v65
  %v264 = vunpack.c.l.b16 %v66
  %v265 = vunpack.c.h.b16 %v66
  %v266 = vunpack.c.l.b16 %v67
  %v267 = vunpack.c.h.b16 %v67
  %v268 = vunpack.c.l.b16 %v68
  %v269 = vunpack.c.h.b16 %v68
  %v270 = vunpack.c.l.b16 %v69
  %v271 = vunpack.c.h.b16 %v69
  %v272 = vunpack.c.l.b16 %v70
  %v273 = vunpack.c.h.b16 %v70
  %v274 = vunpack.c.l.b16 %v71
  %v275 = vunpack.c.h.b16 %v71
  %v276 = vunpack.c.l.b16 %v72
  %v277 = vunpack.c.h.b16 %v72
  %v278 = vunpack.c.l.b16 %v73
  %v279 = vunpack.c.h.b16 %v73
  %v280 = vunpack.c.l.b16 %v74
  %v281 = vunpack.c.h.b16 %v74
  %v282 = vunpack.c.l.b16 %v75
  %v283 = vunpack.c.h.b16 %v75
  %v284 = vunpack.c.l.b16 %v76
  %v285 = vunpack.c.h.b16 %v76
  %v286 = vunpack.c.l.b16 %v77
  %v287 = vunpack.c.h.b16 %v77
  %v288 = vpack.c.b16 %v162, %v160
  %v289 = vpack.c.b16 %v163, %v161
  %v290 = vpack.c.b16 %v166, %v164
  %v291 = vpack.c.b16 %v167, %v165
  %v292 = vpack.c.b16 %v170, %v168
  %v293 = vpack.c.b16 %v171, %v169
  %v294 = vpack.c.b16 %v174, %v172
  %v295 = vpack.c.b16 %v175, %v173
  %v296 = vpack.c.b16 %v178, %v176
  %v297 = vpack.c.b16 %v179, %v177
  %v298 = vpack.c.b16 %v182, %v180
  %v299 = vpack.c.b16 %v183, %v181
  %v300 = vpack.c.b16 %v186, %v184
  %v301 = vpack.c.b16 %v187, %v185
  %v302 = vpack.c.b16 %v190, %v188
  %v303 = vpack.c.b16 %v191, %v189
  %v304 = vpack.c.b16 %v194, %v192
  %v305 = vpack.c.b16 %v195, %v193
  %v306 = vpack.c.b16 %v198, %v196
  %v307 = vpack.c.b16 %v199, %v197
  %v308 = vpack.c.b16 %v202, %v200
  %v309 = vpack.c.b16 %v203, %v201
  %v310 = vpack.c.b16 %v206, %v204
  %v311 = vpack.c.b16 %v207, %v205
  %v312 = vpack.c.b16 %v210, %v208
  %v313 = vpack.c.b16 %v211, %v209
  %v314 = vpack.c.b16 %v214, %v212
  %v315 = vpack.c.b16 %v215, %v213
  %v316 = vpack.c.b16 %v218, %v216
  %v317 = vpack.c.b16 %v219, %v217
  %v318 = vpack.c.b16 %v222, %v220
  %v319 = vpack.c.b16 %v223, %v221
  %v320 = vpack.c.b16 %v226, %v224
  %v321 = vpack.c.b16 %v227, %v225
  %v322 = vpack.c.b16 %v230, %v228
  %v323 = vpack.c.b16 %v231, %v229
  %v324 = vpack.c.b16 %v234, %v232
  %v325 = vpack.c.b16 %v235, %v233
  %v326 = vpack.c.b16 %v238, %v236
  %v327 = vpack.c.b16 %v239, %v237
  %v328 = vpack.c.b16 %v242, %v240
  %v329 = vpack.c.b16 %v243, %v241
  %v330 = vpack.c.b16 %v246, %v244
  %v331 = vpack.c.b16 %v247, %v245
  %v332 = vpack.c.b16 %v250, %v248
  %v333 = vpack.c.b16 %v251, %v249
  %v334 = vpack.c.b16 %v254, %v252
  %v335 = vpack.c.b16 %v255, %v253
  %v336 = vpack.c.b16 %v258, %v256
  %v337 = vpack.c.b16 %v259, %v257
  %v338 = vpack.c.b16 %v262, %v260
  %v339 = vpack.c.b16 %v263, %v261
  %v340 = vpack.c.b16 %v266, %v264
  %v341 = vpack.c.b16 %v267, %v265
  %v342 = vpack.c.b16 %v270, %v268
  %v343 = vpack.c.b16 %v271, %v269
  %v344 = vpack.c.b16 %v274, %v272
  %v345 = vpack.c.b16 %v275, %v273
  %v346 = vpack.c.b16 %v278, %v276
  %v347 = vpack.c.b16 %v279, %v277
  %v348 = vpack.c.b16 %v282, %v280
  %v349 = vpack.c.b16 %v283, %v281
  %v350 = vpack.c.b16 %v286, %v284
  %v351 = vpack.c.b16 %v287, %v285
  %v402 = vunpack.c.l.b16 %v78
  %v403 = vunpack.c.l.b16 %v79
  %v404 = vunpack.c.l.b16 %v80
  %v405 = vunpack.c.l.b16 %v81
  %v406 = vunpack.c.l.b16 %v82
  %v407 = vunpack.c.l.b16 %v83
  %v408 = vunpack.c.l.b16 %v84
  %v409 = vunpack.c.l.b16 %v85
  %v410 = vunpack.c.l.b16 %v86
  %v411 = vunpack.c.l.b16 %v87
  %v412 = vunpack.c.l.b16 %v88
  %v413 = vunpack.c.l.b16 %v89
  %v414 = vunpack.c.l.b16 %v90
  %v415 = vunpack.c.l.b16 %v91
  %v416 = vunpack.c.l.b16 %v92
  %v417 = vunpack.c.l.b16 %v93
  %v418 = vunpack.c.l.b16 %v94
  %v419 = vunpack.c.l.b16 %v95
  %v420 = vpack.c.b16 %v403, %v402
  %v421 = vpack.c.b16 %v405, %v404
  %v422 = vpack.c.b16 %v407, %v406
  %v423 = vpack.c.b16 %v409, %v408
  %v424 = vpack.c.b16 %v411, %v410
  %v425 = vpack.c.b16 %v413, %v412
  %v426 = vpack.c.b16 %v415, %v414
  %v427 = vpack.c.b16 %v417, %v416
  %v428 = vpack.c.b16 %v419, %v418
  %vm438 = vcmask 130048
  %v440 = vsel %vm438, %v289, 0
  %v443 = vsel %vm438, %v291, 0
  %v446 = vsel %vm438, %v293, 0
  %v449 = vsel %vm438, %v295, 0
  %v452 = vsel %vm438, %v297, 0
  %v455 = vsel %vm438, %v299, 0
  %v458 = vsel %vm438, %v301, 0
  %v461 = vsel %vm438, %v303, 0
  %v464 = vsel %vm438, %v305, 0
  %v467 = vsel %vm438, %v307, 0
  %v470 = vsel %vm438, %v309, 0
  %v473 = vsel %vm438, %v311, 0
  %v476 = vsel %vm438, %v313, 0
  %v479 = vsel %vm438, %v315, 0
  %v482 = vsel %vm438, %v317, 0
  %v485 = vsel %vm438, %v319, 0
  %v488 = vsel %vm438, %v321, 0
  %v491 = vsel %vm438, %v323, 0
  %v494 = vsel %vm438, %v325, 0
  %v497 = vsel %vm438, %v327, 0
  %v500 = vsel %vm438, %v329, 0
  %v503 = vsel %vm438, %v331, 0
  %v506 = vsel %vm438, %v333, 0
  %v509 = vsel %vm438, %v335, 0
  %v512 = vsel %vm438, %v337, 0
  %v515 = vsel %vm438, %v339, 0
  %v518 = vsel %vm438, %v341, 0
  %v521 = vsel %vm438, %v343, 0
  %v524 = vsel %vm438, %v345, 0
  %v527 = vsel %vm438, %v347, 0
  %v530 = vsel %vm438, %v349, 0
  %v533 = vsel %vm438, %v351, 0
  %535 = vmatpush.bf16.msra.mxu0 %v427
  %536 = vmatpush.bf16.msra.mxu0 %v426
  %537 = vmatpush.bf16.msra.mxu0 %v425
  %538 = vmatpush.bf16.msra.mxu0 %v424
  %539 = vmatpush.bf16.msra.mxu0 %v423
  %540 = vmatpush.bf16.msra.mxu0 %v422
  %541 = vmatpush.bf16.msra.mxu0 %v421
  %542 = vmatpush.bf16.msra.mxu0 %v420
  %543 = vmatmul.bf16.gmra.mxu0 %v288
  %v544 = vpop.f32.mrf.mxu0
  %v545 = vadd.f32 0.0, %v544
  %v546 = vpop.f32.mrf.mxu0
  %v547 = vadd.f32 0.0, %v546
  %548 = vmatmul.bf16.gmra.mxu0 %v290
  %v549 = vpop.f32.mrf.mxu0
  %v550 = vadd.f32 0.0, %v549
  %v551 = vpop.f32.mrf.mxu0
  %v552 = vadd.f32 0.0, %v551
  %553 = vmatmul.bf16.gmra.mxu0 %v292
  %v554 = vpop.f32.mrf.mxu0
  %v555 = vadd.f32 0.0, %v554
  %v556 = vpop.f32.mrf.mxu0
  %v557 = vadd.f32 0.0, %v556
  %558 = vmatmul.bf16.gmra.mxu0 %v294
  %v559 = vpop.f32.mrf.mxu0
  %v560 = vadd.f32 0.0, %v559
  %v561 = vpop.f32.mrf.mxu0
  %v562 = vadd.f32 0.0, %v561
  %563 = vmatmul.bf16.gmra.mxu0 %v296
  %v564 = vpop.f32.mrf.mxu0
  %v565 = vadd.f32 0.0, %v564
  %v566 = vpop.f32.mrf.mxu0
  %v567 = vadd.f32 0.0, %v566
  %568 = vmatmul.bf16.gmra.mxu0 %v298
  %v569 = vpop.f32.mrf.mxu0
  %v570 = vadd.f32 0.0, %v569
  %v571 = vpop.f32.mrf.mxu0
  %v572 = vadd.f32 0.0, %v571
  %573 = vmatmul.bf16.gmra.mxu0 %v300
  %v574 = vpop.f32.mrf.mxu0
  %v575 = vadd.f32 0.0, %v574
  %v576 = vpop.f32.mrf.mxu0
  %v577 = vadd.f32 0.0, %v576
  %578 = vmatmul.bf16.gmra.mxu0 %v302
  %v579 = vpop.f32.mrf.mxu0
  %v580 = vadd.f32 0.0, %v579
  %v581 = vpop.f32.mrf.mxu0
  %v582 = vadd.f32 0.0, %v581
  %583 = vmatmul.bf16.gmra.mxu0 %v304
  %v584 = vpop.f32.mrf.mxu0
  %v585 = vadd.f32 0.0, %v584
  %v586 = vpop.f32.mrf.mxu0
  %v587 = vadd.f32 0.0, %v586
  %588 = vmatmul.bf16.gmra.mxu0 %v306
  %v589 = vpop.f32.mrf.mxu0
  %v590 = vadd.f32 0.0, %v589
  %v591 = vpop.f32.mrf.mxu0
  %v592 = vadd.f32 0.0, %v591
  %593 = vmatmul.bf16.gmra.mxu0 %v308
  %v594 = vpop.f32.mrf.mxu0
  %v595 = vadd.f32 0.0, %v594
  %v596 = vpop.f32.mrf.mxu0
  %v597 = vadd.f32 0.0, %v596
  %598 = vmatmul.bf16.gmra.mxu0 %v310
  %v599 = vpop.f32.mrf.mxu0
  %v600 = vadd.f32 0.0, %v599
  %v601 = vpop.f32.mrf.mxu0
  %v602 = vadd.f32 0.0, %v601
  %603 = vmatmul.bf16.gmra.mxu0 %v312
  %v604 = vpop.f32.mrf.mxu0
  %v605 = vadd.f32 0.0, %v604
  %v606 = vpop.f32.mrf.mxu0
  %v607 = vadd.f32 0.0, %v606
  %608 = vmatmul.bf16.gmra.mxu0 %v314
  %v609 = vpop.f32.mrf.mxu0
  %v610 = vadd.f32 0.0, %v609
  %v611 = vpop.f32.mrf.mxu0
  %v612 = vadd.f32 0.0, %v611
  %613 = vmatmul.bf16.gmra.mxu0 %v316
  %v614 = vpop.f32.mrf.mxu0
  %v615 = vadd.f32 0.0, %v614
  %v616 = vpop.f32.mrf.mxu0
  %v617 = vadd.f32 0.0, %v616
  %618 = vmatmul.bf16.gmra.mxu0 %v318
  %v619 = vpop.f32.mrf.mxu0
  %v620 = vadd.f32 0.0, %v619
  %v621 = vpop.f32.mrf.mxu0
  %v622 = vadd.f32 0.0, %v621
  %623 = vmatmul.bf16.gmra.mxu0 %v320
  %v624 = vpop.f32.mrf.mxu0
  %v625 = vadd.f32 0.0, %v624
  %v626 = vpop.f32.mrf.mxu0
  %v627 = vadd.f32 0.0, %v626
  %628 = vmatmul.bf16.gmra.mxu0 %v322
  %v629 = vpop.f32.mrf.mxu0
  %v630 = vadd.f32 0.0, %v629
  %v631 = vpop.f32.mrf.mxu0
  %v632 = vadd.f32 0.0, %v631
  %633 = vmatmul.bf16.gmra.mxu0 %v324
  %v634 = vpop.f32.mrf.mxu0
  %v635 = vadd.f32 0.0, %v634
  %v636 = vpop.f32.mrf.mxu0
  %v637 = vadd.f32 0.0, %v636
  %638 = vmatmul.bf16.gmra.mxu0 %v326
  %v639 = vpop.f32.mrf.mxu0
  %v640 = vadd.f32 0.0, %v639
  %v641 = vpop.f32.mrf.mxu0
  %v642 = vadd.f32 0.0, %v641
  %643 = vmatmul.bf16.gmra.mxu0 %v328
  %v644 = vpop.f32.mrf.mxu0
  %v645 = vadd.f32 0.0, %v644
  %v646 = vpop.f32.mrf.mxu0
  %v647 = vadd.f32 0.0, %v646
  %648 = vmatmul.bf16.gmra.mxu0 %v330
  %v649 = vpop.f32.mrf.mxu0
  %v650 = vadd.f32 0.0, %v649
  %v651 = vpop.f32.mrf.mxu0
  %v652 = vadd.f32 0.0, %v651
  %653 = vmatmul.bf16.gmra.mxu0 %v332
  %v654 = vpop.f32.mrf.mxu0
  %v655 = vadd.f32 0.0, %v654
  %v656 = vpop.f32.mrf.mxu0
  %v657 = vadd.f32 0.0, %v656
  %658 = vmatmul.bf16.gmra.mxu0 %v334
  %v659 = vpop.f32.mrf.mxu0
  %v660 = vadd.f32 0.0, %v659
  %v661 = vpop.f32.mrf.mxu0
  %v662 = vadd.f32 0.0, %v661
  %663 = vmatmul.bf16.gmra.mxu0 %v336
  %v664 = vpop.f32.mrf.mxu0
  %v665 = vadd.f32 0.0, %v664
  %v666 = vpop.f32.mrf.mxu0
  %v667 = vadd.f32 0.0, %v666
  %668 = vmatmul.bf16.gmra.mxu0 %v338
  %v669 = vpop.f32.mrf.mxu0
  %v670 = vadd.f32 0.0, %v669
  %v671 = vpop.f32.mrf.mxu0
  %v672 = vadd.f32 0.0, %v671
  %673 = vmatmul.bf16.gmra.mxu0 %v340
  %v674 = vpop.f32.mrf.mxu0
  %v675 = vadd.f32 0.0, %v674
  %v676 = vpop.f32.mrf.mxu0
  %v677 = vadd.f32 0.0, %v676
  %678 = vmatmul.bf16.gmra.mxu0 %v342
  %v679 = vpop.f32.mrf.mxu0
  %v680 = vadd.f32 0.0, %v679
  %v681 = vpop.f32.mrf.mxu0
  %v682 = vadd.f32 0.0, %v681
  %683 = vmatmul.bf16.gmra.mxu0 %v344
  %v684 = vpop.f32.mrf.mxu0
  %v685 = vadd.f32 0.0, %v684
  %v686 = vpop.f32.mrf.mxu0
  %v687 = vadd.f32 0.0, %v686
  %688 = vmatmul.bf16.gmra.mxu0 %v346
  %v689 = vpop.f32.mrf.mxu0
  %v690 = vadd.f32 0.0, %v689
  %v691 = vpop.f32.mrf.mxu0
  %v692 = vadd.f32 0.0, %v691
  %693 = vmatmul.bf16.gmra.mxu0 %v348
  %v694 = vpop.f32.mrf.mxu0
  %v695 = vadd.f32 0.0, %v694
  %v696 = vpop.f32.mrf.mxu0
  %v697 = vadd.f32 0.0, %v696
  %698 = vmatmul.bf16.gmra.mxu0 %v350
  %v699 = vpop.f32.mrf.mxu0
  %v700 = vadd.f32 0.0, %v699
  %v701 = vpop.f32.mrf.mxu0
  %v702 = vadd.f32 0.0, %v701
  %703 = vdwg.mxu0
  %704 = vmatpush.bf16.msra.mxu0 0
  %705 = vmatpush.bf16.msra.mxu0 0
  %706 = vmatpush.bf16.msra.mxu0 0
  %707 = vmatpush.bf16.msra.mxu0 0
  %708 = vmatpush.bf16.msra.mxu0 0
  %709 = vmatpush.bf16.msra.mxu0 0
  %710 = vmatpush.bf16.msra.mxu0 0
  %711 = vmatpush.bf16.msra.mxu0 %v428
  %712 = vmatmul.bf16.gmra.mxu0 %v440
  %v713 = vpop.f32.mrf.mxu0
  %v714 = vadd.f32 %v545, %v713
  %v715 = vpop.f32.mrf.mxu0
  %v716 = vadd.f32 %v547, %v715
  %717 = vmatmul.bf16.gmra.mxu0 %v443
  %v718 = vpop.f32.mrf.mxu0
  %v719 = vadd.f32 %v550, %v718
  %v720 = vpop.f32.mrf.mxu0
  %v721 = vadd.f32 %v552, %v720
  %722 = vmatmul.bf16.gmra.mxu0 %v446
  %v723 = vpop.f32.mrf.mxu0
  %v724 = vadd.f32 %v555, %v723
  %v725 = vpop.f32.mrf.mxu0
  %v726 = vadd.f32 %v557, %v725
  %727 = vmatmul.bf16.gmra.mxu0 %v449
  %v728 = vpop.f32.mrf.mxu0
  %v729 = vadd.f32 %v560, %v728
  %v730 = vpop.f32.mrf.mxu0
  %v731 = vadd.f32 %v562, %v730
  %732 = vmatmul.bf16.gmra.mxu0 %v452
  %v733 = vpop.f32.mrf.mxu0
  %v734 = vadd.f32 %v565, %v733
  %v735 = vpop.f32.mrf.mxu0
  %v736 = vadd.f32 %v567, %v735
  %737 = vmatmul.bf16.gmra.mxu0 %v455
  %v738 = vpop.f32.mrf.mxu0
  %v739 = vadd.f32 %v570, %v738
  %v740 = vpop.f32.mrf.mxu0
  %v741 = vadd.f32 %v572, %v740
  %742 = vmatmul.bf16.gmra.mxu0 %v458
  %v743 = vpop.f32.mrf.mxu0
  %v744 = vadd.f32 %v575, %v743
  %v745 = vpop.f32.mrf.mxu0
  %v746 = vadd.f32 %v577, %v745
  %747 = vmatmul.bf16.gmra.mxu0 %v461
  %v748 = vpop.f32.mrf.mxu0
  %v749 = vadd.f32 %v580, %v748
  %v750 = vpop.f32.mrf.mxu0
  %v751 = vadd.f32 %v582, %v750
  %752 = vmatmul.bf16.gmra.mxu0 %v464
  %v753 = vpop.f32.mrf.mxu0
  %v754 = vadd.f32 %v585, %v753
  %v755 = vpop.f32.mrf.mxu0
  %v756 = vadd.f32 %v587, %v755
  %757 = vmatmul.bf16.gmra.mxu0 %v467
  %v758 = vpop.f32.mrf.mxu0
  %v759 = vadd.f32 %v590, %v758
  %v760 = vpop.f32.mrf.mxu0
  %v761 = vadd.f32 %v592, %v760
  %762 = vmatmul.bf16.gmra.mxu0 %v470
  %v763 = vpop.f32.mrf.mxu0
  %v764 = vadd.f32 %v595, %v763
  %v765 = vpop.f32.mrf.mxu0
  %v766 = vadd.f32 %v597, %v765
  %767 = vmatmul.bf16.gmra.mxu0 %v473
  %v768 = vpop.f32.mrf.mxu0
  %v769 = vadd.f32 %v600, %v768
  %v770 = vpop.f32.mrf.mxu0
  %v771 = vadd.f32 %v602, %v770
  %772 = vmatmul.bf16.gmra.mxu0 %v476
  %v773 = vpop.f32.mrf.mxu0
  %v774 = vadd.f32 %v605, %v773
  %v775 = vpop.f32.mrf.mxu0
  %v776 = vadd.f32 %v607, %v775
  %777 = vmatmul.bf16.gmra.mxu0 %v479
  %v778 = vpop.f32.mrf.mxu0
  %v779 = vadd.f32 %v610, %v778
  %v780 = vpop.f32.mrf.mxu0
  %v781 = vadd.f32 %v612, %v780
  %782 = vmatmul.bf16.gmra.mxu0 %v482
  %v783 = vpop.f32.mrf.mxu0
  %v784 = vadd.f32 %v615, %v783
  %v785 = vpop.f32.mrf.mxu0
  %v786 = vadd.f32 %v617, %v785
  %787 = vmatmul.bf16.gmra.mxu0 %v485
  %v788 = vpop.f32.mrf.mxu0
  %v789 = vadd.f32 %v620, %v788
  %v790 = vpop.f32.mrf.mxu0
  %v791 = vadd.f32 %v622, %v790
  %792 = vmatmul.bf16.gmra.mxu0 %v488
  %v793 = vpop.f32.mrf.mxu0
  %v794 = vadd.f32 %v625, %v793
  %v795 = vpop.f32.mrf.mxu0
  %v796 = vadd.f32 %v627, %v795
  %797 = vmatmul.bf16.gmra.mxu0 %v491
  %v798 = vpop.f32.mrf.mxu0
  %v799 = vadd.f32 %v630, %v798
  %v800 = vpop.f32.mrf.mxu0
  %v801 = vadd.f32 %v632, %v800
  %802 = vmatmul.bf16.gmra.mxu0 %v494
  %v803 = vpop.f32.mrf.mxu0
  %v804 = vadd.f32 %v635, %v803
  %v805 = vpop.f32.mrf.mxu0
  %v806 = vadd.f32 %v637, %v805
  %807 = vmatmul.bf16.gmra.mxu0 %v497
  %v808 = vpop.f32.mrf.mxu0
  %v809 = vadd.f32 %v640, %v808
  %v810 = vpop.f32.mrf.mxu0
  %v811 = vadd.f32 %v642, %v810
  %812 = vmatmul.bf16.gmra.mxu0 %v500
  %v813 = vpop.f32.mrf.mxu0
  %v814 = vadd.f32 %v645, %v813
  %v815 = vpop.f32.mrf.mxu0
  %v816 = vadd.f32 %v647, %v815
  %817 = vmatmul.bf16.gmra.mxu0 %v503
  %v818 = vpop.f32.mrf.mxu0
  %v819 = vadd.f32 %v650, %v818
  %v820 = vpop.f32.mrf.mxu0
  %v821 = vadd.f32 %v652, %v820
  %822 = vmatmul.bf16.gmra.mxu0 %v506
  %v823 = vpop.f32.mrf.mxu0
  %v824 = vadd.f32 %v655, %v823
  %v825 = vpop.f32.mrf.mxu0
  %v826 = vadd.f32 %v657, %v825
  %827 = vmatmul.bf16.gmra.mxu0 %v509
  %v828 = vpop.f32.mrf.mxu0
  %v829 = vadd.f32 %v660, %v828
  %v830 = vpop.f32.mrf.mxu0
  %v831 = vadd.f32 %v662, %v830
  %832 = vmatmul.bf16.gmra.mxu0 %v512
  %v833 = vpop.f32.mrf.mxu0
  %v834 = vadd.f32 %v665, %v833
  %v835 = vpop.f32.mrf.mxu0
  %v836 = vadd.f32 %v667, %v835
  %837 = vmatmul.bf16.gmra.mxu0 %v515
  %v838 = vpop.f32.mrf.mxu0
  %v839 = vadd.f32 %v670, %v838
  %v840 = vpop.f32.mrf.mxu0
  %v841 = vadd.f32 %v672, %v840
  %842 = vmatmul.bf16.gmra.mxu0 %v518
  %v843 = vpop.f32.mrf.mxu0
  %v844 = vadd.f32 %v675, %v843
  %v845 = vpop.f32.mrf.mxu0
  %v846 = vadd.f32 %v677, %v845
  %847 = vmatmul.bf16.gmra.mxu0 %v521
  %v848 = vpop.f32.mrf.mxu0
  %v849 = vadd.f32 %v680, %v848
  %v850 = vpop.f32.mrf.mxu0
  %v851 = vadd.f32 %v682, %v850
  %852 = vmatmul.bf16.gmra.mxu0 %v524
  %v853 = vpop.f32.mrf.mxu0
  %v854 = vadd.f32 %v685, %v853
  %v855 = vpop.f32.mrf.mxu0
  %v856 = vadd.f32 %v687, %v855
  %857 = vmatmul.bf16.gmra.mxu0 %v527
  %v858 = vpop.f32.mrf.mxu0
  %v859 = vadd.f32 %v690, %v858
  %v860 = vpop.f32.mrf.mxu0
  %v861 = vadd.f32 %v692, %v860
  %862 = vmatmul.bf16.gmra.mxu0 %v530
  %v863 = vpop.f32.mrf.mxu0
  %v864 = vadd.f32 %v695, %v863
  %v865 = vpop.f32.mrf.mxu0
  %v866 = vadd.f32 %v697, %v865
  %867 = vmatmul.bf16.gmra.mxu0 %v533
  %v868 = vpop.f32.mrf.mxu0
  %v869 = vadd.f32 %v700, %v868
  %v870 = vpop.f32.mrf.mxu0
  %v871 = vadd.f32 %v702, %v870
  %872 = vdwg.mxu0
  %vm873 = vcmask 261120
  %874 = vst.msk [vmem:[%s2] sm:$0xff] %vm873, %v714
  %875 = vst.msk [vmem:[%s2 + $0x8] sm:$0xff] %vm873, %v716
  %876 = vst.msk [vmem:[%s2 + $0x10] sm:$0xff] %vm873, %v719
  %877 = vst.msk [vmem:[%s2 + $0x18] sm:$0xff] %vm873, %v721
  %878 = vst.msk [vmem:[%s2 + $0x20] sm:$0xff] %vm873, %v724
  %879 = vst.msk [vmem:[%s2 + $0x28] sm:$0xff] %vm873, %v726
  %880 = vst.msk [vmem:[%s2 + $0x30] sm:$0xff] %vm873, %v729
  %881 = vst.msk [vmem:[%s2 + $0x38] sm:$0xff] %vm873, %v731
  %882 = vst.msk [vmem:[%s2 + $0x40] sm:$0xff] %vm873, %v734
  %883 = vst.msk [vmem:[%s2 + $0x48] sm:$0xff] %vm873, %v736
  %884 = vst.msk [vmem:[%s2 + $0x50] sm:$0xff] %vm873, %v739
  %885 = vst.msk [vmem:[%s2 + $0x58] sm:$0xff] %vm873, %v741
  %886 = vst.msk [vmem:[%s2 + $0x60] sm:$0xff] %vm873, %v744
  %887 = vst.msk [vmem:[%s2 + $0x68] sm:$0xff] %vm873, %v746
  %888 = vst.msk [vmem:[%s2 + $0x70] sm:$0xff] %vm873, %v749
  %889 = vst.msk [vmem:[%s2 + $0x78] sm:$0xff] %vm873, %v751
  %890 = vst.msk [vmem:[%s2 + $0x80] sm:$0xff] %vm873, %v754
  %891 = vst.msk [vmem:[%s2 + $0x88] sm:$0xff] %vm873, %v756
  %892 = vst.msk [vmem:[%s2 + $0x90] sm:$0xff] %vm873, %v759
  %893 = vst.msk [vmem:[%s2 + $0x98] sm:$0xff] %vm873, %v761
  %894 = vst.msk [vmem:[%s2 + $0xa0] sm:$0xff] %vm873, %v764
  %895 = vst.msk [vmem:[%s2 + $0xa8] sm:$0xff] %vm873, %v766
  %896 = vst.msk [vmem:[%s2 + $0xb0] sm:$0xff] %vm873, %v769
  %897 = vst.msk [vmem:[%s2 + $0xb8] sm:$0xff] %vm873, %v771
  %898 = vst.msk [vmem:[%s2 + $0xc0] sm:$0xff] %vm873, %v774
  %899 = vst.msk [vmem:[%s2 + $0xc8] sm:$0xff] %vm873, %v776
  %900 = vst.msk [vmem:[%s2 + $0xd0] sm:$0xff] %vm873, %v779
  %901 = vst.msk [vmem:[%s2 + $0xd8] sm:$0xff] %vm873, %v781
  %902 = vst.msk [vmem:[%s2 + $0xe0] sm:$0xff] %vm873, %v784
  %903 = vst.msk [vmem:[%s2 + $0xe8] sm:$0xff] %vm873, %v786
  %904 = vst.msk [vmem:[%s2 + $0xf0] sm:$0xff] %vm873, %v789
  %905 = vst.msk [vmem:[%s2 + $0xf8] sm:$0xff] %vm873, %v791
  %906 = vst.msk [vmem:[%s2 + $0x100] sm:$0xff] %vm873, %v794
  %907 = vst.msk [vmem:[%s2 + $0x108] sm:$0xff] %vm873, %v796
  %908 = vst.msk [vmem:[%s2 + $0x110] sm:$0xff] %vm873, %v799
  %909 = vst.msk [vmem:[%s2 + $0x118] sm:$0xff] %vm873, %v801
  %910 = vst.msk [vmem:[%s2 + $0x120] sm:$0xff] %vm873, %v804
  %911 = vst.msk [vmem:[%s2 + $0x128] sm:$0xff] %vm873, %v806
  %912 = vst.msk [vmem:[%s2 + $0x130] sm:$0xff] %vm873, %v809
  %913 = vst.msk [vmem:[%s2 + $0x138] sm:$0xff] %vm873, %v811
  %914 = vst.msk [vmem:[%s2 + $0x140] sm:$0xff] %vm873, %v814
  %915 = vst.msk [vmem:[%s2 + $0x148] sm:$0xff] %vm873, %v816
  %916 = vst.msk [vmem:[%s2 + $0x150] sm:$0xff] %vm873, %v819
  %917 = vst.msk [vmem:[%s2 + $0x158] sm:$0xff] %vm873, %v821
  %918 = vst.msk [vmem:[%s2 + $0x160] sm:$0xff] %vm873, %v824
  %919 = vst.msk [vmem:[%s2 + $0x168] sm:$0xff] %vm873, %v826
  %920 = vst.msk [vmem:[%s2 + $0x170] sm:$0xff] %vm873, %v829
  %921 = vst.msk [vmem:[%s2 + $0x178] sm:$0xff] %vm873, %v831
  %922 = vst.msk [vmem:[%s2 + $0x180] sm:$0xff] %vm873, %v834
  %923 = vst.msk [vmem:[%s2 + $0x188] sm:$0xff] %vm873, %v836
  %924 = vst.msk [vmem:[%s2 + $0x190] sm:$0xff] %vm873, %v839
  %925 = vst.msk [vmem:[%s2 + $0x198] sm:$0xff] %vm873, %v841
  %926 = vst.msk [vmem:[%s2 + $0x1a0] sm:$0xff] %vm873, %v844
  %927 = vst.msk [vmem:[%s2 + $0x1a8] sm:$0xff] %vm873, %v846
  %928 = vst.msk [vmem:[%s2 + $0x1b0] sm:$0xff] %vm873, %v849
  %929 = vst.msk [vmem:[%s2 + $0x1b8] sm:$0xff] %vm873, %v851
  %930 = vst.msk [vmem:[%s2 + $0x1c0] sm:$0xff] %vm873, %v854
  %931 = vst.msk [vmem:[%s2 + $0x1c8] sm:$0xff] %vm873, %v856
  %932 = vst.msk [vmem:[%s2 + $0x1d0] sm:$0xff] %vm873, %v859
  %933 = vst.msk [vmem:[%s2 + $0x1d8] sm:$0xff] %vm873, %v861
  %934 = vst.msk [vmem:[%s2 + $0x1e0] sm:$0xff] %vm873, %v864
  %935 = vst.msk [vmem:[%s2 + $0x1e8] sm:$0xff] %vm873, %v866
  %936 = vst.msk [vmem:[%s2 + $0x1f0] sm:$0xff] %vm873, %v869
  %937 = vst.msk [vmem:[%s2 + $0x1f8] sm:$0xff] %vm873, %v871
  %v938 = vsel %vm873, %v714, 0.0
  %v939 = vsel %vm873, %v716, 0.0
  %v940 = vadd.f32 %v938, %v939
  %v941 = vsel %vm873, %v719, 0.0
  %v942 = vadd.f32 %v940, %v941
  %v943 = vsel %vm873, %v721, 0.0
  %v944 = vadd.f32 %v942, %v943
  %v945 = vsel %vm873, %v724, 0.0
  %v946 = vadd.f32 %v944, %v945
  %v947 = vsel %vm873, %v726, 0.0
  %v948 = vadd.f32 %v946, %v947
  %v949 = vsel %vm873, %v729, 0.0
  %v950 = vadd.f32 %v948, %v949
  %v951 = vsel %vm873, %v731, 0.0
  %v952 = vadd.f32 %v950, %v951
  %v953 = vsel %vm873, %v734, 0.0
  %v954 = vadd.f32 %v952, %v953
  %v955 = vsel %vm873, %v736, 0.0
  %v956 = vadd.f32 %v954, %v955
  %v957 = vsel %vm873, %v739, 0.0
  %v958 = vadd.f32 %v956, %v957
  %v959 = vsel %vm873, %v741, 0.0
  %v960 = vadd.f32 %v958, %v959
  %v961 = vsel %vm873, %v744, 0.0
  %v962 = vadd.f32 %v960, %v961
  %v963 = vsel %vm873, %v746, 0.0
  %v964 = vadd.f32 %v962, %v963
  %v965 = vsel %vm873, %v749, 0.0
  %v966 = vadd.f32 %v964, %v965
  %v967 = vsel %vm873, %v751, 0.0
  %v968 = vadd.f32 %v966, %v967
  %v969 = vsel %vm873, %v754, 0.0
  %v970 = vadd.f32 %v968, %v969
  %v971 = vsel %vm873, %v756, 0.0
  %v972 = vadd.f32 %v970, %v971
  %v973 = vsel %vm873, %v759, 0.0
  %v974 = vadd.f32 %v972, %v973
  %v975 = vsel %vm873, %v761, 0.0
  %v976 = vadd.f32 %v974, %v975
  %v977 = vsel %vm873, %v764, 0.0
  %v978 = vadd.f32 %v976, %v977
  %v979 = vsel %vm873, %v766, 0.0
  %v980 = vadd.f32 %v978, %v979
  %v981 = vsel %vm873, %v769, 0.0
  %v982 = vadd.f32 %v980, %v981
  %v983 = vsel %vm873, %v771, 0.0
  %v984 = vadd.f32 %v982, %v983
  %v985 = vsel %vm873, %v774, 0.0
  %v986 = vadd.f32 %v984, %v985
  %v987 = vsel %vm873, %v776, 0.0
  %v988 = vadd.f32 %v986, %v987
  %v989 = vsel %vm873, %v779, 0.0
  %v990 = vadd.f32 %v988, %v989
  %v991 = vsel %vm873, %v781, 0.0
  %v992 = vadd.f32 %v990, %v991
  %v993 = vsel %vm873, %v784, 0.0
  %v994 = vadd.f32 %v992, %v993
  %v995 = vsel %vm873, %v786, 0.0
  %v996 = vadd.f32 %v994, %v995
  %v997 = vsel %vm873, %v789, 0.0
  %v998 = vadd.f32 %v996, %v997
  %v999 = vsel %vm873, %v791, 0.0
  %v1000 = vadd.f32 %v998, %v999
  %v1001 = vsel %vm873, %v794, 0.0
  %v1002 = vadd.f32 %v1000, %v1001
  %v1003 = vsel %vm873, %v796, 0.0
  %v1004 = vadd.f32 %v1002, %v1003
  %v1005 = vsel %vm873, %v799, 0.0
  %v1006 = vadd.f32 %v1004, %v1005
  %v1007 = vsel %vm873, %v801, 0.0
  %v1008 = vadd.f32 %v1006, %v1007
  %v1009 = vsel %vm873, %v804, 0.0
  %v1010 = vadd.f32 %v1008, %v1009
  %v1011 = vsel %vm873, %v806, 0.0
  %v1012 = vadd.f32 %v1010, %v1011
  %v1013 = vsel %vm873, %v809, 0.0
  %v1014 = vadd.f32 %v1012, %v1013
  %v1015 = vsel %vm873, %v811, 0.0
  %v1016 = vadd.f32 %v1014, %v1015
  %v1017 = vsel %vm873, %v814, 0.0
  %v1018 = vadd.f32 %v1016, %v1017
  %v1019 = vsel %vm873, %v816, 0.0
  %v1020 = vadd.f32 %v1018, %v1019
  %v1021 = vsel %vm873, %v819, 0.0
  %v1022 = vadd.f32 %v1020, %v1021
  %v1023 = vsel %vm873, %v821, 0.0
  %v1024 = vadd.f32 %v1022, %v1023
  %v1025 = vsel %vm873, %v824, 0.0
  %v1026 = vadd.f32 %v1024, %v1025
  %v1027 = vsel %vm873, %v826, 0.0
  %v1028 = vadd.f32 %v1026, %v1027
  %v1029 = vsel %vm873, %v829, 0.0
  %v1030 = vadd.f32 %v1028, %v1029
  %v1031 = vsel %vm873, %v831, 0.0
  %v1032 = vadd.f32 %v1030, %v1031
  %v1033 = vsel %vm873, %v834, 0.0
  %v1034 = vadd.f32 %v1032, %v1033
  %v1035 = vsel %vm873, %v836, 0.0
  %v1036 = vadd.f32 %v1034, %v1035
  %v1037 = vsel %vm873, %v839, 0.0
  %v1038 = vadd.f32 %v1036, %v1037
  %v1039 = vsel %vm873, %v841, 0.0
  %v1040 = vadd.f32 %v1038, %v1039
  %v1041 = vsel %vm873, %v844, 0.0
  %v1042 = vadd.f32 %v1040, %v1041
  %v1043 = vsel %vm873, %v846, 0.0
  %v1044 = vadd.f32 %v1042, %v1043
  %v1045 = vsel %vm873, %v849, 0.0
  %v1046 = vadd.f32 %v1044, %v1045
  %v1047 = vsel %vm873, %v851, 0.0
  %v1048 = vadd.f32 %v1046, %v1047
  %v1049 = vsel %vm873, %v854, 0.0
  %v1050 = vadd.f32 %v1048, %v1049
  %v1051 = vsel %vm873, %v856, 0.0
  %v1052 = vadd.f32 %v1050, %v1051
  %v1053 = vsel %vm873, %v859, 0.0
  %v1054 = vadd.f32 %v1052, %v1053
  %v1055 = vsel %vm873, %v861, 0.0
  %v1056 = vadd.f32 %v1054, %v1055
  %v1057 = vsel %vm873, %v864, 0.0
  %v1058 = vadd.f32 %v1056, %v1057
  %v1059 = vsel %vm873, %v866, 0.0
  %v1060 = vadd.f32 %v1058, %v1059
  %v1061 = vsel %vm873, %v869, 0.0
  %v1062 = vadd.f32 %v1060, %v1061
  %v1063 = vsel %vm873, %v871, 0.0
  %v1064 = vadd.f32 %v1062, %v1063
  %v1065 = vrot.slane %v1064, 4
  %v1066 = vadd.f32 %v1064, %v1065
  %v1067 = vrot.slane %v1066, 2
  %v1068 = vadd.f32 %v1066, %v1067
  %v1069 = vrot.slane %v1068, 1
  %v1070 = vadd.f32 %v1068, %v1069
  %vm1071 = vcmask 253952
  %1072 = vst.msk [vmem:[%s3] sm:$0x1] %vm1071, %v1070
  %v1073 = vmul.f32 %v714, %v714
  %v1074 = vmul.f32 %v716, %v716
  %v1075 = vmul.f32 %v719, %v719
  %v1076 = vmul.f32 %v721, %v721
  %v1077 = vmul.f32 %v724, %v724
  %v1078 = vmul.f32 %v726, %v726
  %v1079 = vmul.f32 %v729, %v729
  %v1080 = vmul.f32 %v731, %v731
  %v1081 = vmul.f32 %v734, %v734
  %v1082 = vmul.f32 %v736, %v736
  %v1083 = vmul.f32 %v739, %v739
  %v1084 = vmul.f32 %v741, %v741
  %v1085 = vmul.f32 %v744, %v744
  %v1086 = vmul.f32 %v746, %v746
  %v1087 = vmul.f32 %v749, %v749
  %v1088 = vmul.f32 %v751, %v751
  %v1089 = vmul.f32 %v754, %v754
  %v1090 = vmul.f32 %v756, %v756
  %v1091 = vmul.f32 %v759, %v759
  %v1092 = vmul.f32 %v761, %v761
  %v1093 = vmul.f32 %v764, %v764
  %v1094 = vmul.f32 %v766, %v766
  %v1095 = vmul.f32 %v769, %v769
  %v1096 = vmul.f32 %v771, %v771
  %v1097 = vmul.f32 %v774, %v774
  %v1098 = vmul.f32 %v776, %v776
  %v1099 = vmul.f32 %v779, %v779
  %v1100 = vmul.f32 %v781, %v781
  %v1101 = vmul.f32 %v784, %v784
  %v1102 = vmul.f32 %v786, %v786
  %v1103 = vmul.f32 %v789, %v789
  %v1104 = vmul.f32 %v791, %v791
  %v1105 = vmul.f32 %v794, %v794
  %v1106 = vmul.f32 %v796, %v796
  %v1107 = vmul.f32 %v799, %v799
  %v1108 = vmul.f32 %v801, %v801
  %v1109 = vmul.f32 %v804, %v804
  %v1110 = vmul.f32 %v806, %v806
  %v1111 = vmul.f32 %v809, %v809
  %v1112 = vmul.f32 %v811, %v811
  %v1113 = vmul.f32 %v814, %v814
  %v1114 = vmul.f32 %v816, %v816
  %v1115 = vmul.f32 %v819, %v819
  %v1116 = vmul.f32 %v821, %v821
  %v1117 = vmul.f32 %v824, %v824
  %v1118 = vmul.f32 %v826, %v826
  %v1119 = vmul.f32 %v829, %v829
  %v1120 = vmul.f32 %v831, %v831
  %v1121 = vmul.f32 %v834, %v834
  %v1122 = vmul.f32 %v836, %v836
  %v1123 = vmul.f32 %v839, %v839
  %v1124 = vmul.f32 %v841, %v841
  %v1125 = vmul.f32 %v844, %v844
  %v1126 = vmul.f32 %v846, %v846
  %v1127 = vmul.f32 %v849, %v849
  %v1128 = vmul.f32 %v851, %v851
  %v1129 = vmul.f32 %v854, %v854
  %v1130 = vmul.f32 %v856, %v856
  %v1131 = vmul.f32 %v859, %v859
  %v1132 = vmul.f32 %v861, %v861
  %v1133 = vmul.f32 %v864, %v864
  %v1134 = vmul.f32 %v866, %v866
  %v1135 = vmul.f32 %v869, %v869
  %v1136 = vmul.f32 %v871, %v871
  %v1137 = vsel %vm873, %v1073, 0.0
  %v1138 = vsel %vm873, %v1074, 0.0
  %v1139 = vadd.f32 %v1137, %v1138
  %v1140 = vsel %vm873, %v1075, 0.0
  %v1141 = vadd.f32 %v1139, %v1140
  %v1142 = vsel %vm873, %v1076, 0.0
  %v1143 = vadd.f32 %v1141, %v1142
  %v1144 = vsel %vm873, %v1077, 0.0
  %v1145 = vadd.f32 %v1143, %v1144
  %v1146 = vsel %vm873, %v1078, 0.0
  %v1147 = vadd.f32 %v1145, %v1146
  %v1148 = vsel %vm873, %v1079, 0.0
  %v1149 = vadd.f32 %v1147, %v1148
  %v1150 = vsel %vm873, %v1080, 0.0
  %v1151 = vadd.f32 %v1149, %v1150
  %v1152 = vsel %vm873, %v1081, 0.0
  %v1153 = vadd.f32 %v1151, %v1152
  %v1154 = vsel %vm873, %v1082, 0.0
  %v1155 = vadd.f32 %v1153, %v1154
  %v1156 = vsel %vm873, %v1083, 0.0
  %v1157 = vadd.f32 %v1155, %v1156
  %v1158 = vsel %vm873, %v1084, 0.0
  %v1159 = vadd.f32 %v1157, %v1158
  %v1160 = vsel %vm873, %v1085, 0.0
  %v1161 = vadd.f32 %v1159, %v1160
  %v1162 = vsel %vm873, %v1086, 0.0
  %v1163 = vadd.f32 %v1161, %v1162
  %v1164 = vsel %vm873, %v1087, 0.0
  %v1165 = vadd.f32 %v1163, %v1164
  %v1166 = vsel %vm873, %v1088, 0.0
  %v1167 = vadd.f32 %v1165, %v1166
  %v1168 = vsel %vm873, %v1089, 0.0
  %v1169 = vadd.f32 %v1167, %v1168
  %v1170 = vsel %vm873, %v1090, 0.0
  %v1171 = vadd.f32 %v1169, %v1170
  %v1172 = vsel %vm873, %v1091, 0.0
  %v1173 = vadd.f32 %v1171, %v1172
  %v1174 = vsel %vm873, %v1092, 0.0
  %v1175 = vadd.f32 %v1173, %v1174
  %v1176 = vsel %vm873, %v1093, 0.0
  %v1177 = vadd.f32 %v1175, %v1176
  %v1178 = vsel %vm873, %v1094, 0.0
  %v1179 = vadd.f32 %v1177, %v1178
  %v1180 = vsel %vm873, %v1095, 0.0
  %v1181 = vadd.f32 %v1179, %v1180
  %v1182 = vsel %vm873, %v1096, 0.0
  %v1183 = vadd.f32 %v1181, %v1182
  %v1184 = vsel %vm873, %v1097, 0.0
  %v1185 = vadd.f32 %v1183, %v1184
  %v1186 = vsel %vm873, %v1098, 0.0
  %v1187 = vadd.f32 %v1185, %v1186
  %v1188 = vsel %vm873, %v1099, 0.0
  %v1189 = vadd.f32 %v1187, %v1188
  %v1190 = vsel %vm873, %v1100, 0.0
  %v1191 = vadd.f32 %v1189, %v1190
  %v1192 = vsel %vm873, %v1101, 0.0
  %v1193 = vadd.f32 %v1191, %v1192
  %v1194 = vsel %vm873, %v1102, 0.0
  %v1195 = vadd.f32 %v1193, %v1194
  %v1196 = vsel %vm873, %v1103, 0.0
  %v1197 = vadd.f32 %v1195, %v1196
  %v1198 = vsel %vm873, %v1104, 0.0
  %v1199 = vadd.f32 %v1197, %v1198
  %v1200 = vsel %vm873, %v1105, 0.0
  %v1201 = vadd.f32 %v1199, %v1200
  %v1202 = vsel %vm873, %v1106, 0.0
  %v1203 = vadd.f32 %v1201, %v1202
  %v1204 = vsel %vm873, %v1107, 0.0
  %v1205 = vadd.f32 %v1203, %v1204
  %v1206 = vsel %vm873, %v1108, 0.0
  %v1207 = vadd.f32 %v1205, %v1206
  %v1208 = vsel %vm873, %v1109, 0.0
  %v1209 = vadd.f32 %v1207, %v1208
  %v1210 = vsel %vm873, %v1110, 0.0
  %v1211 = vadd.f32 %v1209, %v1210
  %v1212 = vsel %vm873, %v1111, 0.0
  %v1213 = vadd.f32 %v1211, %v1212
  %v1214 = vsel %vm873, %v1112, 0.0
  %v1215 = vadd.f32 %v1213, %v1214
  %v1216 = vsel %vm873, %v1113, 0.0
  %v1217 = vadd.f32 %v1215, %v1216
  %v1218 = vsel %vm873, %v1114, 0.0
  %v1219 = vadd.f32 %v1217, %v1218
  %v1220 = vsel %vm873, %v1115, 0.0
  %v1221 = vadd.f32 %v1219, %v1220
  %v1222 = vsel %vm873, %v1116, 0.0
  %v1223 = vadd.f32 %v1221, %v1222
  %v1224 = vsel %vm873, %v1117, 0.0
  %v1225 = vadd.f32 %v1223, %v1224
  %v1226 = vsel %vm873, %v1118, 0.0
  %v1227 = vadd.f32 %v1225, %v1226
  %v1228 = vsel %vm873, %v1119, 0.0
  %v1229 = vadd.f32 %v1227, %v1228
  %v1230 = vsel %vm873, %v1120, 0.0
  %v1231 = vadd.f32 %v1229, %v1230
  %v1232 = vsel %vm873, %v1121, 0.0
  %v1233 = vadd.f32 %v1231, %v1232
  %v1234 = vsel %vm873, %v1122, 0.0
  %v1235 = vadd.f32 %v1233, %v1234
  %v1236 = vsel %vm873, %v1123, 0.0
  %v1237 = vadd.f32 %v1235, %v1236
  %v1238 = vsel %vm873, %v1124, 0.0
  %v1239 = vadd.f32 %v1237, %v1238
  %v1240 = vsel %vm873, %v1125, 0.0
  %v1241 = vadd.f32 %v1239, %v1240
  %v1242 = vsel %vm873, %v1126, 0.0
  %v1243 = vadd.f32 %v1241, %v1242
  %v1244 = vsel %vm873, %v1127, 0.0
  %v1245 = vadd.f32 %v1243, %v1244
  %v1246 = vsel %vm873, %v1128, 0.0
  %v1247 = vadd.f32 %v1245, %v1246
  %v1248 = vsel %vm873, %v1129, 0.0
  %v1249 = vadd.f32 %v1247, %v1248
  %v1250 = vsel %vm873, %v1130, 0.0
  %v1251 = vadd.f32 %v1249, %v1250
  %v1252 = vsel %vm873, %v1131, 0.0
  %v1253 = vadd.f32 %v1251, %v1252
  %v1254 = vsel %vm873, %v1132, 0.0
  %v1255 = vadd.f32 %v1253, %v1254
  %v1256 = vsel %vm873, %v1133, 0.0
  %v1257 = vadd.f32 %v1255, %v1256
  %v1258 = vsel %vm873, %v1134, 0.0
  %v1259 = vadd.f32 %v1257, %v1258
  %v1260 = vsel %vm873, %v1135, 0.0
  %v1261 = vadd.f32 %v1259, %v1260
  %v1262 = vsel %vm873, %v1136, 0.0
  %v1263 = vadd.f32 %v1261, %v1262
  %v1264 = vrot.slane %v1263, 4
  %v1265 = vadd.f32 %v1263, %v1264
  %v1266 = vrot.slane %v1265, 2
  %v1267 = vadd.f32 %v1265, %v1266
  %v1268 = vrot.slane %v1267, 1
  %v1269 = vadd.f32 %v1267, %v1268
  %1270 = vst.msk [vmem:[%s3 + $0x1] sm:$0x1] %vm1071, %v1269
  // Predicated region
  $region10: #{generator_forward.15} parent=0 // pred_check
    _
  $region11: #{generator_forward.15} parent=0 // pred_check_branch
    %1272 = sbr.rel (0) target = $region13
  $region12: #{generator_forward.15} parent=0 // pred_region
    _
  $region13: #{generator_forward.15} parent=0 // pred_fallthru
    _
  // Predicated region
  $region14: #{generator_forward.15} parent=0 // pred_check
    _
  $region15: #{generator_forward.15} parent=0 // pred_check_branch
    %1274 = sbr.rel (0) target = $region17
  $region16: #{generator_forward.15} parent=0 // pred_region
    _
  $region17: #{generator_forward.15} parent=0 // pred_fallthru
    _
  // Predicated region
  $region18: #{generator_forward.15} parent=0 // pred_check
    _
  $region19: #{generator_forward.15} parent=0 // pred_check_branch
    %1276 = sbr.rel (0) target = $region21
  $region20: #{generator_forward.15} parent=0 // pred_region
    _
  $region21: #{generator_forward.15} parent=0 // pred_fallthru
    _
  // Predicated region
  $region22: #{generator_forward.15} parent=0 // pred_check
    _
  $region23: #{generator_forward.15} parent=0 // pred_check_branch
    %1278 = sbr.rel (0) target = $region25
  $region24: #{generator_forward.15} parent=0 // pred_region
    _
  $region25: #{generator_forward.15} parent=0 // pred_fallthru
    _

// kernel: generator_forward.17
$region0: #{generator_forward.17}
  #allocation0 [shape = 'u32[]', space=smem, size = 0x4, offset = 0x4, fixed_abs, tag = 'smem constant byte address 0x4 - core index']
  #allocation1 [shape = 'u32[72,128]{1,0:T(1,128)}', space=vmem, size = 0x9000, scoped, tag = 'internal scratch']
  %s0 = inlined_call_operand.vmem [shape: bf16[12,72], index: 0, kind: input, shape index: {}]
  %s1 = inlined_call_operand.vmem [shape: bf16[72,2048], index: 1, kind: input, shape index: {}]
  %s2 = inlined_call_operand.vmem [shape: f32[12,2048], index: 2, kind: output, shape index: {}]
  %s3 = sld [smem:[#allocation0]]
  $region83: #{generator_forward.17} parent=0
    _
  %s5 = ssub.s32 1, %s3
  %s6 = scalar_select 0, %s5, %s3
  $region1: #{generator_forward.17} parent=0
    #allocation2 [shape = 'u8[147456]{0}', space=vmem, size = 0x24000, scoped, tag = 'input window, operand 1']
    #allocation3 [shape = 'u8[65536]{0}', space=vmem, size = 0x10000, scoped, tag = 'output window, operand 0']
    loop: start=0, step=1, limit=6
    $region2: #{generator_forward.17} parent=1 // loop_pre_header
      _
    $region3: #{generator_forward.17} parent=1 // loop_header
      %s8 = sphi 0, %s12
      %p9 = scmp.ge.s32.totalorder %s8, 6
      %s16 = sphi 0, %s16
      %s18 = sphi 0, %s16
      %s19 = sphi 0, %s18
      %s33 = sphi 0, %s19
      %s39 = sphi 0, %s41
      %s42 = sphi 0, %s39
      %s43 = sphi 0, %s42
      %s59 = sphi 0, %s43
      %s65 = sphi 0, %s67
      %s68 = sphi 0, %s65
      %s69 = sphi 0, %s68
      %s85 = sphi 0, %s69
    $region4: #{generator_forward.17} parent=1 // loop_header_branch
      %11 = sbr.rel (%p9) target = $region8
    $region5: #{generator_forward.17} parent=1 // loop_body
      %s13 = ssub.s32 %s8, 1
      %s14 = ssub.s32 %s8, 2
      %s15 = sadd.s32 %s8, 1
      %s17 = sadd.s32 %s16, 1
      %p20 = scmp.eq.s32.totalorder %s8, 3
      %p21 = scmp.ne.s32.totalorder %s16, %s18
      %p22 = scmp.eq.s32.totalorder %s8, 0
      %p23 = por %p21, %p22
      %p24 = scmp.ne.s32.totalorder %s16, %s18
      %p25 = scmp.eq.s32.totalorder %s13, 3
      %p26 = por %p24, %p25
      %p27 = scmp.ne.s32.totalorder %s18, %s19
      %p28 = scmp.eq.s32.totalorder %s13, 0
      %p29 = por %p27, %p28
      %p30 = scmp.ne.s32.totalorder %s18, %s19
      %p31 = scmp.eq.s32.totalorder %s14, 3
      %p32 = por %p30, %p31
      %p34 = scmp.ne.s32.totalorder %s19, %s33
      %p35 = scmp.eq.s32.totalorder %s14, 0
      %p36 = por %p34, %p35
      %s37 = ssub.s32 %s8, %s15
      %p38 = scmp.eq.s32.totalorder %s37, 0
      %s40 = sadd.s32 %s39, 1
      %s41 = scalar_select %p38, %s39, %s40
      %p44 = pneg %p38
      %p45 = scmp.eq.s32.totalorder %s8, 3
      %p46 = por %p44, %p45
      %p47 = scmp.ne.s32.totalorder %s39, %s42
      %p48 = scmp.eq.s32.totalorder %s8, 0
      %p49 = por %p47, %p48
      %p50 = scmp.ne.s32.totalorder %s39, %s42
      %p51 = scmp.eq.s32.totalorder %s13, 3
      %p52 = por %p50, %p51
      %p53 = scmp.ne.s32.totalorder %s42, %s43
      %p54 = scmp.eq.s32.totalorder %s13, 0
      %p55 = por %p53, %p54
      %p56 = scmp.ne.s32.totalorder %s42, %s43
      %p57 = scmp.eq.s32.totalorder %s14, 3
      %p58 = por %p56, %p57
      %p60 = scmp.ne.s32.totalorder %s43, %s59
      %p61 = scmp.eq.s32.totalorder %s14, 0
      %p62 = por %p60, %p61
      %s63 = ssub.s32 %s8, %s15
      %p64 = scmp.eq.s32.totalorder %s63, 0
      %s66 = sadd.s32 %s65, 1
      %s67 = scalar_select %p64, %s65, %s66
      %p70 = pneg %p64
      %p71 = scmp.eq.s32.totalorder %s8, 3
      %p72 = por %p70, %p71
      %p73 = scmp.ne.s32.totalorder %s65, %s68
      %p74 = scmp.eq.s32.totalorder %s8, 0
      %p75 = por %p73, %p74
      %p76 = scmp.ne.s32.totalorder %s65, %s68
      %p77 = scmp.eq.s32.totalorder %s13, 3
      %p78 = por %p76, %p77
      %p79 = scmp.ne.s32.totalorder %s68, %s69
      %p80 = scmp.eq.s32.totalorder %s13, 0
      %p81 = por %p79, %p80
      %p82 = scmp.ne.s32.totalorder %s68, %s69
      %p83 = scmp.eq.s32.totalorder %s14, 3
      %p84 = por %p82, %p83
      %p86 = scmp.ne.s32.totalorder %s69, %s85
      %p87 = scmp.eq.s32.totalorder %s14, 0
      %p88 = por %p86, %p87
      %p89 = scmp.le.s32.totalorder 1, %s8
      %p90 = scmp.lt.s32.totalorder %s8, 5
      %p91 = pnand %p89, %p90
      %p92 = pneg %p91
      // Predicated region
      $region9: #{generator_forward.17} parent=5 // pred_check
        _
      $region10: #{generator_forward.17} parent=5 // pred_check_branch
        %94 = sbr.rel (%p91) target = $region12
      $region11: #{generator_forward.17} parent=5 // pred_region
        %s95 = ssub.s32 %s8, 1
        // Predicated region
        $region13: #{generator_forward.17} parent=11 // pred_check
          %p96 = pneg %p29
        $region14: #{generator_forward.17} parent=11 // pred_check_branch
          %98 = sbr.rel (%p96) target = $region16
        $region15: #{generator_forward.17} parent=11 // pred_region
          _
        $region16: #{generator_forward.17} parent=11 // pred_fallthru
          _
      $region12: #{generator_forward.17} parent=5 // pred_fallthru
        _
      %p99 = scmp.lt.s32.totalorder %s8, 4
      // Predicated region
      $region17: #{generator_forward.17} parent=5 // pred_check
        %p100 = pneg %p99
      $region18: #{generator_forward.17} parent=5 // pred_check_branch
        %102 = sbr.rel (%p100) target = $region20
      $region19: #{generator_forward.17} parent=5 // pred_region
        // Predicated region
        $region21: #{generator_forward.17} parent=19 // pred_check
          %p103 = pneg %p49
        $region22: #{generator_forward.17} parent=19 // pred_check_branch
          %105 = sbr.rel (%p103) target = $region24
        $region23: #{generator_forward.17} parent=19 // pred_region
          %s106 = sand.u32 %s39, 1
          %s107 = sand.u32 %s39, 1
          %s108 = smul.addr %s107, 144
          %s109 = scalar_lea.vmem [#allocation2], %s108
          %s110 = smul.u32 4, %s8
          %s111 = smul.addr %s110, 4
          %s112 = scalar_lea.vmem %s1, %s111
          // Predicated region
          $region25: #{generator_forward.17} parent=23 // pred_check
            _
          $region26: #{generator_forward.17} parent=23 // pred_check_branch
            %114 = sbr.rel (0) target = $region28
          $region27: #{generator_forward.17} parent=23 // pred_region
            // Predicated region
            $region29: #{generator_forward.17} parent=27 // pred_check
              _
            $region30: #{generator_forward.17} parent=27 // pred_check_branch
              %116 = sbr.rel (0) target = $region32
            $region31: #{generator_forward.17} parent=27 // pred_region
              loop: start=0, step=1, limit=1
              $region33: #{generator_forward.17} parent=31 // loop_pre_header
                _
              $region34: #{generator_forward.17} parent=31 // loop_header
                %s118 = sphi 0, %s122
                %p119 = scmp.ge.s32.totalorder %s118, 1
                %s123 = sphi %s112, %s112
                %s124 = sphi %s109, %s109
              $region35: #{generator_forward.17} parent=31 // loop_header_branch
                %121 = sbr.rel (%p119) target = $region39
              $region36: #{generator_forward.17} parent=31 // loop_body
                %v125 = vld [vmem:[%s123] sm:$0xff]
                %126 = vst [vmem:[%s124] sm:$0xff] %v125
                %v127 = vld [vmem:[%s123 + $0x8] sm:$0xff]
                %128 = vst [vmem:[%s124 + $0x8] sm:$0xff] %v127
                %v129 = vld [vmem:[%s123 + $0x40] sm:$0xff]
                %130 = vst [vmem:[%s124 + $0x10] sm:$0xff] %v129
                %v131 = vld [vmem:[%s123 + $0x48] sm:$0xff]
                %132 = vst [vmem:[%s124 + $0x18] sm:$0xff] %v131
                %v133 = vld [vmem:[%s123 + $0x80] sm:$0xff]
                %134 = vst [vmem:[%s124 + $0x20] sm:$0xff] %v133
                %v135 = vld [vmem:[%s123 + $0x88] sm:$0xff]
                %136 = vst [vmem:[%s124 + $0x28] sm:$0xff] %v135
                %v137 = vld [vmem:[%s123 + $0xc0] sm:$0xff]
                %138 = vst [vmem:[%s124 + $0x30] sm:$0xff] %v137
                %v139 = vld [vmem:[%s123 + $0xc8] sm:$0xff]
                %140 = vst [vmem:[%s124 + $0x38] sm:$0xff] %v139
                %v141 = vld [vmem:[%s123 + $0x100] sm:$0xff]
                %142 = vst [vmem:[%s124 + $0x40] sm:$0xff] %v141
                %v143 = vld [vmem:[%s123 + $0x108] sm:$0xff]
                %144 = vst [vmem:[%s124 + $0x48] sm:$0xff] %v143
                %v145 = vld [vmem:[%s123 + $0x140] sm:$0xff]
                %146 = vst [vmem:[%s124 + $0x50] sm:$0xff] %v145
                %v147 = vld [vmem:[%s123 + $0x148] sm:$0xff]
                %148 = vst [vmem:[%s124 + $0x58] sm:$0xff] %v147
                %v149 = vld [vmem:[%s123 + $0x180] sm:$0xff]
                %150 = vst [vmem:[%s124 + $0x60] sm:$0xff] %v149
                %v151 = vld [vmem:[%s123 + $0x188] sm:$0xff]
                %152 = vst [vmem:[%s124 + $0x68] sm:$0xff] %v151
                %v153 = vld [vmem:[%s123 + $0x1c0] sm:$0xff]
                %154 = vst [vmem:[%s124 + $0x70] sm:$0xff] %v153
                %v155 = vld [vmem:[%s123 + $0x1c8] sm:$0xff]
                %156 = vst [vmem:[%s124 + $0x78] sm:$0xff] %v155
                %v157 = vld [vmem:[%s123 + $0x200] sm:$0xff]
                %158 = vst [vmem:[%s124 + $0x80] sm:$0xff] %v157
                %v159 = vld [vmem:[%s123 + $0x208] sm:$0xff]
                %160 = vst [vmem:[%s124 + $0x88] sm:$0xff] %v159
              $region37: #{generator_forward.17} parent=31 // loop_footer
                %s122 = sadd.s32 1, %s118
              $region38: #{generator_forward.17} parent=31 // loop_footer_branch
                %117 = sbr.rel target = $region34
              $region39: #{generator_forward.17} parent=31 // loop_exit
                _
            $region32: #{generator_forward.17} parent=27 // pred_fallthru
              _
            // Predicated region
            $region40: #{generator_forward.17} parent=27 // pred_check
              _
            $region41: #{generator_forward.17} parent=27 // pred_check_branch
              %162 = sbr.rel target = $region43
            $region42: #{generator_forward.17} parent=27 // pred_region
              _
            $region43: #{generator_forward.17} parent=27 // pred_fallthru
              _
          $region28: #{generator_forward.17} parent=23 // pred_fallthru
            _
          %163 = vnop
        $region24: #{generator_forward.17} parent=19 // pred_fallthru
          _
      $region20: #{generator_forward.17} parent=5 // pred_fallthru
        _
      %p164 = scmp.le.s32.totalorder 1, %s8
      %p165 = scmp.lt.s32.totalorder %s8, 5
      %p166 = pnand %p164, %p165
      %p167 = pneg %p166
      // Predicated region
      $region44: #{generator_forward.17} parent=5 // pred_check
        _
      $region45: #{generator_forward.17} parent=5 // pred_check_branch
        %169 = sbr.rel (%p166) target = $region47
      $region46: #{generator_forward.17} parent=5 // pred_region
        %s170 = ssub.s32 %s8, 1
        %s171 = sand.u32 %s42, 1
        %s172 = sand.u32 %s42, 1
        %s173 = smul.addr %s172, 144
        %s174 = scalar_lea.vmem [#allocation2], %s173
        // Predicated region
        $region48: #{generator_forward.17} parent=46 // pred_check
          %p175 = pneg %p55
        $region49: #{generator_forward.17} parent=46 // pred_check_branch
          %177 = sbr.rel (%p175) target = $region51
        $region50: #{generator_forward.17} parent=46 // pred_region
          _
        $region51: #{generator_forward.17} parent=46 // pred_fallthru
          _
        %p178 = pneg %p29
        %p179 = pneg %p26
        %s180 = sand.u32 %s42, 1
        %s181 = sand.u32 %s42, 1
        %s182 = smul.addr %s181, 144
        %s183 = scalar_lea.vmem [#allocation2], %s182
        %p184 = pneg %p55
        %p185 = pneg %p52
        %p186 = pneg %p81
        %p187 = pneg %p78
        %s188 = sand.u32 %s68, 1
        %s189 = sand.u32 %s68, 1
        %s190 = smul.addr %s189, 64
        %s191 = scalar_lea.vmem [#allocation3], %s190
        %s192 = smul.u32 4, %s13
        %s193 = smul.u32 4, %s13
        %v195 = vld [vmem:[%s0] sm:$0xf]
        %v196 = vld [vmem:[%s0 + $0x4] sm:$0x3]
        %v197 = vld [vmem:[%s174] sm:$0xff]
        %v198 = vld [vmem:[%s174 + $0x8] sm:$0xff]
        %v199 = vld [vmem:[%s174 + $0x10] sm:$0xff]
        %v200 = vld [vmem:[%s174 + $0x18] sm:$0xff]
        %v201 = vld [vmem:[%s174 + $0x20] sm:$0xff]
        %v202 = vld [vmem:[%s174 + $0x28] sm:$0xff]
        %v203 = vld [vmem:[%s174 + $0x30] sm:$0xff]
        %v204 = vld [vmem:[%s174 + $0x38] sm:$0xff]
        %v205 = vld [vmem:[%s174 + $0x40] sm:$0xff]
        %v206 = vld [vmem:[%s174 + $0x48] sm:$0xff]
        %v207 = vld [vmem:[%s174 + $0x50] sm:$0xff]
        %v208 = vld [vmem:[%s174 + $0x58] sm:$0xff]
        %v209 = vld [vmem:[%s174 + $0x60] sm:$0xff]
        %v210 = vld [vmem:[%s174 + $0x68] sm:$0xff]
        %v211 = vld [vmem:[%s174 + $0x70] sm:$0xff]
        %v212 = vld [vmem:[%s174 + $0x78] sm:$0xff]
        %v213 = vld [vmem:[%s174 + $0x80] sm:$0xff]
        %v214 = vld [vmem:[%s174 + $0x88] sm:$0xff]
        %v217 = vunpack.c.l.b16 %v195
        %v218 = vunpack.c.l.b16 %v196
        %v219 = vpack.c.b16 %v218, %v217
        %v238 = vunpack.c.l.b16 %v197
        %v239 = vunpack.c.h.b16 %v197
        %v240 = vunpack.c.l.b16 %v198
        %v241 = vunpack.c.h.b16 %v198
        %v242 = vunpack.c.l.b16 %v199
        %v243 = vunpack.c.h.b16 %v199
        %v244 = vunpack.c.l.b16 %v200
        %v245 = vunpack.c.h.b16 %v200
        %v246 = vunpack.c.l.b16 %v201
        %v247 = vunpack.c.h.b16 %v201
        %v248 = vunpack.c.l.b16 %v202
        %v249 = vunpack.c.h.b16 %v202
        %v250 = vunpack.c.l.b16 %v203
        %v251 = vunpack.c.h.b16 %v203
        %v252 = vunpack.c.l.b16 %v204
        %v253 = vunpack.c.h.b16 %v204
        %v254 = vunpack.c.l.b16 %v205
        %v255 = vunpack.c.h.b16 %v205
        %v256 = vunpack.c.l.b16 %v206
        %v257 = vunpack.c.h.b16 %v206
        %v258 = vunpack.c.l.b16 %v207
        %v259 = vunpack.c.h.b16 %v207
        %v260 = vunpack.c.l.b16 %v208
        %v261 = vunpack.c.h.b16 %v208
        %v262 = vunpack.c.l.b16 %v209
        %v263 = vunpack.c.h.b16 %v209
        %v264 = vunpack.c.l.b16 %v210
        %v265 = vunpack.c.h.b16 %v210
        %v266 = vunpack.c.l.b16 %v211
        %v267 = vunpack.c.h.b16 %v211
        %v268 = vunpack.c.l.b16 %v212
        %v269 = vunpack.c.h.b16 %v212
        %v270 = vunpack.c.l.b16 %v213
        %v271 = vunpack.c.h.b16 %v213
        %v272 = vunpack.c.l.b16 %v214
        %v273 = vunpack.c.h.b16 %v214
        %v274 = vpack.c.b16 %v242, %v238
        %v275 = vpack.c.b16 %v243, %v239
        %v276 = vpack.c.b16 %v244, %v240
        %v277 = vpack.c.b16 %v245, %v241
        %v278 = vpack.c.b16 %v250, %v246
        %v279 = vpack.c.b16 %v251, %v247
        %v280 = vpack.c.b16 %v252, %v248
        %v281 = vpack.c.b16 %v253, %v249
        %v282 = vpack.c.b16 %v258, %v254
        %v283 = vpack.c.b16 %v259, %v255
        %v284 = vpack.c.b16 %v260, %v256
        %v285 = vpack.c.b16 %v261, %v257
        %v286 = vpack.c.b16 %v266, %v262
        %v287 = vpack.c.b16 %v267, %v263
        %v288 = vpack.c.b16 %v268, %v264
        %v289 = vpack.c.b16 %v269, %v265
        %v290 = vpack.c.b16 %v270, %v270
        %v291 = vpack.c.b16 %v271, %v271
        %v292 = vpack.c.b16 %v272, %v272
        %v293 = vpack.c.b16 %v273, %v273
        %vm310 = vcmask 588800
        %v312 = vsel %vm310, %v219, 0
        %vm314 = vcmask 1043456
        %v316 = vsel %vm314, %v290, 0
        %v319 = vsel %vm314, %v291, 0
        %v322 = vsel %vm314, %v292, 0
        %v325 = vsel %vm314, %v293, 0
        %327 = vmatpush.bf16.msra.mxu0 0
        %328 = vmatpush.bf16.msra.mxu0 0
        %329 = vmatpush.bf16.msra.mxu0 0
        %330 = vmatpush.bf16.msra.mxu0 %v316
        %331 = vmatpush.bf16.msra.mxu0 %v286
        %332 = vmatpush.bf16.msra.mxu0 %v282
        %333 = vmatpush.bf16.msra.mxu0 %v278
        %334 = vmatpush.bf16.msra.mxu0 %v274
        %335 = vmatmul.bf16.gmra.mxu0 %v312
        %v336 = vpop.f32.mrf.mxu0
        %v337 = vadd.f32 0.0, %v336
        %v338 = vpop.f32.mrf.mxu0
        %v339 = vadd.f32 0.0, %v338
        %340 = vdwg.mxu0
        %341 = vmatpush.bf16.msra.mxu0 0
        %342 = vmatpush.bf16.msra.mxu0 0
        %343 = vmatpush.bf16.msra.mxu0 0
        %344 = vmatpush.bf16.msra.mxu0 %v319
        %345 = vmatpush.bf16.msra.mxu0 %v287
        %346 = vmatpush.bf16.msra.mxu0 %v283
        %347 = vmatpush.bf16.msra.mxu0 %v279
        %348 = vmatpush.bf16.msra.mxu0 %v275
        %349 = vmatmul.bf16.gmra.mxu0 %v312
        %v350 = vpop.f32.mrf.mxu0
        %v351 = vadd.f32 0.0, %v350
        %v352 = vpop.f32.mrf.mxu0
        %v353 = vadd.f32 0.0, %v352
        %354 = vdwg.mxu0
        %355 = vmatpush.bf16.msra.mxu0 0
        %356 = vmatpush.bf16.msra.mxu0 0
        %357 = vmatpush.bf16.msra.mxu0 0
        %358 = vmatpush.bf16.msra.mxu0 %v322
        %359 = vmatpush.bf16.msra.mxu0 %v288
        %360 = vmatpush.bf16.msra.mxu0 %v284
        %361 = vmatpush.bf16.msra.mxu0 %v280
        %362 = vmatpush.bf16.msra.mxu0 %v276
        %363 = vmatmul.bf16.gmra.mxu0 %v312
        %v364 = vpop.f32.mrf.mxu0
        %v365 = vadd.f32 0.0, %v364
        %v366 = vpop.f32.mrf.mxu0
        %v367 = vadd.f32 0.0, %v366
        %368 = vdwg.mxu0
        %369 = vmatpush.bf16.msra.mxu0 0
        %370 = vmatpush.bf16.msra.mxu0 0
        %371 = vmatpush.bf16.msra.mxu0 0
        %372 = vmatpush.bf16.msra.mxu0 %v325
        %373 = vmatpush.bf16.msra.mxu0 %v289
        %374 = vmatpush.bf16.msra.mxu0 %v285
        %375 = vmatpush.bf16.msra.mxu0 %v281
        %376 = vmatpush.bf16.msra.mxu0 %v277
        %377 = vmatmul.bf16.gmra.mxu0 %v312
        %v378 = vpop.f32.mrf.mxu0
        %v379 = vadd.f32 0.0, %v378
        %v380 = vpop.f32.mrf.mxu0
        %v381 = vadd.f32 0.0, %v380
        %382 = vdwg.mxu0
        %v383 = vtanh.pop %v337
        %v384 = vtanh.pop %v351
        %v385 = vtanh.pop %v365
        %v386 = vtanh.pop %v379
        %v387 = vtanh.pop %v339
        %v388 = vtanh.pop %v353
        %v389 = vtanh.pop %v367
        %v390 = vtanh.pop %v381
        %391 = vst [vmem:[%s191] sm:$0xff] %v383
        %392 = vst [vmem:[%s191 + $0x8] sm:$0xff] %v384
        %393 = vst [vmem:[%s191 + $0x10] sm:$0xff] %v385
        %394 = vst [vmem:[%s191 + $0x18] sm:$0xff] %v386
        %395 = vst [vmem:[%s191 + $0x20] sm:$0xf] %v387
        %396 = vst [vmem:[%s191 + $0x28] sm:$0xf] %v388
        %397 = vst [vmem:[%s191 + $0x30] sm:$0xf] %v389
        %398 = vst [vmem:[%s191 + $0x38] sm:$0xf] %v390
        %s399 = sand.u32 %s68, 1
        %s400 = sand.u32 %s68, 1
        %s401 = smul.addr %s400, 64
        %s402 = scalar_lea.vmem [#allocation3], %s401
        // Predicated region
        $region52: #{generator_forward.17} parent=46 // pred_check
          %p403 = pneg %p78
        $region53: #{generator_forward.17} parent=46 // pred_check_branch
          %405 = sbr.rel (%p403) target = $region55
        $region54: #{generator_forward.17} parent=46 // pred_region
          %s406 = smul.u32 4, %s13
          %s407 = smul.addr %s406, 8
          %s408 = scalar_lea.vmem %s2, %s407
          // Predicated region
          $region56: #{generator_forward.17} parent=54 // pred_check
            _
          $region57: #{generator_forward.17} parent=54 // pred_check_branch
            %410 = sbr.rel (0) target = $region59
          $region58: #{generator_forward.17} parent=54 // pred_region
            // Predicated region
            $region60: #{generator_forward.17} parent=58 // pred_check
              _
            $region61: #{generator_forward.17} parent=58 // pred_check_branch
              %412 = sbr.rel (0) target = $region63
            $region62: #{generator_forward.17} parent=58 // pred_region
              loop: start=0, step=1, limit=1
              $region64: #{generator_forward.17} parent=62 // loop_pre_header
                _
              $region65: #{generator_forward.17} parent=62 // loop_header
                %s414 = sphi 0, %s418
                %p415 = scmp.ge.s32.totalorder %s414, 1
                %s419 = sphi %s402, %s402
                %s420 = sphi %s408, %s408
              $region66: #{generator_forward.17} parent=62 // loop_header_branch
                %417 = sbr.rel (%p415) target = $region70
              $region67: #{generator_forward.17} parent=62 // loop_body
                %v421 = vld [vmem:[%s419] sm:$0xff]
                %422 = vst [vmem:[%s420] sm:$0xff] %v421
                %v423 = vld [vmem:[%s419 + $0x8] sm:$0xff]
                %424 = vst [vmem:[%s420 + $0x8] sm:$0xff] %v423
                %v425 = vld [vmem:[%s419 + $0x10] sm:$0xff]
                %426 = vst [vmem:[%s420 + $0x10] sm:$0xff] %v425
                %v427 = vld [vmem:[%s419 + $0x18] sm:$0xff]
                %428 = vst [vmem:[%s420 + $0x18] sm:$0xff] %v427
                %v429 = vld [vmem:[%s419 + $0x20] sm:$0xff]
                %430 = vst [vmem:[%s420 + $0x80] sm:$0xff] %v429
                %v431 = vld [vmem:[%s419 + $0x28] sm:$0xff]
                %432 = vst [vmem:[%s420 + $0x88] sm:$0xff] %v431
                %v433 = vld [vmem:[%s419 + $0x30] sm:$0xff]
                %434 = vst [vmem:[%s420 + $0x90] sm:$0xff] %v433
                %v435 = vld [vmem:[%s419 + $0x38] sm:$0xff]
                %436 = vst [vmem:[%s420 + $0x98] sm:$0xff] %v435
              $region68: #{generator_forward.17} parent=62 // loop_footer
                %s418 = sadd.s32 1, %s414
              $region69: #{generator_forward.17} parent=62 // loop_footer_branch
                %413 = sbr.rel target = $region65
              $region70: #{generator_forward.17} parent=62 // loop_exit
                _
            $region63: #{generator_forward.17} parent=58 // pred_fallthru
              _
            // Predicated region
            $region71: #{generator_forward.17} parent=58 // pred_check
              _
            $region72: #{generator_forward.17} parent=58 // pred_check_branch
              %438 = sbr.rel target = $region74
            $region73: #{generator_forward.17} parent=58 // pred_region
              _
            $region74: #{generator_forward.17} parent=58 // pred_fallthru
              _
          $region59: #{generator_forward.17} parent=54 // pred_fallthru
            _
          %439 = vnop
        $region55: #{generator_forward.17} parent=46 // pred_fallthru
          _
      $region47: #{generator_forward.17} parent=5 // pred_fallthru
        _
      %p440 = scmp.le.s32.totalorder 2, %s8
      // Predicated region
      $region75: #{generator_forward.17} parent=5 // pred_check
        %p441 = pneg %p440
      $region76: #{generator_forward.17} parent=5 // pred_check_branch
        %443 = sbr.rel (%p441) target = $region78
      $region77: #{generator_forward.17} parent=5 // pred_region
        %s444 = ssub.s32 %s8, 2
        // Predicated region
        $region79: #{generator_forward.17} parent=77 // pred_check
          %p445 = pneg %p84
        $region80: #{generator_forward.17} parent=77 // pred_check_branch
          %447 = sbr.rel (%p445) target = $region82
        $region81: #{generator_forward.17} parent=77 // pred_region
          %s448 = sand.u32 %s69, 1
          %s449 = sand.u32 %s69, 1
          %s450 = smul.addr %s449, 64
          %s451 = scalar_lea.vmem [#allocation3], %s450
        $region82: #{generator_forward.17} parent=77 // pred_fallthru
          _
      $region78: #{generator_forward.17} parent=5 // pred_fallthru
        _
    $region6: #{generator_forward.17} parent=1 // loop_footer
      %s12 = sadd.s32 1, %s8
    $region7: #{generator_forward.17} parent=1 // loop_footer_branch
      %7 = sbr.rel target = $region3
    $region8: #{generator_forward.17} parent=1 // loop_exit
      _

</llo_original>
